<compile_context>
chip_gen: v7x
topology: tpu7x:2x2x1
jax: 0.10.0
libtpu: 0.0.40
codegen_flags: <defaults>
</compile_context>

<pallas_src>
import jax
import jax.numpy as jnp
from jax.experimental import pallas as pl
from jax.experimental.pallas import tpu as pltpu

VOCAB = 10     # vocab_size
EMBED = 8      # embed_size
HIDDEN = 16    # num_hiddens
LAYERS = 2     # num_layers
BATCH = 4      # batch size (X = torch.zeros((4, 7)))
DEC_LEN = 7    # decoder sequence length
ENC_LEN = 7    # encoder sequence length
OUT_PAD = 128  # lane-dense logits width inside the kernel (sliced to VOCAB outside)


def decoder_kernel(embx_ref, enc_aug_ref, h0_ref, c0_ref,
                   wk_ref, vT_ref, wfused_ref, segrep_ref, segsum_ref,
                   wih0c_ref, wih0e_ref, whh0_ref, b0_ref,
                   wih1_ref, b1_ref, wd_ref, bd_ref,
                   out_ref, hT_ref, cT_ref):
    H, B, S, T = HIDDEN, BATCH, ENC_LEN, DEC_LEN

    # ---------------- loop-invariant prologue ----------------
    enc_aug = enc_aug_ref[...]                               # (B*S, H+1): [enc | 1]
    # Key projection: one flat 2-D MXU matmul (wk has a zero row appended so
    # the ones column contributes nothing).
    k_proj = jnp.dot(enc_aug, wk_ref[...],
                     preferred_element_type=jnp.float32)     # (B*S, H)
    seg_rep = segrep_ref[...]                                # (B*S, B): repeat per batch
    seg_sum = segsum_ref[...]                                # (B, B*S): sum per batch
    vT = vT_ref[...]                                         # (H, 1)

    # Embedding-side layer-0 input projection is independent of the recurrence:
    # compute it once for all T steps and fold in the layer-0 bias.
    x_pre_emb = (jnp.dot(embx_ref[...], wih0e_ref[...],
                         preferred_element_type=jnp.float32)
                 + b0_ref[...])                              # (T*B, 4H)

    # LSTM state lives in vregs across the (fully unrolled) recurrence.
    h_init = h0_ref[...]                                     # (2B, H)
    c_init = c0_ref[...]
    h0 = h_init[:B, :]
    h1 = h_init[B:, :]
    c0 = c_init[:B, :]
    c1 = c_init[B:, :]

    def gate_split(gates):
        # PyTorch gate ordering: i, f, g, o
        i = jax.nn.sigmoid(gates[:, 0 * H:1 * H])
        f = jax.nn.sigmoid(gates[:, 1 * H:2 * H])
        g = jnp.tanh(gates[:, 2 * H:3 * H])
        o = jax.nn.sigmoid(gates[:, 3 * H:4 * H])
        return i, f, g, o

    h1_steps = []
    for t in range(T):                        # static T = 7 -> fully unrolled
        # One MXU push for everything consuming the previous top-layer h:
        # lanes [0,H) = W_q query projection, lanes [H,5H) = layer-1 W_hh gates.
        hp = jnp.dot(h1, wfused_ref[...], preferred_element_type=jnp.float32)
        q = hp[:, :H]                                         # (B, H)
        gates1_h = hp[:, H:]                                  # (B, 4H)

        # Layer-0 recurrent gate term depends only on h0 -> issue early,
        # overlaps with the attention chain below.
        gates0_h = jnp.dot(h0, whh0_ref[...],
                           preferred_element_type=jnp.float32)  # (B, 4H)

        # ---- MLP attention, flat (B*S, .) layout, reductions on the MXU ----
        q_rep = jnp.dot(seg_rep, q, preferred_element_type=jnp.float32)   # (B*S, H)
        feat = jnp.tanh(q_rep + k_proj)                                   # (B*S, H)
        scores = jnp.dot(feat, vT, preferred_element_type=jnp.float32)    # (B*S, 1)
        # enc_valid_len is None -> plain softmax. A single global max keeps
        # exp() bounded; per-segment softmax is invariant to that shift.
        e = jnp.exp(scores - jnp.max(scores, axis=0, keepdims=True))      # (B*S, 1)
        # One matmul yields both the attention numerator (lanes [0,H)) and the
        # denominator (lane H) thanks to the ones-augmented value matrix.
        nd = jnp.dot(seg_sum, e * enc_aug,
                     preferred_element_type=jnp.float32)                  # (B, H+1)
        context = nd[:, :H] * pl.reciprocal(nd[:, H:H + 1], approx=True)  # (B, H)

        # ---- LSTM layer 0 (input = cat(context, x_emb) via split weights) ----
        gates0 = (jnp.dot(context, wih0c_ref[...],
                          preferred_element_type=jnp.float32)
                  + x_pre_emb[t * B:(t + 1) * B, :]
                  + gates0_h)
        i0, f0, g0, o0 = gate_split(gates0)
        c0 = f0 * c0 + i0 * g0
        h0 = o0 * jnp.tanh(c0)

        # ---- LSTM layer 1 ----
        gates1 = (jnp.dot(h0, wih1_ref[...],
                          preferred_element_type=jnp.float32)
                  + gates1_h + b1_ref[...])
        i1, f1, g1, o1 = gate_split(gates1)
        c1 = f1 * c1 + i1 * g1
        h1 = o1 * jnp.tanh(c1)

        h1_steps.append(h1)

    # ---- deferred dense projection: one lane-dense matmul + single store ----
    h_all = jnp.concatenate(h1_steps, axis=0)                 # (T*B, H)
    out_ref[...] = (jnp.dot(h_all, wd_ref[...],
                            preferred_element_type=jnp.float32)
                    + bd_ref[...])                            # (T*B, OUT_PAD)
    hT_ref[...] = jnp.concatenate([h0, h1], axis=0)           # (2B, H)
    cT_ref[...] = jnp.concatenate([c0, c1], axis=0)


def run_decoder(X_tokens, enc_outputs, h0, c0, params):
    """Pallas implementation of Seq2SeqAttentionDecoder.forward."""
    B, T, S, H, E = BATCH, DEC_LEN, ENC_LEN, HIDDEN, EMBED

    # Embedding gather + permute(1,0,2) -> flat (T*B, E), row = t*B + b (glue).
    emb = params['embedding'][X_tokens]                      # (B, T, E)
    embx = jnp.transpose(emb, (1, 0, 2)).reshape(T * B, E)

    # Encoder values flattened (row = b*S + s) and augmented with a ones column
    # so one matmul gives softmax numerator + denominator inside the kernel.
    enc_flat = enc_outputs.reshape(B * S, H)
    enc_aug = jnp.concatenate([enc_flat, jnp.ones((B * S, 1), jnp.float32)], axis=1)
    wk_pad = jnp.pad(params['wk'], ((0, 1), (0, 0)))         # (H+1, H), zero row

    # Sublane-aligned LSTM state: (LAYERS*B, H) = (8, 16).
    h0_flat = h0.reshape(LAYERS * B, H)
    c0_flat = c0.reshape(LAYERS * B, H)

    wih0c = params['wih0'][:H]                               # multiplies the context
    wih0e = params['wih0'][H:]                               # multiplies the embedding
    wfused = jnp.concatenate([params['wq'], params['whh1']], axis=1)   # (H, 5H)
    vT = params['v'].T                                       # (H, 1)

    # Lane-dense padded output projection (sliced back to VOCAB below).
    wd_pad = jnp.pad(params['wd'], ((0, 0), (0, OUT_PAD - VOCAB)))
    bd_pad = jnp.pad(params['bd'], ((0, 0), (0, OUT_PAD - VOCAB)))

    # Segment repeat / segment sum matrices (compile-time constants).
    rows = jnp.arange(B * S)[:, None] // S
    cols = jnp.arange(B)[None, :]
    seg_rep = (rows == cols).astype(jnp.float32)             # (B*S, B)
    seg_sum = seg_rep.T                                      # (B, B*S)

    inputs = (embx, enc_aug, h0_flat, c0_flat,
              wk_pad, vT, wfused, seg_rep, seg_sum,
              wih0c, wih0e, params['whh0'], params['b0'],
              params['wih1'], params['b1'],
              wd_pad, bd_pad)

    vspec = pl.BlockSpec(memory_space=pltpu.MemorySpace.VMEM)
    out, hT, cT = pl.pallas_call(
        decoder_kernel,
        out_shape=(jax.ShapeDtypeStruct((T * B, OUT_PAD), jnp.float32),
                   jax.ShapeDtypeStruct((LAYERS * B, H), jnp.float32),
                   jax.ShapeDtypeStruct((LAYERS * B, H), jnp.float32)),
        in_specs=[vspec] * len(inputs),
        out_specs=(vspec, vspec, vspec),
    )(*inputs)

    logits = out.reshape(T, B, OUT_PAD)[:, :, :VOCAB]        # drop lane padding
    logits = jnp.transpose(logits, (1, 0, 2))                # (B, T, V), .permute(1,0,2)
    hT = hT.reshape(LAYERS, B, H)
    cT = cT.reshape(LAYERS, B, H)
    new_state = (enc_outputs, (hT, cT), None)                # [enc_outputs, hidden, valid_len]
    return logits, new_state


def reference_decoder(X_tokens, enc_outputs, h0, c0, params):
    """Pure-JAX reference replicating the PyTorch semantics."""
    emb = params['embedding'][X_tokens]
    embx = jnp.transpose(emb, (1, 0, 2))
    H = HIDDEN
    h = [h0[0], h0[1]]
    c = [c0[0], c0[1]]
    k_proj = jnp.einsum('bsh,hu->bsu', enc_outputs, params['wk'])

    def lstm_step(x_in, h_prev, c_prev, wih, whh, b):
        gates = x_in @ wih + h_prev @ whh + b
        i = jax.nn.sigmoid(gates[:, 0 * H:1 * H])
        f = jax.nn.sigmoid(gates[:, 1 * H:2 * H])
        g = jnp.tanh(gates[:, 2 * H:3 * H])
        o = jax.nn.sigmoid(gates[:, 3 * H:4 * H])
        c_new = f * c_prev + i * g
        return o * jnp.tanh(c_new), c_new

    outs = []
    for t in range(DEC_LEN):
        x_emb = embx[t]
        q = h[1] @ params['wq']
        feat = jnp.tanh(q[:, None, :] + k_proj)
        scores = jnp.sum(feat * params['v'].reshape(1, 1, H), axis=-1)
        attn = jax.nn.softmax(scores, axis=-1)
        context = jnp.einsum('bs,bsh->bh', attn, enc_outputs)
        x_in = jnp.concatenate([context, x_emb], axis=-1)
        h[0], c[0] = lstm_step(x_in, h[0], c[0],
                               params['wih0'], params['whh0'], params['b0'])
        h[1], c[1] = lstm_step(h[0], h[1], c[1],
                               params['wih1'], params['whh1'], params['b1'])
        outs.append(h[1] @ params['wd'] + params['bd'])
    logits = jnp.transpose(jnp.stack(outs, axis=0), (1, 0, 2))
    return logits, jnp.stack(h), jnp.stack(c)


if __name__ == "__main__":
    key = jax.random.PRNGKey(0)
    ks = jax.random.split(key, 16)

    def init(k, shape, scale=0.1):
        return (jax.random.normal(k, shape, jnp.float32) * scale)

    # Deterministic synthetic parameters (shapes from the module __init__).
    params = {
        'embedding': init(ks[0], (VOCAB, EMBED)),
        'wq': init(ks[1], (HIDDEN, HIDDEN)),                 # MLPAttention.W_q (no bias)
        'wk': init(ks[2], (HIDDEN, HIDDEN)),                 # MLPAttention.W_k (no bias)
        'v':  init(ks[3], (1, HIDDEN)),                      # MLPAttention.v   (no bias)
        'wih0': init(ks[4], (HIDDEN + EMBED, 4 * HIDDEN)),   # LSTM layer 0 W_ih^T
        'whh0': init(ks[5], (HIDDEN, 4 * HIDDEN)),           # LSTM layer 0 W_hh^T
        'b0':   init(ks[6], (1, 4 * HIDDEN)),                # b_ih + b_hh (layer 0)
        'wih1': init(ks[7], (HIDDEN, 4 * HIDDEN)),           # LSTM layer 1 W_ih^T
        'whh1': init(ks[8], (HIDDEN, 4 * HIDDEN)),           # LSTM layer 1 W_hh^T
        'b1':   init(ks[9], (1, 4 * HIDDEN)),                # b_ih + b_hh (layer 1)
        'wd':   init(ks[10], (HIDDEN, VOCAB)),               # dense weight^T
        'bd':   init(ks[11], (1, VOCAB)),                    # dense bias
    }

    # Decoder inputs + synthesized encoder state (the decoder forward only sees
    # `state`; shapes match init_state(encoder(X), None)).
    X_tokens = jax.random.randint(ks[12], (BATCH, DEC_LEN), 0, VOCAB)
    enc_outputs = jax.random.normal(ks[13], (BATCH, ENC_LEN, HIDDEN), jnp.float32)
    h0 = jax.random.normal(ks[14], (LAYERS, BATCH, HIDDEN), jnp.float32)
    c0 = jax.random.normal(ks[15], (LAYERS, BATCH, HIDDEN), jnp.float32)

    logits, (enc_o, (hT, cT), _) = run_decoder(X_tokens, enc_outputs, h0, c0, params)
    jax.block_until_ready(logits)
    jax.block_until_ready(hT)
    jax.block_until_ready(cT)

    ref_logits, ref_h, ref_c = reference_decoder(X_tokens, enc_outputs, h0, c0, params)

    assert logits.shape == (BATCH, DEC_LEN, VOCAB), logits.shape
    assert jnp.allclose(logits, ref_logits, atol=1e-2, rtol=1e-2), \
        float(jnp.max(jnp.abs(logits - ref_logits)))
    assert jnp.allclose(hT, ref_h, atol=1e-2, rtol=1e-2)
    assert jnp.allclose(cT, ref_c, atol=1e-2, rtol=1e-2)

    print("KERNEL_OK")
</pallas_src>

<mosaic_0001>
module attributes {stable_mosaic.version = 11 : i64} {
  func.func @decoder_kernel(%arg0: memref<28x8xf32, #tpu.memory_space<vmem>>, %arg1: memref<28x17xf32, #tpu.memory_space<vmem>>, %arg2: memref<8x16xf32, #tpu.memory_space<vmem>>, %arg3: memref<8x16xf32, #tpu.memory_space<vmem>>, %arg4: memref<17x16xf32, #tpu.memory_space<vmem>>, %arg5: memref<16x1xf32, #tpu.memory_space<vmem>>, %arg6: memref<16x80xf32, #tpu.memory_space<vmem>>, %arg7: memref<28x4xf32, #tpu.memory_space<vmem>>, %arg8: memref<4x28xf32, #tpu.memory_space<vmem>>, %arg9: memref<16x64xf32, #tpu.memory_space<vmem>>, %arg10: memref<8x64xf32, #tpu.memory_space<vmem>>, %arg11: memref<16x64xf32, #tpu.memory_space<vmem>>, %arg12: memref<1x64xf32, #tpu.memory_space<vmem>>, %arg13: memref<16x64xf32, #tpu.memory_space<vmem>>, %arg14: memref<1x64xf32, #tpu.memory_space<vmem>>, %arg15: memref<16x128xf32, #tpu.memory_space<vmem>>, %arg16: memref<1x128xf32, #tpu.memory_space<vmem>>, %arg17: memref<28x128xf32, #tpu.memory_space<vmem>>, %arg18: memref<8x16xf32, #tpu.memory_space<vmem>>, %arg19: memref<8x16xf32, #tpu.memory_space<vmem>>) attributes {dimension_semantics = [], scalar_prefetch = 0 : i64, scratch_operands = 0 : i64, tpu.core_type = #tpu.core_type<tc>} {
    %c0 = arith.constant 0 : index
    %c0_0 = arith.constant 0 : index
    %0 = vector.load %arg1[%c0, %c0_0] : memref<28x17xf32, #tpu.memory_space<vmem>>, vector<28x17xf32>
    %c0_1 = arith.constant 0 : index
    %c0_2 = arith.constant 0 : index
    %1 = vector.load %arg4[%c0_1, %c0_2] : memref<17x16xf32, #tpu.memory_space<vmem>>, vector<17x16xf32>
    %cst = arith.constant dense<0.000000e+00> : vector<28x16xf32>
    %2 = tpu.matmul %0, %1, %cst {dimension_numbers = #tpu.dot_dimension_numbers<[1], [0], [0], [1], [0, 0, 1, 1], [], []>} : vector<28x17xf32>, vector<17x16xf32>, vector<28x16xf32> -> vector<28x16xf32>
    %c0_3 = arith.constant 0 : index
    %c0_4 = arith.constant 0 : index
    %3 = vector.load %arg7[%c0_3, %c0_4] : memref<28x4xf32, #tpu.memory_space<vmem>>, vector<28x4xf32>
    %c0_5 = arith.constant 0 : index
    %c0_6 = arith.constant 0 : index
    %4 = vector.load %arg8[%c0_5, %c0_6] : memref<4x28xf32, #tpu.memory_space<vmem>>, vector<4x28xf32>
    %c0_7 = arith.constant 0 : index
    %c0_8 = arith.constant 0 : index
    %5 = vector.load %arg5[%c0_7, %c0_8] : memref<16x1xf32, #tpu.memory_space<vmem>>, vector<16x1xf32>
    %c0_9 = arith.constant 0 : index
    %c0_10 = arith.constant 0 : index
    %6 = vector.load %arg0[%c0_9, %c0_10] : memref<28x8xf32, #tpu.memory_space<vmem>>, vector<28x8xf32>
    %c0_11 = arith.constant 0 : index
    %c0_12 = arith.constant 0 : index
    %7 = vector.load %arg10[%c0_11, %c0_12] : memref<8x64xf32, #tpu.memory_space<vmem>>, vector<8x64xf32>
    %cst_13 = arith.constant dense<0.000000e+00> : vector<28x64xf32>
    %8 = tpu.matmul %6, %7, %cst_13 {dimension_numbers = #tpu.dot_dimension_numbers<[1], [0], [0], [1], [0, 0, 1, 1], [], []>} : vector<28x8xf32>, vector<8x64xf32>, vector<28x64xf32> -> vector<28x64xf32>
    %c0_14 = arith.constant 0 : index
    %c0_15 = arith.constant 0 : index
    %9 = vector.load %arg12[%c0_14, %c0_15] : memref<1x64xf32, #tpu.memory_space<vmem>>, vector<1x64xf32>
    %10 = vector.broadcast %9 : vector<1x64xf32> to vector<28x64xf32>
    %11 = arith.addf %8, %10 : vector<28x64xf32>
    %c0_16 = arith.constant 0 : index
    %c0_17 = arith.constant 0 : index
    %12 = vector.load %arg2[%c0_16, %c0_17] : memref<8x16xf32, #tpu.memory_space<vmem>>, vector<8x16xf32>
    %c0_18 = arith.constant 0 : index
    %c0_19 = arith.constant 0 : index
    %13 = vector.load %arg3[%c0_18, %c0_19] : memref<8x16xf32, #tpu.memory_space<vmem>>, vector<8x16xf32>
    %14 = vector.extract_strided_slice %12 {offsets = [0, 0], sizes = [4, 16], strides = [1, 1]} : vector<8x16xf32> to vector<4x16xf32>
    %15 = vector.extract_strided_slice %12 {offsets = [4, 0], sizes = [4, 16], strides = [1, 1]} : vector<8x16xf32> to vector<4x16xf32>
    %16 = vector.extract_strided_slice %13 {offsets = [0, 0], sizes = [4, 16], strides = [1, 1]} : vector<8x16xf32> to vector<4x16xf32>
    %17 = vector.extract_strided_slice %13 {offsets = [4, 0], sizes = [4, 16], strides = [1, 1]} : vector<8x16xf32> to vector<4x16xf32>
    %c0_20 = arith.constant 0 : index
    %c0_21 = arith.constant 0 : index
    %18 = vector.load %arg6[%c0_20, %c0_21] : memref<16x80xf32, #tpu.memory_space<vmem>>, vector<16x80xf32>
    %cst_22 = arith.constant dense<0.000000e+00> : vector<4x80xf32>
    %19 = tpu.matmul %15, %18, %cst_22 {dimension_numbers = #tpu.dot_dimension_numbers<[1], [0], [0], [1], [0, 0, 1, 1], [], []>} : vector<4x16xf32>, vector<16x80xf32>, vector<4x80xf32> -> vector<4x80xf32>
    %20 = vector.extract_strided_slice %19 {offsets = [0, 0], sizes = [4, 16], strides = [1, 1]} : vector<4x80xf32> to vector<4x16xf32>
    %21 = vector.extract_strided_slice %19 {offsets = [0, 16], sizes = [4, 64], strides = [1, 1]} : vector<4x80xf32> to vector<4x64xf32>
    %c0_23 = arith.constant 0 : index
    %c0_24 = arith.constant 0 : index
    %22 = vector.load %arg11[%c0_23, %c0_24] : memref<16x64xf32, #tpu.memory_space<vmem>>, vector<16x64xf32>
    %cst_25 = arith.constant dense<0.000000e+00> : vector<4x64xf32>
    %23 = tpu.matmul %14, %22, %cst_25 {dimension_numbers = #tpu.dot_dimension_numbers<[1], [0], [0], [1], [0, 0, 1, 1], [], []>} : vector<4x16xf32>, vector<16x64xf32>, vector<4x64xf32> -> vector<4x64xf32>
    %cst_26 = arith.constant dense<0.000000e+00> : vector<28x16xf32>
    %24 = tpu.matmul %3, %20, %cst_26 {dimension_numbers = #tpu.dot_dimension_numbers<[1], [0], [0], [1], [0, 0, 1, 1], [], []>} : vector<28x4xf32>, vector<4x16xf32>, vector<28x16xf32> -> vector<28x16xf32>
    %25 = arith.addf %24, %2 : vector<28x16xf32>
    %26 = math.tanh %25 : vector<28x16xf32>
    %cst_27 = arith.constant dense<0.000000e+00> : vector<28x1xf32>
    %27 = tpu.matmul %26, %5, %cst_27 {dimension_numbers = #tpu.dot_dimension_numbers<[1], [0], [0], [1], [0, 0, 1, 1], [], []>} : vector<28x16xf32>, vector<16x1xf32>, vector<28x1xf32> -> vector<28x1xf32>
    %cst_28 = arith.constant dense<0xFF800000> : vector<1xf32>
    %28 = vector.multi_reduction <maximumf>, %27, %cst_28 [0] : vector<28x1xf32> to vector<1xf32>
    %29 = vector.shape_cast %28 : vector<1xf32> to vector<1x1xf32>
    %30 = vector.broadcast %29 : vector<1x1xf32> to vector<28x1xf32>
    %31 = arith.subf %27, %30 : vector<28x1xf32>
    %32 = math.exp %31 : vector<28x1xf32>
    %33 = vector.broadcast %32 : vector<28x1xf32> to vector<28x17xf32>
    %34 = arith.mulf %33, %0 : vector<28x17xf32>
    %cst_29 = arith.constant dense<0.000000e+00> : vector<4x17xf32>
    %35 = tpu.matmul %4, %34, %cst_29 {dimension_numbers = #tpu.dot_dimension_numbers<[1], [0], [0], [1], [0, 0, 1, 1], [], []>} : vector<4x28xf32>, vector<28x17xf32>, vector<4x17xf32> -> vector<4x17xf32>
    %36 = vector.extract_strided_slice %35 {offsets = [0, 0], sizes = [4, 16], strides = [1, 1]} : vector<4x17xf32> to vector<4x16xf32>
    %37 = vector.extract_strided_slice %35 {offsets = [0, 16], sizes = [4, 1], strides = [1, 1]} : vector<4x17xf32> to vector<4x1xf32>
    %38 = tpu.reciprocal %37 {approx = true} : vector<4x1xf32> -> vector<4x1xf32>
    %39 = vector.broadcast %38 : vector<4x1xf32> to vector<4x16xf32>
    %40 = arith.mulf %36, %39 : vector<4x16xf32>
    %c0_30 = arith.constant 0 : index
    %c0_31 = arith.constant 0 : index
    %41 = vector.load %arg9[%c0_30, %c0_31] : memref<16x64xf32, #tpu.memory_space<vmem>>, vector<16x64xf32>
    %cst_32 = arith.constant dense<0.000000e+00> : vector<4x64xf32>
    %42 = tpu.matmul %40, %41, %cst_32 {dimension_numbers = #tpu.dot_dimension_numbers<[1], [0], [0], [1], [0, 0, 1, 1], [], []>} : vector<4x16xf32>, vector<16x64xf32>, vector<4x64xf32> -> vector<4x64xf32>
    %43 = vector.extract_strided_slice %11 {offsets = [0, 0], sizes = [4, 64], strides = [1, 1]} : vector<28x64xf32> to vector<4x64xf32>
    %44 = arith.addf %42, %43 : vector<4x64xf32>
    %45 = arith.addf %44, %23 : vector<4x64xf32>
    %46 = vector.extract_strided_slice %45 {offsets = [0, 0], sizes = [4, 16], strides = [1, 1]} : vector<4x64xf32> to vector<4x16xf32>
    %47 = arith.negf %46 : vector<4x16xf32>
    %48 = math.exp %47 : vector<4x16xf32>
    %cst_33 = arith.constant 1.000000e+00 : f32
    %49 = vector.broadcast %cst_33 : f32 to vector<4x16xf32>
    %50 = arith.addf %49, %48 : vector<4x16xf32>
    %51 = arith.divf %49, %50 : vector<4x16xf32>
    %52 = vector.extract_strided_slice %45 {offsets = [0, 16], sizes = [4, 16], strides = [1, 1]} : vector<4x64xf32> to vector<4x16xf32>
    %53 = arith.negf %52 : vector<4x16xf32>
    %54 = math.exp %53 : vector<4x16xf32>
    %cst_34 = arith.constant 1.000000e+00 : f32
    %55 = vector.broadcast %cst_34 : f32 to vector<4x16xf32>
    %56 = arith.addf %55, %54 : vector<4x16xf32>
    %57 = arith.divf %55, %56 : vector<4x16xf32>
    %58 = vector.extract_strided_slice %45 {offsets = [0, 32], sizes = [4, 16], strides = [1, 1]} : vector<4x64xf32> to vector<4x16xf32>
    %59 = math.tanh %58 : vector<4x16xf32>
    %60 = vector.extract_strided_slice %45 {offsets = [0, 48], sizes = [4, 16], strides = [1, 1]} : vector<4x64xf32> to vector<4x16xf32>
    %61 = arith.negf %60 : vector<4x16xf32>
    %62 = math.exp %61 : vector<4x16xf32>
    %cst_35 = arith.constant 1.000000e+00 : f32
    %63 = vector.broadcast %cst_35 : f32 to vector<4x16xf32>
    %64 = arith.addf %63, %62 : vector<4x16xf32>
    %65 = arith.divf %63, %64 : vector<4x16xf32>
    %66 = arith.mulf %57, %16 : vector<4x16xf32>
    %67 = arith.mulf %51, %59 : vector<4x16xf32>
    %68 = arith.addf %66, %67 : vector<4x16xf32>
    %69 = math.tanh %68 : vector<4x16xf32>
    %70 = arith.mulf %65, %69 : vector<4x16xf32>
    %c0_36 = arith.constant 0 : index
    %c0_37 = arith.constant 0 : index
    %71 = vector.load %arg13[%c0_36, %c0_37] : memref<16x64xf32, #tpu.memory_space<vmem>>, vector<16x64xf32>
    %cst_38 = arith.constant dense<0.000000e+00> : vector<4x64xf32>
    %72 = tpu.matmul %70, %71, %cst_38 {dimension_numbers = #tpu.dot_dimension_numbers<[1], [0], [0], [1], [0, 0, 1, 1], [], []>} : vector<4x16xf32>, vector<16x64xf32>, vector<4x64xf32> -> vector<4x64xf32>
    %73 = arith.addf %72, %21 : vector<4x64xf32>
    %c0_39 = arith.constant 0 : index
    %c0_40 = arith.constant 0 : index
    %74 = vector.load %arg14[%c0_39, %c0_40] : memref<1x64xf32, #tpu.memory_space<vmem>>, vector<1x64xf32>
    %75 = vector.broadcast %74 : vector<1x64xf32> to vector<4x64xf32>
    %76 = arith.addf %73, %75 : vector<4x64xf32>
    %77 = vector.extract_strided_slice %76 {offsets = [0, 0], sizes = [4, 16], strides = [1, 1]} : vector<4x64xf32> to vector<4x16xf32>
    %78 = arith.negf %77 : vector<4x16xf32>
    %79 = math.exp %78 : vector<4x16xf32>
    %cst_41 = arith.constant 1.000000e+00 : f32
    %80 = vector.broadcast %cst_41 : f32 to vector<4x16xf32>
    %81 = arith.addf %80, %79 : vector<4x16xf32>
    %82 = arith.divf %80, %81 : vector<4x16xf32>
    %83 = vector.extract_strided_slice %76 {offsets = [0, 16], sizes = [4, 16], strides = [1, 1]} : vector<4x64xf32> to vector<4x16xf32>
    %84 = arith.negf %83 : vector<4x16xf32>
    %85 = math.exp %84 : vector<4x16xf32>
    %cst_42 = arith.constant 1.000000e+00 : f32
    %86 = vector.broadcast %cst_42 : f32 to vector<4x16xf32>
    %87 = arith.addf %86, %85 : vector<4x16xf32>
    %88 = arith.divf %86, %87 : vector<4x16xf32>
    %89 = vector.extract_strided_slice %76 {offsets = [0, 32], sizes = [4, 16], strides = [1, 1]} : vector<4x64xf32> to vector<4x16xf32>
    %90 = math.tanh %89 : vector<4x16xf32>
    %91 = vector.extract_strided_slice %76 {offsets = [0, 48], sizes = [4, 16], strides = [1, 1]} : vector<4x64xf32> to vector<4x16xf32>
    %92 = arith.negf %91 : vector<4x16xf32>
    %93 = math.exp %92 : vector<4x16xf32>
    %cst_43 = arith.constant 1.000000e+00 : f32
    %94 = vector.broadcast %cst_43 : f32 to vector<4x16xf32>
    %95 = arith.addf %94, %93 : vector<4x16xf32>
    %96 = arith.divf %94, %95 : vector<4x16xf32>
    %97 = arith.mulf %88, %17 : vector<4x16xf32>
    %98 = arith.mulf %82, %90 : vector<4x16xf32>
    %99 = arith.addf %97, %98 : vector<4x16xf32>
    %100 = math.tanh %99 : vector<4x16xf32>
    %101 = arith.mulf %96, %100 : vector<4x16xf32>
    %c0_44 = arith.constant 0 : index
    %c0_45 = arith.constant 0 : index
    %102 = vector.load %arg6[%c0_44, %c0_45] : memref<16x80xf32, #tpu.memory_space<vmem>>, vector<16x80xf32>
    %cst_46 = arith.constant dense<0.000000e+00> : vector<4x80xf32>
    %103 = tpu.matmul %101, %102, %cst_46 {dimension_numbers = #tpu.dot_dimension_numbers<[1], [0], [0], [1], [0, 0, 1, 1], [], []>} : vector<4x16xf32>, vector<16x80xf32>, vector<4x80xf32> -> vector<4x80xf32>
    %104 = vector.extract_strided_slice %103 {offsets = [0, 0], sizes = [4, 16], strides = [1, 1]} : vector<4x80xf32> to vector<4x16xf32>
    %105 = vector.extract_strided_slice %103 {offsets = [0, 16], sizes = [4, 64], strides = [1, 1]} : vector<4x80xf32> to vector<4x64xf32>
    %c0_47 = arith.constant 0 : index
    %c0_48 = arith.constant 0 : index
    %106 = vector.load %arg11[%c0_47, %c0_48] : memref<16x64xf32, #tpu.memory_space<vmem>>, vector<16x64xf32>
    %cst_49 = arith.constant dense<0.000000e+00> : vector<4x64xf32>
    %107 = tpu.matmul %70, %106, %cst_49 {dimension_numbers = #tpu.dot_dimension_numbers<[1], [0], [0], [1], [0, 0, 1, 1], [], []>} : vector<4x16xf32>, vector<16x64xf32>, vector<4x64xf32> -> vector<4x64xf32>
    %cst_50 = arith.constant dense<0.000000e+00> : vector<28x16xf32>
    %108 = tpu.matmul %3, %104, %cst_50 {dimension_numbers = #tpu.dot_dimension_numbers<[1], [0], [0], [1], [0, 0, 1, 1], [], []>} : vector<28x4xf32>, vector<4x16xf32>, vector<28x16xf32> -> vector<28x16xf32>
    %109 = arith.addf %108, %2 : vector<28x16xf32>
    %110 = math.tanh %109 : vector<28x16xf32>
    %cst_51 = arith.constant dense<0.000000e+00> : vector<28x1xf32>
    %111 = tpu.matmul %110, %5, %cst_51 {dimension_numbers = #tpu.dot_dimension_numbers<[1], [0], [0], [1], [0, 0, 1, 1], [], []>} : vector<28x16xf32>, vector<16x1xf32>, vector<28x1xf32> -> vector<28x1xf32>
    %cst_52 = arith.constant dense<0xFF800000> : vector<1xf32>
    %112 = vector.multi_reduction <maximumf>, %111, %cst_52 [0] : vector<28x1xf32> to vector<1xf32>
    %113 = vector.shape_cast %112 : vector<1xf32> to vector<1x1xf32>
    %114 = vector.broadcast %113 : vector<1x1xf32> to vector<28x1xf32>
    %115 = arith.subf %111, %114 : vector<28x1xf32>
    %116 = math.exp %115 : vector<28x1xf32>
    %117 = vector.broadcast %116 : vector<28x1xf32> to vector<28x17xf32>
    %118 = arith.mulf %117, %0 : vector<28x17xf32>
    %cst_53 = arith.constant dense<0.000000e+00> : vector<4x17xf32>
    %119 = tpu.matmul %4, %118, %cst_53 {dimension_numbers = #tpu.dot_dimension_numbers<[1], [0], [0], [1], [0, 0, 1, 1], [], []>} : vector<4x28xf32>, vector<28x17xf32>, vector<4x17xf32> -> vector<4x17xf32>
    %120 = vector.extract_strided_slice %119 {offsets = [0, 0], sizes = [4, 16], strides = [1, 1]} : vector<4x17xf32> to vector<4x16xf32>
    %121 = vector.extract_strided_slice %119 {offsets = [0, 16], sizes = [4, 1], strides = [1, 1]} : vector<4x17xf32> to vector<4x1xf32>
    %122 = tpu.reciprocal %121 {approx = true} : vector<4x1xf32> -> vector<4x1xf32>
    %123 = vector.broadcast %122 : vector<4x1xf32> to vector<4x16xf32>
    %124 = arith.mulf %120, %123 : vector<4x16xf32>
    %c0_54 = arith.constant 0 : index
    %c0_55 = arith.constant 0 : index
    %125 = vector.load %arg9[%c0_54, %c0_55] : memref<16x64xf32, #tpu.memory_space<vmem>>, vector<16x64xf32>
    %cst_56 = arith.constant dense<0.000000e+00> : vector<4x64xf32>
    %126 = tpu.matmul %124, %125, %cst_56 {dimension_numbers = #tpu.dot_dimension_numbers<[1], [0], [0], [1], [0, 0, 1, 1], [], []>} : vector<4x16xf32>, vector<16x64xf32>, vector<4x64xf32> -> vector<4x64xf32>
    %127 = vector.extract_strided_slice %11 {offsets = [4, 0], sizes = [4, 64], strides = [1, 1]} : vector<28x64xf32> to vector<4x64xf32>
    %128 = arith.addf %126, %127 : vector<4x64xf32>
    %129 = arith.addf %128, %107 : vector<4x64xf32>
    %130 = vector.extract_strided_slice %129 {offsets = [0, 0], sizes = [4, 16], strides = [1, 1]} : vector<4x64xf32> to vector<4x16xf32>
    %131 = arith.negf %130 : vector<4x16xf32>
    %132 = math.exp %131 : vector<4x16xf32>
    %cst_57 = arith.constant 1.000000e+00 : f32
    %133 = vector.broadcast %cst_57 : f32 to vector<4x16xf32>
    %134 = arith.addf %133, %132 : vector<4x16xf32>
    %135 = arith.divf %133, %134 : vector<4x16xf32>
    %136 = vector.extract_strided_slice %129 {offsets = [0, 16], sizes = [4, 16], strides = [1, 1]} : vector<4x64xf32> to vector<4x16xf32>
    %137 = arith.negf %136 : vector<4x16xf32>
    %138 = math.exp %137 : vector<4x16xf32>
    %cst_58 = arith.constant 1.000000e+00 : f32
    %139 = vector.broadcast %cst_58 : f32 to vector<4x16xf32>
    %140 = arith.addf %139, %138 : vector<4x16xf32>
    %141 = arith.divf %139, %140 : vector<4x16xf32>
    %142 = vector.extract_strided_slice %129 {offsets = [0, 32], sizes = [4, 16], strides = [1, 1]} : vector<4x64xf32> to vector<4x16xf32>
    %143 = math.tanh %142 : vector<4x16xf32>
    %144 = vector.extract_strided_slice %129 {offsets = [0, 48], sizes = [4, 16], strides = [1, 1]} : vector<4x64xf32> to vector<4x16xf32>
    %145 = arith.negf %144 : vector<4x16xf32>
    %146 = math.exp %145 : vector<4x16xf32>
    %cst_59 = arith.constant 1.000000e+00 : f32
    %147 = vector.broadcast %cst_59 : f32 to vector<4x16xf32>
    %148 = arith.addf %147, %146 : vector<4x16xf32>
    %149 = arith.divf %147, %148 : vector<4x16xf32>
    %150 = arith.mulf %141, %68 : vector<4x16xf32>
    %151 = arith.mulf %135, %143 : vector<4x16xf32>
    %152 = arith.addf %150, %151 : vector<4x16xf32>
    %153 = math.tanh %152 : vector<4x16xf32>
    %154 = arith.mulf %149, %153 : vector<4x16xf32>
    %c0_60 = arith.constant 0 : index
    %c0_61 = arith.constant 0 : index
    %155 = vector.load %arg13[%c0_60, %c0_61] : memref<16x64xf32, #tpu.memory_space<vmem>>, vector<16x64xf32>
    %cst_62 = arith.constant dense<0.000000e+00> : vector<4x64xf32>
    %156 = tpu.matmul %154, %155, %cst_62 {dimension_numbers = #tpu.dot_dimension_numbers<[1], [0], [0], [1], [0, 0, 1, 1], [], []>} : vector<4x16xf32>, vector<16x64xf32>, vector<4x64xf32> -> vector<4x64xf32>
    %157 = arith.addf %156, %105 : vector<4x64xf32>
    %c0_63 = arith.constant 0 : index
    %c0_64 = arith.constant 0 : index
    %158 = vector.load %arg14[%c0_63, %c0_64] : memref<1x64xf32, #tpu.memory_space<vmem>>, vector<1x64xf32>
    %159 = vector.broadcast %158 : vector<1x64xf32> to vector<4x64xf32>
    %160 = arith.addf %157, %159 : vector<4x64xf32>
    %161 = vector.extract_strided_slice %160 {offsets = [0, 0], sizes = [4, 16], strides = [1, 1]} : vector<4x64xf32> to vector<4x16xf32>
    %162 = arith.negf %161 : vector<4x16xf32>
    %163 = math.exp %162 : vector<4x16xf32>
    %cst_65 = arith.constant 1.000000e+00 : f32
    %164 = vector.broadcast %cst_65 : f32 to vector<4x16xf32>
    %165 = arith.addf %164, %163 : vector<4x16xf32>
    %166 = arith.divf %164, %165 : vector<4x16xf32>
    %167 = vector.extract_strided_slice %160 {offsets = [0, 16], sizes = [4, 16], strides = [1, 1]} : vector<4x64xf32> to vector<4x16xf32>
    %168 = arith.negf %167 : vector<4x16xf32>
    %169 = math.exp %168 : vector<4x16xf32>
    %cst_66 = arith.constant 1.000000e+00 : f32
    %170 = vector.broadcast %cst_66 : f32 to vector<4x16xf32>
    %171 = arith.addf %170, %169 : vector<4x16xf32>
    %172 = arith.divf %170, %171 : vector<4x16xf32>
    %173 = vector.extract_strided_slice %160 {offsets = [0, 32], sizes = [4, 16], strides = [1, 1]} : vector<4x64xf32> to vector<4x16xf32>
    %174 = math.tanh %173 : vector<4x16xf32>
    %175 = vector.extract_strided_slice %160 {offsets = [0, 48], sizes = [4, 16], strides = [1, 1]} : vector<4x64xf32> to vector<4x16xf32>
    %176 = arith.negf %175 : vector<4x16xf32>
    %177 = math.exp %176 : vector<4x16xf32>
    %cst_67 = arith.constant 1.000000e+00 : f32
    %178 = vector.broadcast %cst_67 : f32 to vector<4x16xf32>
    %179 = arith.addf %178, %177 : vector<4x16xf32>
    %180 = arith.divf %178, %179 : vector<4x16xf32>
    %181 = arith.mulf %172, %99 : vector<4x16xf32>
    %182 = arith.mulf %166, %174 : vector<4x16xf32>
    %183 = arith.addf %181, %182 : vector<4x16xf32>
    %184 = math.tanh %183 : vector<4x16xf32>
    %185 = arith.mulf %180, %184 : vector<4x16xf32>
    %c0_68 = arith.constant 0 : index
    %c0_69 = arith.constant 0 : index
    %186 = vector.load %arg6[%c0_68, %c0_69] : memref<16x80xf32, #tpu.memory_space<vmem>>, vector<16x80xf32>
    %cst_70 = arith.constant dense<0.000000e+00> : vector<4x80xf32>
    %187 = tpu.matmul %185, %186, %cst_70 {dimension_numbers = #tpu.dot_dimension_numbers<[1], [0], [0], [1], [0, 0, 1, 1], [], []>} : vector<4x16xf32>, vector<16x80xf32>, vector<4x80xf32> -> vector<4x80xf32>
    %188 = vector.extract_strided_slice %187 {offsets = [0, 0], sizes = [4, 16], strides = [1, 1]} : vector<4x80xf32> to vector<4x16xf32>
    %189 = vector.extract_strided_slice %187 {offsets = [0, 16], sizes = [4, 64], strides = [1, 1]} : vector<4x80xf32> to vector<4x64xf32>
    %c0_71 = arith.constant 0 : index
    %c0_72 = arith.constant 0 : index
    %190 = vector.load %arg11[%c0_71, %c0_72] : memref<16x64xf32, #tpu.memory_space<vmem>>, vector<16x64xf32>
    %cst_73 = arith.constant dense<0.000000e+00> : vector<4x64xf32>
    %191 = tpu.matmul %154, %190, %cst_73 {dimension_numbers = #tpu.dot_dimension_numbers<[1], [0], [0], [1], [0, 0, 1, 1], [], []>} : vector<4x16xf32>, vector<16x64xf32>, vector<4x64xf32> -> vector<4x64xf32>
    %cst_74 = arith.constant dense<0.000000e+00> : vector<28x16xf32>
    %192 = tpu.matmul %3, %188, %cst_74 {dimension_numbers = #tpu.dot_dimension_numbers<[1], [0], [0], [1], [0, 0, 1, 1], [], []>} : vector<28x4xf32>, vector<4x16xf32>, vector<28x16xf32> -> vector<28x16xf32>
    %193 = arith.addf %192, %2 : vector<28x16xf32>
    %194 = math.tanh %193 : vector<28x16xf32>
    %cst_75 = arith.constant dense<0.000000e+00> : vector<28x1xf32>
    %195 = tpu.matmul %194, %5, %cst_75 {dimension_numbers = #tpu.dot_dimension_numbers<[1], [0], [0], [1], [0, 0, 1, 1], [], []>} : vector<28x16xf32>, vector<16x1xf32>, vector<28x1xf32> -> vector<28x1xf32>
    %cst_76 = arith.constant dense<0xFF800000> : vector<1xf32>
    %196 = vector.multi_reduction <maximumf>, %195, %cst_76 [0] : vector<28x1xf32> to vector<1xf32>
    %197 = vector.shape_cast %196 : vector<1xf32> to vector<1x1xf32>
    %198 = vector.broadcast %197 : vector<1x1xf32> to vector<28x1xf32>
    %199 = arith.subf %195, %198 : vector<28x1xf32>
    %200 = math.exp %199 : vector<28x1xf32>
    %201 = vector.broadcast %200 : vector<28x1xf32> to vector<28x17xf32>
    %202 = arith.mulf %201, %0 : vector<28x17xf32>
    %cst_77 = arith.constant dense<0.000000e+00> : vector<4x17xf32>
    %203 = tpu.matmul %4, %202, %cst_77 {dimension_numbers = #tpu.dot_dimension_numbers<[1], [0], [0], [1], [0, 0, 1, 1], [], []>} : vector<4x28xf32>, vector<28x17xf32>, vector<4x17xf32> -> vector<4x17xf32>
    %204 = vector.extract_strided_slice %203 {offsets = [0, 0], sizes = [4, 16], strides = [1, 1]} : vector<4x17xf32> to vector<4x16xf32>
    %205 = vector.extract_strided_slice %203 {offsets = [0, 16], sizes = [4, 1], strides = [1, 1]} : vector<4x17xf32> to vector<4x1xf32>
    %206 = tpu.reciprocal %205 {approx = true} : vector<4x1xf32> -> vector<4x1xf32>
    %207 = vector.broadcast %206 : vector<4x1xf32> to vector<4x16xf32>
    %208 = arith.mulf %204, %207 : vector<4x16xf32>
    %c0_78 = arith.constant 0 : index
    %c0_79 = arith.constant 0 : index
    %209 = vector.load %arg9[%c0_78, %c0_79] : memref<16x64xf32, #tpu.memory_space<vmem>>, vector<16x64xf32>
    %cst_80 = arith.constant dense<0.000000e+00> : vector<4x64xf32>
    %210 = tpu.matmul %208, %209, %cst_80 {dimension_numbers = #tpu.dot_dimension_numbers<[1], [0], [0], [1], [0, 0, 1, 1], [], []>} : vector<4x16xf32>, vector<16x64xf32>, vector<4x64xf32> -> vector<4x64xf32>
    %211 = vector.extract_strided_slice %11 {offsets = [8, 0], sizes = [4, 64], strides = [1, 1]} : vector<28x64xf32> to vector<4x64xf32>
    %212 = arith.addf %210, %211 : vector<4x64xf32>
    %213 = arith.addf %212, %191 : vector<4x64xf32>
    %214 = vector.extract_strided_slice %213 {offsets = [0, 0], sizes = [4, 16], strides = [1, 1]} : vector<4x64xf32> to vector<4x16xf32>
    %215 = arith.negf %214 : vector<4x16xf32>
    %216 = math.exp %215 : vector<4x16xf32>
    %cst_81 = arith.constant 1.000000e+00 : f32
    %217 = vector.broadcast %cst_81 : f32 to vector<4x16xf32>
    %218 = arith.addf %217, %216 : vector<4x16xf32>
    %219 = arith.divf %217, %218 : vector<4x16xf32>
    %220 = vector.extract_strided_slice %213 {offsets = [0, 16], sizes = [4, 16], strides = [1, 1]} : vector<4x64xf32> to vector<4x16xf32>
    %221 = arith.negf %220 : vector<4x16xf32>
    %222 = math.exp %221 : vector<4x16xf32>
    %cst_82 = arith.constant 1.000000e+00 : f32
    %223 = vector.broadcast %cst_82 : f32 to vector<4x16xf32>
    %224 = arith.addf %223, %222 : vector<4x16xf32>
    %225 = arith.divf %223, %224 : vector<4x16xf32>
    %226 = vector.extract_strided_slice %213 {offsets = [0, 32], sizes = [4, 16], strides = [1, 1]} : vector<4x64xf32> to vector<4x16xf32>
    %227 = math.tanh %226 : vector<4x16xf32>
    %228 = vector.extract_strided_slice %213 {offsets = [0, 48], sizes = [4, 16], strides = [1, 1]} : vector<4x64xf32> to vector<4x16xf32>
    %229 = arith.negf %228 : vector<4x16xf32>
    %230 = math.exp %229 : vector<4x16xf32>
    %cst_83 = arith.constant 1.000000e+00 : f32
    %231 = vector.broadcast %cst_83 : f32 to vector<4x16xf32>
    %232 = arith.addf %231, %230 : vector<4x16xf32>
    %233 = arith.divf %231, %232 : vector<4x16xf32>
    %234 = arith.mulf %225, %152 : vector<4x16xf32>
    %235 = arith.mulf %219, %227 : vector<4x16xf32>
    %236 = arith.addf %234, %235 : vector<4x16xf32>
    %237 = math.tanh %236 : vector<4x16xf32>
    %238 = arith.mulf %233, %237 : vector<4x16xf32>
    %c0_84 = arith.constant 0 : index
    %c0_85 = arith.constant 0 : index
    %239 = vector.load %arg13[%c0_84, %c0_85] : memref<16x64xf32, #tpu.memory_space<vmem>>, vector<16x64xf32>
    %cst_86 = arith.constant dense<0.000000e+00> : vector<4x64xf32>
    %240 = tpu.matmul %238, %239, %cst_86 {dimension_numbers = #tpu.dot_dimension_numbers<[1], [0], [0], [1], [0, 0, 1, 1], [], []>} : vector<4x16xf32>, vector<16x64xf32>, vector<4x64xf32> -> vector<4x64xf32>
    %241 = arith.addf %240, %189 : vector<4x64xf32>
    %c0_87 = arith.constant 0 : index
    %c0_88 = arith.constant 0 : index
    %242 = vector.load %arg14[%c0_87, %c0_88] : memref<1x64xf32, #tpu.memory_space<vmem>>, vector<1x64xf32>
    %243 = vector.broadcast %242 : vector<1x64xf32> to vector<4x64xf32>
    %244 = arith.addf %241, %243 : vector<4x64xf32>
    %245 = vector.extract_strided_slice %244 {offsets = [0, 0], sizes = [4, 16], strides = [1, 1]} : vector<4x64xf32> to vector<4x16xf32>
    %246 = arith.negf %245 : vector<4x16xf32>
    %247 = math.exp %246 : vector<4x16xf32>
    %cst_89 = arith.constant 1.000000e+00 : f32
    %248 = vector.broadcast %cst_89 : f32 to vector<4x16xf32>
    %249 = arith.addf %248, %247 : vector<4x16xf32>
    %250 = arith.divf %248, %249 : vector<4x16xf32>
    %251 = vector.extract_strided_slice %244 {offsets = [0, 16], sizes = [4, 16], strides = [1, 1]} : vector<4x64xf32> to vector<4x16xf32>
    %252 = arith.negf %251 : vector<4x16xf32>
    %253 = math.exp %252 : vector<4x16xf32>
    %cst_90 = arith.constant 1.000000e+00 : f32
    %254 = vector.broadcast %cst_90 : f32 to vector<4x16xf32>
    %255 = arith.addf %254, %253 : vector<4x16xf32>
    %256 = arith.divf %254, %255 : vector<4x16xf32>
    %257 = vector.extract_strided_slice %244 {offsets = [0, 32], sizes = [4, 16], strides = [1, 1]} : vector<4x64xf32> to vector<4x16xf32>
    %258 = math.tanh %257 : vector<4x16xf32>
    %259 = vector.extract_strided_slice %244 {offsets = [0, 48], sizes = [4, 16], strides = [1, 1]} : vector<4x64xf32> to vector<4x16xf32>
    %260 = arith.negf %259 : vector<4x16xf32>
    %261 = math.exp %260 : vector<4x16xf32>
    %cst_91 = arith.constant 1.000000e+00 : f32
    %262 = vector.broadcast %cst_91 : f32 to vector<4x16xf32>
    %263 = arith.addf %262, %261 : vector<4x16xf32>
    %264 = arith.divf %262, %263 : vector<4x16xf32>
    %265 = arith.mulf %256, %183 : vector<4x16xf32>
    %266 = arith.mulf %250, %258 : vector<4x16xf32>
    %267 = arith.addf %265, %266 : vector<4x16xf32>
    %268 = math.tanh %267 : vector<4x16xf32>
    %269 = arith.mulf %264, %268 : vector<4x16xf32>
    %c0_92 = arith.constant 0 : index
    %c0_93 = arith.constant 0 : index
    %270 = vector.load %arg6[%c0_92, %c0_93] : memref<16x80xf32, #tpu.memory_space<vmem>>, vector<16x80xf32>
    %cst_94 = arith.constant dense<0.000000e+00> : vector<4x80xf32>
    %271 = tpu.matmul %269, %270, %cst_94 {dimension_numbers = #tpu.dot_dimension_numbers<[1], [0], [0], [1], [0, 0, 1, 1], [], []>} : vector<4x16xf32>, vector<16x80xf32>, vector<4x80xf32> -> vector<4x80xf32>
    %272 = vector.extract_strided_slice %271 {offsets = [0, 0], sizes = [4, 16], strides = [1, 1]} : vector<4x80xf32> to vector<4x16xf32>
    %273 = vector.extract_strided_slice %271 {offsets = [0, 16], sizes = [4, 64], strides = [1, 1]} : vector<4x80xf32> to vector<4x64xf32>
    %c0_95 = arith.constant 0 : index
    %c0_96 = arith.constant 0 : index
    %274 = vector.load %arg11[%c0_95, %c0_96] : memref<16x64xf32, #tpu.memory_space<vmem>>, vector<16x64xf32>
    %cst_97 = arith.constant dense<0.000000e+00> : vector<4x64xf32>
    %275 = tpu.matmul %238, %274, %cst_97 {dimension_numbers = #tpu.dot_dimension_numbers<[1], [0], [0], [1], [0, 0, 1, 1], [], []>} : vector<4x16xf32>, vector<16x64xf32>, vector<4x64xf32> -> vector<4x64xf32>
    %cst_98 = arith.constant dense<0.000000e+00> : vector<28x16xf32>
    %276 = tpu.matmul %3, %272, %cst_98 {dimension_numbers = #tpu.dot_dimension_numbers<[1], [0], [0], [1], [0, 0, 1, 1], [], []>} : vector<28x4xf32>, vector<4x16xf32>, vector<28x16xf32> -> vector<28x16xf32>
    %277 = arith.addf %276, %2 : vector<28x16xf32>
    %278 = math.tanh %277 : vector<28x16xf32>
    %cst_99 = arith.constant dense<0.000000e+00> : vector<28x1xf32>
    %279 = tpu.matmul %278, %5, %cst_99 {dimension_numbers = #tpu.dot_dimension_numbers<[1], [0], [0], [1], [0, 0, 1, 1], [], []>} : vector<28x16xf32>, vector<16x1xf32>, vector<28x1xf32> -> vector<28x1xf32>
    %cst_100 = arith.constant dense<0xFF800000> : vector<1xf32>
    %280 = vector.multi_reduction <maximumf>, %279, %cst_100 [0] : vector<28x1xf32> to vector<1xf32>
    %281 = vector.shape_cast %280 : vector<1xf32> to vector<1x1xf32>
    %282 = vector.broadcast %281 : vector<1x1xf32> to vector<28x1xf32>
    %283 = arith.subf %279, %282 : vector<28x1xf32>
    %284 = math.exp %283 : vector<28x1xf32>
    %285 = vector.broadcast %284 : vector<28x1xf32> to vector<28x17xf32>
    %286 = arith.mulf %285, %0 : vector<28x17xf32>
    %cst_101 = arith.constant dense<0.000000e+00> : vector<4x17xf32>
    %287 = tpu.matmul %4, %286, %cst_101 {dimension_numbers = #tpu.dot_dimension_numbers<[1], [0], [0], [1], [0, 0, 1, 1], [], []>} : vector<4x28xf32>, vector<28x17xf32>, vector<4x17xf32> -> vector<4x17xf32>
    %288 = vector.extract_strided_slice %287 {offsets = [0, 0], sizes = [4, 16], strides = [1, 1]} : vector<4x17xf32> to vector<4x16xf32>
    %289 = vector.extract_strided_slice %287 {offsets = [0, 16], sizes = [4, 1], strides = [1, 1]} : vector<4x17xf32> to vector<4x1xf32>
    %290 = tpu.reciprocal %289 {approx = true} : vector<4x1xf32> -> vector<4x1xf32>
    %291 = vector.broadcast %290 : vector<4x1xf32> to vector<4x16xf32>
    %292 = arith.mulf %288, %291 : vector<4x16xf32>
    %c0_102 = arith.constant 0 : index
    %c0_103 = arith.constant 0 : index
    %293 = vector.load %arg9[%c0_102, %c0_103] : memref<16x64xf32, #tpu.memory_space<vmem>>, vector<16x64xf32>
    %cst_104 = arith.constant dense<0.000000e+00> : vector<4x64xf32>
    %294 = tpu.matmul %292, %293, %cst_104 {dimension_numbers = #tpu.dot_dimension_numbers<[1], [0], [0], [1], [0, 0, 1, 1], [], []>} : vector<4x16xf32>, vector<16x64xf32>, vector<4x64xf32> -> vector<4x64xf32>
    %295 = vector.extract_strided_slice %11 {offsets = [12, 0], sizes = [4, 64], strides = [1, 1]} : vector<28x64xf32> to vector<4x64xf32>
    %296 = arith.addf %294, %295 : vector<4x64xf32>
    %297 = arith.addf %296, %275 : vector<4x64xf32>
    %298 = vector.extract_strided_slice %297 {offsets = [0, 0], sizes = [4, 16], strides = [1, 1]} : vector<4x64xf32> to vector<4x16xf32>
    %299 = arith.negf %298 : vector<4x16xf32>
    %300 = math.exp %299 : vector<4x16xf32>
    %cst_105 = arith.constant 1.000000e+00 : f32
    %301 = vector.broadcast %cst_105 : f32 to vector<4x16xf32>
    %302 = arith.addf %301, %300 : vector<4x16xf32>
    %303 = arith.divf %301, %302 : vector<4x16xf32>
    %304 = vector.extract_strided_slice %297 {offsets = [0, 16], sizes = [4, 16], strides = [1, 1]} : vector<4x64xf32> to vector<4x16xf32>
    %305 = arith.negf %304 : vector<4x16xf32>
    %306 = math.exp %305 : vector<4x16xf32>
    %cst_106 = arith.constant 1.000000e+00 : f32
    %307 = vector.broadcast %cst_106 : f32 to vector<4x16xf32>
    %308 = arith.addf %307, %306 : vector<4x16xf32>
    %309 = arith.divf %307, %308 : vector<4x16xf32>
    %310 = vector.extract_strided_slice %297 {offsets = [0, 32], sizes = [4, 16], strides = [1, 1]} : vector<4x64xf32> to vector<4x16xf32>
    %311 = math.tanh %310 : vector<4x16xf32>
    %312 = vector.extract_strided_slice %297 {offsets = [0, 48], sizes = [4, 16], strides = [1, 1]} : vector<4x64xf32> to vector<4x16xf32>
    %313 = arith.negf %312 : vector<4x16xf32>
    %314 = math.exp %313 : vector<4x16xf32>
    %cst_107 = arith.constant 1.000000e+00 : f32
    %315 = vector.broadcast %cst_107 : f32 to vector<4x16xf32>
    %316 = arith.addf %315, %314 : vector<4x16xf32>
    %317 = arith.divf %315, %316 : vector<4x16xf32>
    %318 = arith.mulf %309, %236 : vector<4x16xf32>
    %319 = arith.mulf %303, %311 : vector<4x16xf32>
    %320 = arith.addf %318, %319 : vector<4x16xf32>
    %321 = math.tanh %320 : vector<4x16xf32>
    %322 = arith.mulf %317, %321 : vector<4x16xf32>
    %c0_108 = arith.constant 0 : index
    %c0_109 = arith.constant 0 : index
    %323 = vector.load %arg13[%c0_108, %c0_109] : memref<16x64xf32, #tpu.memory_space<vmem>>, vector<16x64xf32>
    %cst_110 = arith.constant dense<0.000000e+00> : vector<4x64xf32>
    %324 = tpu.matmul %322, %323, %cst_110 {dimension_numbers = #tpu.dot_dimension_numbers<[1], [0], [0], [1], [0, 0, 1, 1], [], []>} : vector<4x16xf32>, vector<16x64xf32>, vector<4x64xf32> -> vector<4x64xf32>
    %325 = arith.addf %324, %273 : vector<4x64xf32>
    %c0_111 = arith.constant 0 : index
    %c0_112 = arith.constant 0 : index
    %326 = vector.load %arg14[%c0_111, %c0_112] : memref<1x64xf32, #tpu.memory_space<vmem>>, vector<1x64xf32>
    %327 = vector.broadcast %326 : vector<1x64xf32> to vector<4x64xf32>
    %328 = arith.addf %325, %327 : vector<4x64xf32>
    %329 = vector.extract_strided_slice %328 {offsets = [0, 0], sizes = [4, 16], strides = [1, 1]} : vector<4x64xf32> to vector<4x16xf32>
    %330 = arith.negf %329 : vector<4x16xf32>
    %331 = math.exp %330 : vector<4x16xf32>
    %cst_113 = arith.constant 1.000000e+00 : f32
    %332 = vector.broadcast %cst_113 : f32 to vector<4x16xf32>
    %333 = arith.addf %332, %331 : vector<4x16xf32>
    %334 = arith.divf %332, %333 : vector<4x16xf32>
    %335 = vector.extract_strided_slice %328 {offsets = [0, 16], sizes = [4, 16], strides = [1, 1]} : vector<4x64xf32> to vector<4x16xf32>
    %336 = arith.negf %335 : vector<4x16xf32>
    %337 = math.exp %336 : vector<4x16xf32>
    %cst_114 = arith.constant 1.000000e+00 : f32
    %338 = vector.broadcast %cst_114 : f32 to vector<4x16xf32>
    %339 = arith.addf %338, %337 : vector<4x16xf32>
    %340 = arith.divf %338, %339 : vector<4x16xf32>
    %341 = vector.extract_strided_slice %328 {offsets = [0, 32], sizes = [4, 16], strides = [1, 1]} : vector<4x64xf32> to vector<4x16xf32>
    %342 = math.tanh %341 : vector<4x16xf32>
    %343 = vector.extract_strided_slice %328 {offsets = [0, 48], sizes = [4, 16], strides = [1, 1]} : vector<4x64xf32> to vector<4x16xf32>
    %344 = arith.negf %343 : vector<4x16xf32>
    %345 = math.exp %344 : vector<4x16xf32>
    %cst_115 = arith.constant 1.000000e+00 : f32
    %346 = vector.broadcast %cst_115 : f32 to vector<4x16xf32>
    %347 = arith.addf %346, %345 : vector<4x16xf32>
    %348 = arith.divf %346, %347 : vector<4x16xf32>
    %349 = arith.mulf %340, %267 : vector<4x16xf32>
    %350 = arith.mulf %334, %342 : vector<4x16xf32>
    %351 = arith.addf %349, %350 : vector<4x16xf32>
    %352 = math.tanh %351 : vector<4x16xf32>
    %353 = arith.mulf %348, %352 : vector<4x16xf32>
    %c0_116 = arith.constant 0 : index
    %c0_117 = arith.constant 0 : index
    %354 = vector.load %arg6[%c0_116, %c0_117] : memref<16x80xf32, #tpu.memory_space<vmem>>, vector<16x80xf32>
    %cst_118 = arith.constant dense<0.000000e+00> : vector<4x80xf32>
    %355 = tpu.matmul %353, %354, %cst_118 {dimension_numbers = #tpu.dot_dimension_numbers<[1], [0], [0], [1], [0, 0, 1, 1], [], []>} : vector<4x16xf32>, vector<16x80xf32>, vector<4x80xf32> -> vector<4x80xf32>
    %356 = vector.extract_strided_slice %355 {offsets = [0, 0], sizes = [4, 16], strides = [1, 1]} : vector<4x80xf32> to vector<4x16xf32>
    %357 = vector.extract_strided_slice %355 {offsets = [0, 16], sizes = [4, 64], strides = [1, 1]} : vector<4x80xf32> to vector<4x64xf32>
    %c0_119 = arith.constant 0 : index
    %c0_120 = arith.constant 0 : index
    %358 = vector.load %arg11[%c0_119, %c0_120] : memref<16x64xf32, #tpu.memory_space<vmem>>, vector<16x64xf32>
    %cst_121 = arith.constant dense<0.000000e+00> : vector<4x64xf32>
    %359 = tpu.matmul %322, %358, %cst_121 {dimension_numbers = #tpu.dot_dimension_numbers<[1], [0], [0], [1], [0, 0, 1, 1], [], []>} : vector<4x16xf32>, vector<16x64xf32>, vector<4x64xf32> -> vector<4x64xf32>
    %cst_122 = arith.constant dense<0.000000e+00> : vector<28x16xf32>
    %360 = tpu.matmul %3, %356, %cst_122 {dimension_numbers = #tpu.dot_dimension_numbers<[1], [0], [0], [1], [0, 0, 1, 1], [], []>} : vector<28x4xf32>, vector<4x16xf32>, vector<28x16xf32> -> vector<28x16xf32>
    %361 = arith.addf %360, %2 : vector<28x16xf32>
    %362 = math.tanh %361 : vector<28x16xf32>
    %cst_123 = arith.constant dense<0.000000e+00> : vector<28x1xf32>
    %363 = tpu.matmul %362, %5, %cst_123 {dimension_numbers = #tpu.dot_dimension_numbers<[1], [0], [0], [1], [0, 0, 1, 1], [], []>} : vector<28x16xf32>, vector<16x1xf32>, vector<28x1xf32> -> vector<28x1xf32>
    %cst_124 = arith.constant dense<0xFF800000> : vector<1xf32>
    %364 = vector.multi_reduction <maximumf>, %363, %cst_124 [0] : vector<28x1xf32> to vector<1xf32>
    %365 = vector.shape_cast %364 : vector<1xf32> to vector<1x1xf32>
    %366 = vector.broadcast %365 : vector<1x1xf32> to vector<28x1xf32>
    %367 = arith.subf %363, %366 : vector<28x1xf32>
    %368 = math.exp %367 : vector<28x1xf32>
    %369 = vector.broadcast %368 : vector<28x1xf32> to vector<28x17xf32>
    %370 = arith.mulf %369, %0 : vector<28x17xf32>
    %cst_125 = arith.constant dense<0.000000e+00> : vector<4x17xf32>
    %371 = tpu.matmul %4, %370, %cst_125 {dimension_numbers = #tpu.dot_dimension_numbers<[1], [0], [0], [1], [0, 0, 1, 1], [], []>} : vector<4x28xf32>, vector<28x17xf32>, vector<4x17xf32> -> vector<4x17xf32>
    %372 = vector.extract_strided_slice %371 {offsets = [0, 0], sizes = [4, 16], strides = [1, 1]} : vector<4x17xf32> to vector<4x16xf32>
    %373 = vector.extract_strided_slice %371 {offsets = [0, 16], sizes = [4, 1], strides = [1, 1]} : vector<4x17xf32> to vector<4x1xf32>
    %374 = tpu.reciprocal %373 {approx = true} : vector<4x1xf32> -> vector<4x1xf32>
    %375 = vector.broadcast %374 : vector<4x1xf32> to vector<4x16xf32>
    %376 = arith.mulf %372, %375 : vector<4x16xf32>
    %c0_126 = arith.constant 0 : index
    %c0_127 = arith.constant 0 : index
    %377 = vector.load %arg9[%c0_126, %c0_127] : memref<16x64xf32, #tpu.memory_space<vmem>>, vector<16x64xf32>
    %cst_128 = arith.constant dense<0.000000e+00> : vector<4x64xf32>
    %378 = tpu.matmul %376, %377, %cst_128 {dimension_numbers = #tpu.dot_dimension_numbers<[1], [0], [0], [1], [0, 0, 1, 1], [], []>} : vector<4x16xf32>, vector<16x64xf32>, vector<4x64xf32> -> vector<4x64xf32>
    %379 = vector.extract_strided_slice %11 {offsets = [16, 0], sizes = [4, 64], strides = [1, 1]} : vector<28x64xf32> to vector<4x64xf32>
    %380 = arith.addf %378, %379 : vector<4x64xf32>
    %381 = arith.addf %380, %359 : vector<4x64xf32>
    %382 = vector.extract_strided_slice %381 {offsets = [0, 0], sizes = [4, 16], strides = [1, 1]} : vector<4x64xf32> to vector<4x16xf32>
    %383 = arith.negf %382 : vector<4x16xf32>
    %384 = math.exp %383 : vector<4x16xf32>
    %cst_129 = arith.constant 1.000000e+00 : f32
    %385 = vector.broadcast %cst_129 : f32 to vector<4x16xf32>
    %386 = arith.addf %385, %384 : vector<4x16xf32>
    %387 = arith.divf %385, %386 : vector<4x16xf32>
    %388 = vector.extract_strided_slice %381 {offsets = [0, 16], sizes = [4, 16], strides = [1, 1]} : vector<4x64xf32> to vector<4x16xf32>
    %389 = arith.negf %388 : vector<4x16xf32>
    %390 = math.exp %389 : vector<4x16xf32>
    %cst_130 = arith.constant 1.000000e+00 : f32
    %391 = vector.broadcast %cst_130 : f32 to vector<4x16xf32>
    %392 = arith.addf %391, %390 : vector<4x16xf32>
    %393 = arith.divf %391, %392 : vector<4x16xf32>
    %394 = vector.extract_strided_slice %381 {offsets = [0, 32], sizes = [4, 16], strides = [1, 1]} : vector<4x64xf32> to vector<4x16xf32>
    %395 = math.tanh %394 : vector<4x16xf32>
    %396 = vector.extract_strided_slice %381 {offsets = [0, 48], sizes = [4, 16], strides = [1, 1]} : vector<4x64xf32> to vector<4x16xf32>
    %397 = arith.negf %396 : vector<4x16xf32>
    %398 = math.exp %397 : vector<4x16xf32>
    %cst_131 = arith.constant 1.000000e+00 : f32
    %399 = vector.broadcast %cst_131 : f32 to vector<4x16xf32>
    %400 = arith.addf %399, %398 : vector<4x16xf32>
    %401 = arith.divf %399, %400 : vector<4x16xf32>
    %402 = arith.mulf %393, %320 : vector<4x16xf32>
    %403 = arith.mulf %387, %395 : vector<4x16xf32>
    %404 = arith.addf %402, %403 : vector<4x16xf32>
    %405 = math.tanh %404 : vector<4x16xf32>
    %406 = arith.mulf %401, %405 : vector<4x16xf32>
    %c0_132 = arith.constant 0 : index
    %c0_133 = arith.constant 0 : index
    %407 = vector.load %arg13[%c0_132, %c0_133] : memref<16x64xf32, #tpu.memory_space<vmem>>, vector<16x64xf32>
    %cst_134 = arith.constant dense<0.000000e+00> : vector<4x64xf32>
    %408 = tpu.matmul %406, %407, %cst_134 {dimension_numbers = #tpu.dot_dimension_numbers<[1], [0], [0], [1], [0, 0, 1, 1], [], []>} : vector<4x16xf32>, vector<16x64xf32>, vector<4x64xf32> -> vector<4x64xf32>
    %409 = arith.addf %408, %357 : vector<4x64xf32>
    %c0_135 = arith.constant 0 : index
    %c0_136 = arith.constant 0 : index
    %410 = vector.load %arg14[%c0_135, %c0_136] : memref<1x64xf32, #tpu.memory_space<vmem>>, vector<1x64xf32>
    %411 = vector.broadcast %410 : vector<1x64xf32> to vector<4x64xf32>
    %412 = arith.addf %409, %411 : vector<4x64xf32>
    %413 = vector.extract_strided_slice %412 {offsets = [0, 0], sizes = [4, 16], strides = [1, 1]} : vector<4x64xf32> to vector<4x16xf32>
    %414 = arith.negf %413 : vector<4x16xf32>
    %415 = math.exp %414 : vector<4x16xf32>
    %cst_137 = arith.constant 1.000000e+00 : f32
    %416 = vector.broadcast %cst_137 : f32 to vector<4x16xf32>
    %417 = arith.addf %416, %415 : vector<4x16xf32>
    %418 = arith.divf %416, %417 : vector<4x16xf32>
    %419 = vector.extract_strided_slice %412 {offsets = [0, 16], sizes = [4, 16], strides = [1, 1]} : vector<4x64xf32> to vector<4x16xf32>
    %420 = arith.negf %419 : vector<4x16xf32>
    %421 = math.exp %420 : vector<4x16xf32>
    %cst_138 = arith.constant 1.000000e+00 : f32
    %422 = vector.broadcast %cst_138 : f32 to vector<4x16xf32>
    %423 = arith.addf %422, %421 : vector<4x16xf32>
    %424 = arith.divf %422, %423 : vector<4x16xf32>
    %425 = vector.extract_strided_slice %412 {offsets = [0, 32], sizes = [4, 16], strides = [1, 1]} : vector<4x64xf32> to vector<4x16xf32>
    %426 = math.tanh %425 : vector<4x16xf32>
    %427 = vector.extract_strided_slice %412 {offsets = [0, 48], sizes = [4, 16], strides = [1, 1]} : vector<4x64xf32> to vector<4x16xf32>
    %428 = arith.negf %427 : vector<4x16xf32>
    %429 = math.exp %428 : vector<4x16xf32>
    %cst_139 = arith.constant 1.000000e+00 : f32
    %430 = vector.broadcast %cst_139 : f32 to vector<4x16xf32>
    %431 = arith.addf %430, %429 : vector<4x16xf32>
    %432 = arith.divf %430, %431 : vector<4x16xf32>
    %433 = arith.mulf %424, %351 : vector<4x16xf32>
    %434 = arith.mulf %418, %426 : vector<4x16xf32>
    %435 = arith.addf %433, %434 : vector<4x16xf32>
    %436 = math.tanh %435 : vector<4x16xf32>
    %437 = arith.mulf %432, %436 : vector<4x16xf32>
    %c0_140 = arith.constant 0 : index
    %c0_141 = arith.constant 0 : index
    %438 = vector.load %arg6[%c0_140, %c0_141] : memref<16x80xf32, #tpu.memory_space<vmem>>, vector<16x80xf32>
    %cst_142 = arith.constant dense<0.000000e+00> : vector<4x80xf32>
    %439 = tpu.matmul %437, %438, %cst_142 {dimension_numbers = #tpu.dot_dimension_numbers<[1], [0], [0], [1], [0, 0, 1, 1], [], []>} : vector<4x16xf32>, vector<16x80xf32>, vector<4x80xf32> -> vector<4x80xf32>
    %440 = vector.extract_strided_slice %439 {offsets = [0, 0], sizes = [4, 16], strides = [1, 1]} : vector<4x80xf32> to vector<4x16xf32>
    %441 = vector.extract_strided_slice %439 {offsets = [0, 16], sizes = [4, 64], strides = [1, 1]} : vector<4x80xf32> to vector<4x64xf32>
    %c0_143 = arith.constant 0 : index
    %c0_144 = arith.constant 0 : index
    %442 = vector.load %arg11[%c0_143, %c0_144] : memref<16x64xf32, #tpu.memory_space<vmem>>, vector<16x64xf32>
    %cst_145 = arith.constant dense<0.000000e+00> : vector<4x64xf32>
    %443 = tpu.matmul %406, %442, %cst_145 {dimension_numbers = #tpu.dot_dimension_numbers<[1], [0], [0], [1], [0, 0, 1, 1], [], []>} : vector<4x16xf32>, vector<16x64xf32>, vector<4x64xf32> -> vector<4x64xf32>
    %cst_146 = arith.constant dense<0.000000e+00> : vector<28x16xf32>
    %444 = tpu.matmul %3, %440, %cst_146 {dimension_numbers = #tpu.dot_dimension_numbers<[1], [0], [0], [1], [0, 0, 1, 1], [], []>} : vector<28x4xf32>, vector<4x16xf32>, vector<28x16xf32> -> vector<28x16xf32>
    %445 = arith.addf %444, %2 : vector<28x16xf32>
    %446 = math.tanh %445 : vector<28x16xf32>
    %cst_147 = arith.constant dense<0.000000e+00> : vector<28x1xf32>
    %447 = tpu.matmul %446, %5, %cst_147 {dimension_numbers = #tpu.dot_dimension_numbers<[1], [0], [0], [1], [0, 0, 1, 1], [], []>} : vector<28x16xf32>, vector<16x1xf32>, vector<28x1xf32> -> vector<28x1xf32>
    %cst_148 = arith.constant dense<0xFF800000> : vector<1xf32>
    %448 = vector.multi_reduction <maximumf>, %447, %cst_148 [0] : vector<28x1xf32> to vector<1xf32>
    %449 = vector.shape_cast %448 : vector<1xf32> to vector<1x1xf32>
    %450 = vector.broadcast %449 : vector<1x1xf32> to vector<28x1xf32>
    %451 = arith.subf %447, %450 : vector<28x1xf32>
    %452 = math.exp %451 : vector<28x1xf32>
    %453 = vector.broadcast %452 : vector<28x1xf32> to vector<28x17xf32>
    %454 = arith.mulf %453, %0 : vector<28x17xf32>
    %cst_149 = arith.constant dense<0.000000e+00> : vector<4x17xf32>
    %455 = tpu.matmul %4, %454, %cst_149 {dimension_numbers = #tpu.dot_dimension_numbers<[1], [0], [0], [1], [0, 0, 1, 1], [], []>} : vector<4x28xf32>, vector<28x17xf32>, vector<4x17xf32> -> vector<4x17xf32>
    %456 = vector.extract_strided_slice %455 {offsets = [0, 0], sizes = [4, 16], strides = [1, 1]} : vector<4x17xf32> to vector<4x16xf32>
    %457 = vector.extract_strided_slice %455 {offsets = [0, 16], sizes = [4, 1], strides = [1, 1]} : vector<4x17xf32> to vector<4x1xf32>
    %458 = tpu.reciprocal %457 {approx = true} : vector<4x1xf32> -> vector<4x1xf32>
    %459 = vector.broadcast %458 : vector<4x1xf32> to vector<4x16xf32>
    %460 = arith.mulf %456, %459 : vector<4x16xf32>
    %c0_150 = arith.constant 0 : index
    %c0_151 = arith.constant 0 : index
    %461 = vector.load %arg9[%c0_150, %c0_151] : memref<16x64xf32, #tpu.memory_space<vmem>>, vector<16x64xf32>
    %cst_152 = arith.constant dense<0.000000e+00> : vector<4x64xf32>
    %462 = tpu.matmul %460, %461, %cst_152 {dimension_numbers = #tpu.dot_dimension_numbers<[1], [0], [0], [1], [0, 0, 1, 1], [], []>} : vector<4x16xf32>, vector<16x64xf32>, vector<4x64xf32> -> vector<4x64xf32>
    %463 = vector.extract_strided_slice %11 {offsets = [20, 0], sizes = [4, 64], strides = [1, 1]} : vector<28x64xf32> to vector<4x64xf32>
    %464 = arith.addf %462, %463 : vector<4x64xf32>
    %465 = arith.addf %464, %443 : vector<4x64xf32>
    %466 = vector.extract_strided_slice %465 {offsets = [0, 0], sizes = [4, 16], strides = [1, 1]} : vector<4x64xf32> to vector<4x16xf32>
    %467 = arith.negf %466 : vector<4x16xf32>
    %468 = math.exp %467 : vector<4x16xf32>
    %cst_153 = arith.constant 1.000000e+00 : f32
    %469 = vector.broadcast %cst_153 : f32 to vector<4x16xf32>
    %470 = arith.addf %469, %468 : vector<4x16xf32>
    %471 = arith.divf %469, %470 : vector<4x16xf32>
    %472 = vector.extract_strided_slice %465 {offsets = [0, 16], sizes = [4, 16], strides = [1, 1]} : vector<4x64xf32> to vector<4x16xf32>
    %473 = arith.negf %472 : vector<4x16xf32>
    %474 = math.exp %473 : vector<4x16xf32>
    %cst_154 = arith.constant 1.000000e+00 : f32
    %475 = vector.broadcast %cst_154 : f32 to vector<4x16xf32>
    %476 = arith.addf %475, %474 : vector<4x16xf32>
    %477 = arith.divf %475, %476 : vector<4x16xf32>
    %478 = vector.extract_strided_slice %465 {offsets = [0, 32], sizes = [4, 16], strides = [1, 1]} : vector<4x64xf32> to vector<4x16xf32>
    %479 = math.tanh %478 : vector<4x16xf32>
    %480 = vector.extract_strided_slice %465 {offsets = [0, 48], sizes = [4, 16], strides = [1, 1]} : vector<4x64xf32> to vector<4x16xf32>
    %481 = arith.negf %480 : vector<4x16xf32>
    %482 = math.exp %481 : vector<4x16xf32>
    %cst_155 = arith.constant 1.000000e+00 : f32
    %483 = vector.broadcast %cst_155 : f32 to vector<4x16xf32>
    %484 = arith.addf %483, %482 : vector<4x16xf32>
    %485 = arith.divf %483, %484 : vector<4x16xf32>
    %486 = arith.mulf %477, %404 : vector<4x16xf32>
    %487 = arith.mulf %471, %479 : vector<4x16xf32>
    %488 = arith.addf %486, %487 : vector<4x16xf32>
    %489 = math.tanh %488 : vector<4x16xf32>
    %490 = arith.mulf %485, %489 : vector<4x16xf32>
    %c0_156 = arith.constant 0 : index
    %c0_157 = arith.constant 0 : index
    %491 = vector.load %arg13[%c0_156, %c0_157] : memref<16x64xf32, #tpu.memory_space<vmem>>, vector<16x64xf32>
    %cst_158 = arith.constant dense<0.000000e+00> : vector<4x64xf32>
    %492 = tpu.matmul %490, %491, %cst_158 {dimension_numbers = #tpu.dot_dimension_numbers<[1], [0], [0], [1], [0, 0, 1, 1], [], []>} : vector<4x16xf32>, vector<16x64xf32>, vector<4x64xf32> -> vector<4x64xf32>
    %493 = arith.addf %492, %441 : vector<4x64xf32>
    %c0_159 = arith.constant 0 : index
    %c0_160 = arith.constant 0 : index
    %494 = vector.load %arg14[%c0_159, %c0_160] : memref<1x64xf32, #tpu.memory_space<vmem>>, vector<1x64xf32>
    %495 = vector.broadcast %494 : vector<1x64xf32> to vector<4x64xf32>
    %496 = arith.addf %493, %495 : vector<4x64xf32>
    %497 = vector.extract_strided_slice %496 {offsets = [0, 0], sizes = [4, 16], strides = [1, 1]} : vector<4x64xf32> to vector<4x16xf32>
    %498 = arith.negf %497 : vector<4x16xf32>
    %499 = math.exp %498 : vector<4x16xf32>
    %cst_161 = arith.constant 1.000000e+00 : f32
    %500 = vector.broadcast %cst_161 : f32 to vector<4x16xf32>
    %501 = arith.addf %500, %499 : vector<4x16xf32>
    %502 = arith.divf %500, %501 : vector<4x16xf32>
    %503 = vector.extract_strided_slice %496 {offsets = [0, 16], sizes = [4, 16], strides = [1, 1]} : vector<4x64xf32> to vector<4x16xf32>
    %504 = arith.negf %503 : vector<4x16xf32>
    %505 = math.exp %504 : vector<4x16xf32>
    %cst_162 = arith.constant 1.000000e+00 : f32
    %506 = vector.broadcast %cst_162 : f32 to vector<4x16xf32>
    %507 = arith.addf %506, %505 : vector<4x16xf32>
    %508 = arith.divf %506, %507 : vector<4x16xf32>
    %509 = vector.extract_strided_slice %496 {offsets = [0, 32], sizes = [4, 16], strides = [1, 1]} : vector<4x64xf32> to vector<4x16xf32>
    %510 = math.tanh %509 : vector<4x16xf32>
    %511 = vector.extract_strided_slice %496 {offsets = [0, 48], sizes = [4, 16], strides = [1, 1]} : vector<4x64xf32> to vector<4x16xf32>
    %512 = arith.negf %511 : vector<4x16xf32>
    %513 = math.exp %512 : vector<4x16xf32>
    %cst_163 = arith.constant 1.000000e+00 : f32
    %514 = vector.broadcast %cst_163 : f32 to vector<4x16xf32>
    %515 = arith.addf %514, %513 : vector<4x16xf32>
    %516 = arith.divf %514, %515 : vector<4x16xf32>
    %517 = arith.mulf %508, %435 : vector<4x16xf32>
    %518 = arith.mulf %502, %510 : vector<4x16xf32>
    %519 = arith.addf %517, %518 : vector<4x16xf32>
    %520 = math.tanh %519 : vector<4x16xf32>
    %521 = arith.mulf %516, %520 : vector<4x16xf32>
    %c0_164 = arith.constant 0 : index
    %c0_165 = arith.constant 0 : index
    %522 = vector.load %arg6[%c0_164, %c0_165] : memref<16x80xf32, #tpu.memory_space<vmem>>, vector<16x80xf32>
    %cst_166 = arith.constant dense<0.000000e+00> : vector<4x80xf32>
    %523 = tpu.matmul %521, %522, %cst_166 {dimension_numbers = #tpu.dot_dimension_numbers<[1], [0], [0], [1], [0, 0, 1, 1], [], []>} : vector<4x16xf32>, vector<16x80xf32>, vector<4x80xf32> -> vector<4x80xf32>
    %524 = vector.extract_strided_slice %523 {offsets = [0, 0], sizes = [4, 16], strides = [1, 1]} : vector<4x80xf32> to vector<4x16xf32>
    %525 = vector.extract_strided_slice %523 {offsets = [0, 16], sizes = [4, 64], strides = [1, 1]} : vector<4x80xf32> to vector<4x64xf32>
    %c0_167 = arith.constant 0 : index
    %c0_168 = arith.constant 0 : index
    %526 = vector.load %arg11[%c0_167, %c0_168] : memref<16x64xf32, #tpu.memory_space<vmem>>, vector<16x64xf32>
    %cst_169 = arith.constant dense<0.000000e+00> : vector<4x64xf32>
    %527 = tpu.matmul %490, %526, %cst_169 {dimension_numbers = #tpu.dot_dimension_numbers<[1], [0], [0], [1], [0, 0, 1, 1], [], []>} : vector<4x16xf32>, vector<16x64xf32>, vector<4x64xf32> -> vector<4x64xf32>
    %cst_170 = arith.constant dense<0.000000e+00> : vector<28x16xf32>
    %528 = tpu.matmul %3, %524, %cst_170 {dimension_numbers = #tpu.dot_dimension_numbers<[1], [0], [0], [1], [0, 0, 1, 1], [], []>} : vector<28x4xf32>, vector<4x16xf32>, vector<28x16xf32> -> vector<28x16xf32>
    %529 = arith.addf %528, %2 : vector<28x16xf32>
    %530 = math.tanh %529 : vector<28x16xf32>
    %cst_171 = arith.constant dense<0.000000e+00> : vector<28x1xf32>
    %531 = tpu.matmul %530, %5, %cst_171 {dimension_numbers = #tpu.dot_dimension_numbers<[1], [0], [0], [1], [0, 0, 1, 1], [], []>} : vector<28x16xf32>, vector<16x1xf32>, vector<28x1xf32> -> vector<28x1xf32>
    %cst_172 = arith.constant dense<0xFF800000> : vector<1xf32>
    %532 = vector.multi_reduction <maximumf>, %531, %cst_172 [0] : vector<28x1xf32> to vector<1xf32>
    %533 = vector.shape_cast %532 : vector<1xf32> to vector<1x1xf32>
    %534 = vector.broadcast %533 : vector<1x1xf32> to vector<28x1xf32>
    %535 = arith.subf %531, %534 : vector<28x1xf32>
    %536 = math.exp %535 : vector<28x1xf32>
    %537 = vector.broadcast %536 : vector<28x1xf32> to vector<28x17xf32>
    %538 = arith.mulf %537, %0 : vector<28x17xf32>
    %cst_173 = arith.constant dense<0.000000e+00> : vector<4x17xf32>
    %539 = tpu.matmul %4, %538, %cst_173 {dimension_numbers = #tpu.dot_dimension_numbers<[1], [0], [0], [1], [0, 0, 1, 1], [], []>} : vector<4x28xf32>, vector<28x17xf32>, vector<4x17xf32> -> vector<4x17xf32>
    %540 = vector.extract_strided_slice %539 {offsets = [0, 0], sizes = [4, 16], strides = [1, 1]} : vector<4x17xf32> to vector<4x16xf32>
    %541 = vector.extract_strided_slice %539 {offsets = [0, 16], sizes = [4, 1], strides = [1, 1]} : vector<4x17xf32> to vector<4x1xf32>
    %542 = tpu.reciprocal %541 {approx = true} : vector<4x1xf32> -> vector<4x1xf32>
    %543 = vector.broadcast %542 : vector<4x1xf32> to vector<4x16xf32>
    %544 = arith.mulf %540, %543 : vector<4x16xf32>
    %c0_174 = arith.constant 0 : index
    %c0_175 = arith.constant 0 : index
    %545 = vector.load %arg9[%c0_174, %c0_175] : memref<16x64xf32, #tpu.memory_space<vmem>>, vector<16x64xf32>
    %cst_176 = arith.constant dense<0.000000e+00> : vector<4x64xf32>
    %546 = tpu.matmul %544, %545, %cst_176 {dimension_numbers = #tpu.dot_dimension_numbers<[1], [0], [0], [1], [0, 0, 1, 1], [], []>} : vector<4x16xf32>, vector<16x64xf32>, vector<4x64xf32> -> vector<4x64xf32>
    %547 = vector.extract_strided_slice %11 {offsets = [24, 0], sizes = [4, 64], strides = [1, 1]} : vector<28x64xf32> to vector<4x64xf32>
    %548 = arith.addf %546, %547 : vector<4x64xf32>
    %549 = arith.addf %548, %527 : vector<4x64xf32>
    %550 = vector.extract_strided_slice %549 {offsets = [0, 0], sizes = [4, 16], strides = [1, 1]} : vector<4x64xf32> to vector<4x16xf32>
    %551 = arith.negf %550 : vector<4x16xf32>
    %552 = math.exp %551 : vector<4x16xf32>
    %cst_177 = arith.constant 1.000000e+00 : f32
    %553 = vector.broadcast %cst_177 : f32 to vector<4x16xf32>
    %554 = arith.addf %553, %552 : vector<4x16xf32>
    %555 = arith.divf %553, %554 : vector<4x16xf32>
    %556 = vector.extract_strided_slice %549 {offsets = [0, 16], sizes = [4, 16], strides = [1, 1]} : vector<4x64xf32> to vector<4x16xf32>
    %557 = arith.negf %556 : vector<4x16xf32>
    %558 = math.exp %557 : vector<4x16xf32>
    %cst_178 = arith.constant 1.000000e+00 : f32
    %559 = vector.broadcast %cst_178 : f32 to vector<4x16xf32>
    %560 = arith.addf %559, %558 : vector<4x16xf32>
    %561 = arith.divf %559, %560 : vector<4x16xf32>
    %562 = vector.extract_strided_slice %549 {offsets = [0, 32], sizes = [4, 16], strides = [1, 1]} : vector<4x64xf32> to vector<4x16xf32>
    %563 = math.tanh %562 : vector<4x16xf32>
    %564 = vector.extract_strided_slice %549 {offsets = [0, 48], sizes = [4, 16], strides = [1, 1]} : vector<4x64xf32> to vector<4x16xf32>
    %565 = arith.negf %564 : vector<4x16xf32>
    %566 = math.exp %565 : vector<4x16xf32>
    %cst_179 = arith.constant 1.000000e+00 : f32
    %567 = vector.broadcast %cst_179 : f32 to vector<4x16xf32>
    %568 = arith.addf %567, %566 : vector<4x16xf32>
    %569 = arith.divf %567, %568 : vector<4x16xf32>
    %570 = arith.mulf %561, %488 : vector<4x16xf32>
    %571 = arith.mulf %555, %563 : vector<4x16xf32>
    %572 = arith.addf %570, %571 : vector<4x16xf32>
    %573 = math.tanh %572 : vector<4x16xf32>
    %574 = arith.mulf %569, %573 : vector<4x16xf32>
    %c0_180 = arith.constant 0 : index
    %c0_181 = arith.constant 0 : index
    %575 = vector.load %arg13[%c0_180, %c0_181] : memref<16x64xf32, #tpu.memory_space<vmem>>, vector<16x64xf32>
    %cst_182 = arith.constant dense<0.000000e+00> : vector<4x64xf32>
    %576 = tpu.matmul %574, %575, %cst_182 {dimension_numbers = #tpu.dot_dimension_numbers<[1], [0], [0], [1], [0, 0, 1, 1], [], []>} : vector<4x16xf32>, vector<16x64xf32>, vector<4x64xf32> -> vector<4x64xf32>
    %577 = arith.addf %576, %525 : vector<4x64xf32>
    %c0_183 = arith.constant 0 : index
    %c0_184 = arith.constant 0 : index
    %578 = vector.load %arg14[%c0_183, %c0_184] : memref<1x64xf32, #tpu.memory_space<vmem>>, vector<1x64xf32>
    %579 = vector.broadcast %578 : vector<1x64xf32> to vector<4x64xf32>
    %580 = arith.addf %577, %579 : vector<4x64xf32>
    %581 = vector.extract_strided_slice %580 {offsets = [0, 0], sizes = [4, 16], strides = [1, 1]} : vector<4x64xf32> to vector<4x16xf32>
    %582 = arith.negf %581 : vector<4x16xf32>
    %583 = math.exp %582 : vector<4x16xf32>
    %cst_185 = arith.constant 1.000000e+00 : f32
    %584 = vector.broadcast %cst_185 : f32 to vector<4x16xf32>
    %585 = arith.addf %584, %583 : vector<4x16xf32>
    %586 = arith.divf %584, %585 : vector<4x16xf32>
    %587 = vector.extract_strided_slice %580 {offsets = [0, 16], sizes = [4, 16], strides = [1, 1]} : vector<4x64xf32> to vector<4x16xf32>
    %588 = arith.negf %587 : vector<4x16xf32>
    %589 = math.exp %588 : vector<4x16xf32>
    %cst_186 = arith.constant 1.000000e+00 : f32
    %590 = vector.broadcast %cst_186 : f32 to vector<4x16xf32>
    %591 = arith.addf %590, %589 : vector<4x16xf32>
    %592 = arith.divf %590, %591 : vector<4x16xf32>
    %593 = vector.extract_strided_slice %580 {offsets = [0, 32], sizes = [4, 16], strides = [1, 1]} : vector<4x64xf32> to vector<4x16xf32>
    %594 = math.tanh %593 : vector<4x16xf32>
    %595 = vector.extract_strided_slice %580 {offsets = [0, 48], sizes = [4, 16], strides = [1, 1]} : vector<4x64xf32> to vector<4x16xf32>
    %596 = arith.negf %595 : vector<4x16xf32>
    %597 = math.exp %596 : vector<4x16xf32>
    %cst_187 = arith.constant 1.000000e+00 : f32
    %598 = vector.broadcast %cst_187 : f32 to vector<4x16xf32>
    %599 = arith.addf %598, %597 : vector<4x16xf32>
    %600 = arith.divf %598, %599 : vector<4x16xf32>
    %601 = arith.mulf %592, %519 : vector<4x16xf32>
    %602 = arith.mulf %586, %594 : vector<4x16xf32>
    %603 = arith.addf %601, %602 : vector<4x16xf32>
    %604 = math.tanh %603 : vector<4x16xf32>
    %605 = arith.mulf %600, %604 : vector<4x16xf32>
    %606 = tpu.concatenate %101, %185, %269, %353, %437, %521, %605 in 0 : vector<4x16xf32>, vector<4x16xf32>, vector<4x16xf32>, vector<4x16xf32>, vector<4x16xf32>, vector<4x16xf32>, vector<4x16xf32> -> vector<28x16xf32>
    %c0_188 = arith.constant 0 : index
    %c0_189 = arith.constant 0 : index
    %607 = vector.load %arg15[%c0_188, %c0_189] : memref<16x128xf32, #tpu.memory_space<vmem>>, vector<16x128xf32>
    %cst_190 = arith.constant dense<0.000000e+00> : vector<28x128xf32>
    %608 = tpu.matmul %606, %607, %cst_190 {dimension_numbers = #tpu.dot_dimension_numbers<[1], [0], [0], [1], [0, 0, 1, 1], [], []>} : vector<28x16xf32>, vector<16x128xf32>, vector<28x128xf32> -> vector<28x128xf32>
    %c0_191 = arith.constant 0 : index
    %c0_192 = arith.constant 0 : index
    %609 = vector.load %arg16[%c0_191, %c0_192] : memref<1x128xf32, #tpu.memory_space<vmem>>, vector<1x128xf32>
    %610 = vector.broadcast %609 : vector<1x128xf32> to vector<28x128xf32>
    %611 = arith.addf %608, %610 : vector<28x128xf32>
    %c0_193 = arith.constant 0 : index
    %c0_194 = arith.constant 0 : index
    %612 = vector.load %arg17[%c0_193, %c0_194] : memref<28x128xf32, #tpu.memory_space<vmem>>, vector<28x128xf32>
    tpu.vector_store %arg17[%c0_193, %c0_194], %611 {strides = array<i32>} : memref<28x128xf32, #tpu.memory_space<vmem>>, vector<28x128xf32>,
    %613 = tpu.concatenate %574, %605 in 0 : vector<4x16xf32>, vector<4x16xf32> -> vector<8x16xf32>
    %c0_195 = arith.constant 0 : index
    %c0_196 = arith.constant 0 : index
    %614 = vector.load %arg18[%c0_195, %c0_196] : memref<8x16xf32, #tpu.memory_space<vmem>>, vector<8x16xf32>
    tpu.vector_store %arg18[%c0_195, %c0_196], %613 {strides = array<i32>} : memref<8x16xf32, #tpu.memory_space<vmem>>, vector<8x16xf32>,
    %615 = tpu.concatenate %572, %603 in 0 : vector<4x16xf32>, vector<4x16xf32> -> vector<8x16xf32>
    %c0_197 = arith.constant 0 : index
    %c0_198 = arith.constant 0 : index
    %616 = vector.load %arg19[%c0_197, %c0_198] : memref<8x16xf32, #tpu.memory_space<vmem>>, vector<8x16xf32>
    tpu.vector_store %arg19[%c0_197, %c0_198], %615 {strides = array<i32>} : memref<8x16xf32, #tpu.memory_space<vmem>>, vector<8x16xf32>,
    return
  }
}

</mosaic_0001>

<llo_original>
// kernel: tpu_custom_call.1
$region0: #{tpu_custom_call.1}
  #allocation0 [shape = 'u32[]', space=smem, size = 0x4, offset = 0x4, fixed_abs, tag = 'smem constant byte address 0x4 - core index']
  #allocation1 [shape = 'u32[144,128]{1,0:T(1,128)}', space=vmem, size = 0x12000, scoped, tag = 'internal scratch']
  %s0 = inlined_call_operand.vmem [shape: f32[28,8], index: 0, kind: input, shape index: {}]
  %s1 = inlined_call_operand.vmem [shape: f32[28,17], index: 1, kind: input, shape index: {}]
  %s2 = inlined_call_operand.vmem [shape: f32[8,16], index: 2, kind: input, shape index: {}]
  %s3 = inlined_call_operand.vmem [shape: f32[8,16], index: 3, kind: input, shape index: {}]
  %s4 = inlined_call_operand.vmem [shape: f32[17,16], index: 4, kind: input, shape index: {}]
  %s5 = inlined_call_operand.vmem [shape: f32[16,1], index: 5, kind: input, shape index: {}]
  %s6 = inlined_call_operand.vmem [shape: f32[16,80], index: 6, kind: input, shape index: {}]
  %s7 = inlined_call_operand.vmem [shape: f32[28,4], index: 7, kind: input, shape index: {}]
  %s8 = inlined_call_operand.vmem [shape: f32[4,28], index: 8, kind: input, shape index: {}]
  %s9 = inlined_call_operand.vmem [shape: f32[16,64], index: 9, kind: input, shape index: {}]
  %s10 = inlined_call_operand.vmem [shape: f32[8,64], index: 10, kind: input, shape index: {}]
  %s11 = inlined_call_operand.vmem [shape: f32[16,64], index: 11, kind: input, shape index: {}]
  %s12 = inlined_call_operand.vmem [shape: f32[1,64], index: 12, kind: input, shape index: {}]
  %s13 = inlined_call_operand.vmem [shape: f32[16,64], index: 13, kind: input, shape index: {}]
  %s14 = inlined_call_operand.vmem [shape: f32[1,64], index: 14, kind: input, shape index: {}]
  %s15 = inlined_call_operand.vmem [shape: f32[16,128], index: 15, kind: input, shape index: {}]
  %s16 = inlined_call_operand.vmem [shape: f32[1,128], index: 16, kind: input, shape index: {}]
  %s17 = inlined_call_operand.hbm [shape: f32[28,128], index: 17, kind: output, shape index: {0}]
  %s18 = inlined_call_operand.hbm [shape: f32[8,16], index: 18, kind: output, shape index: {1}]
  %s19 = inlined_call_operand.hbm [shape: f32[8,16], index: 19, kind: output, shape index: {2}]
  %20 = xla_tuple %s17, %s18, %s19
  %s21 = sld [smem:[#allocation0]]
  $region94: #{tpu_custom_call.1} parent=0
    _
  %s23 = ssub.s32 1, %s21
  %s24 = scalar_select 0, %s23, %s21
  $region1: #{tpu_custom_call.1} parent=0
    #allocation2 [shape = 'u8[16384]{0}', space=vmem, size = 0x4000, scoped, tag = 'output window, operand 0, single buffered']
    #allocation3 [shape = 's32[1]{0}', space=sflag, size = 0x4, scoped, tag = 'scoped memory for tpu_custom_call.1']
    #allocation4 [shape = 'u8[4096]{0}', space=vmem, size = 0x1000, scoped, tag = 'output window, operand 1, single buffered']
    #allocation5 [shape = 's32[1]{0}', space=sflag, size = 0x4, scoped, tag = 'scoped memory for tpu_custom_call.1']
    #allocation6 [shape = 'u8[4096]{0}', space=vmem, size = 0x1000, scoped, tag = 'output window, operand 2, single buffered']
    %25 = vsyncpa [#allocation3], 0
    %26 = vsyncpa [#allocation5], 0
    // Predicated region
    $region2: #{tpu_custom_call.1} parent=1 // pred_check
      _
    $region3: #{tpu_custom_call.1} parent=1 // pred_check_branch
      %28 = sbr.rel (0) target = $region5
    $region4: #{tpu_custom_call.1} parent=1 // pred_region
      _
    $region5: #{tpu_custom_call.1} parent=1 // pred_fallthru
      _
    // Predicated region
    $region6: #{tpu_custom_call.1} parent=1 // pred_check
      _
    $region7: #{tpu_custom_call.1} parent=1 // pred_check_branch
      %30 = sbr.rel (0) target = $region9
    $region8: #{tpu_custom_call.1} parent=1 // pred_region
      _
    $region9: #{tpu_custom_call.1} parent=1 // pred_fallthru
      _
    // Predicated region
    $region10: #{tpu_custom_call.1} parent=1 // pred_check
      _
    $region11: #{tpu_custom_call.1} parent=1 // pred_check_branch
      %32 = sbr.rel (0) target = $region13
    $region12: #{tpu_custom_call.1} parent=1 // pred_region
      _
    $region13: #{tpu_custom_call.1} parent=1 // pred_fallthru
      _
    // Predicated region
    $region14: #{tpu_custom_call.1} parent=1 // pred_check
      _
    $region15: #{tpu_custom_call.1} parent=1 // pred_check_branch
      %34 = sbr.rel (0) target = $region17
    $region16: #{tpu_custom_call.1} parent=1 // pred_region
      _
    $region17: #{tpu_custom_call.1} parent=1 // pred_fallthru
      _
    // Predicated region
    $region18: #{tpu_custom_call.1} parent=1 // pred_check
      _
    $region19: #{tpu_custom_call.1} parent=1 // pred_check_branch
      %36 = sbr.rel (0) target = $region21
    $region20: #{tpu_custom_call.1} parent=1 // pred_region
      _
    $region21: #{tpu_custom_call.1} parent=1 // pred_fallthru
      _
    // Predicated region
    $region22: #{tpu_custom_call.1} parent=1 // pred_check
      _
    $region23: #{tpu_custom_call.1} parent=1 // pred_check_branch
      %38 = sbr.rel (0) target = $region25
    $region24: #{tpu_custom_call.1} parent=1 // pred_region
      _
    $region25: #{tpu_custom_call.1} parent=1 // pred_fallthru
      _
    // Predicated region
    $region26: #{tpu_custom_call.1} parent=1 // pred_check
      _
    $region27: #{tpu_custom_call.1} parent=1 // pred_check_branch
      %40 = sbr.rel (0) target = $region29
    $region28: #{tpu_custom_call.1} parent=1 // pred_region
      _
    $region29: #{tpu_custom_call.1} parent=1 // pred_fallthru
      _
    // Predicated region
    $region30: #{tpu_custom_call.1} parent=1 // pred_check
      _
    $region31: #{tpu_custom_call.1} parent=1 // pred_check_branch
      %42 = sbr.rel (0) target = $region33
    $region32: #{tpu_custom_call.1} parent=1 // pred_region
      _
    $region33: #{tpu_custom_call.1} parent=1 // pred_fallthru
      _
    // Predicated region
    $region34: #{tpu_custom_call.1} parent=1 // pred_check
      _
    $region35: #{tpu_custom_call.1} parent=1 // pred_check_branch
      %44 = sbr.rel (0) target = $region37
    $region36: #{tpu_custom_call.1} parent=1 // pred_region
      _
    $region37: #{tpu_custom_call.1} parent=1 // pred_fallthru
      _
    // Predicated region
    $region38: #{tpu_custom_call.1} parent=1 // pred_check
      _
    $region39: #{tpu_custom_call.1} parent=1 // pred_check_branch
      %46 = sbr.rel (0) target = $region41
    $region40: #{tpu_custom_call.1} parent=1 // pred_region
      _
    $region41: #{tpu_custom_call.1} parent=1 // pred_fallthru
      _
    // Predicated region
    $region42: #{tpu_custom_call.1} parent=1 // pred_check
      _
    $region43: #{tpu_custom_call.1} parent=1 // pred_check_branch
      %48 = sbr.rel (0) target = $region45
    $region44: #{tpu_custom_call.1} parent=1 // pred_region
      _
    $region45: #{tpu_custom_call.1} parent=1 // pred_fallthru
      _
    // Predicated region
    $region46: #{tpu_custom_call.1} parent=1 // pred_check
      _
    $region47: #{tpu_custom_call.1} parent=1 // pred_check_branch
      %50 = sbr.rel (0) target = $region49
    $region48: #{tpu_custom_call.1} parent=1 // pred_region
      _
    $region49: #{tpu_custom_call.1} parent=1 // pred_fallthru
      _
    // Predicated region
    $region50: #{tpu_custom_call.1} parent=1 // pred_check
      _
    $region51: #{tpu_custom_call.1} parent=1 // pred_check_branch
      %52 = sbr.rel (0) target = $region53
    $region52: #{tpu_custom_call.1} parent=1 // pred_region
      _
    $region53: #{tpu_custom_call.1} parent=1 // pred_fallthru
      _
    // Predicated region
    $region54: #{tpu_custom_call.1} parent=1 // pred_check
      _
    $region55: #{tpu_custom_call.1} parent=1 // pred_check_branch
      %54 = sbr.rel (0) target = $region57
    $region56: #{tpu_custom_call.1} parent=1 // pred_region
      _
    $region57: #{tpu_custom_call.1} parent=1 // pred_fallthru
      _
    // Predicated region
    $region58: #{tpu_custom_call.1} parent=1 // pred_check
      _
    $region59: #{tpu_custom_call.1} parent=1 // pred_check_branch
      %56 = sbr.rel (0) target = $region61
    $region60: #{tpu_custom_call.1} parent=1 // pred_region
      _
    $region61: #{tpu_custom_call.1} parent=1 // pred_fallthru
      _
    // Predicated region
    $region62: #{tpu_custom_call.1} parent=1 // pred_check
      _
    $region63: #{tpu_custom_call.1} parent=1 // pred_check_branch
      %58 = sbr.rel (0) target = $region65
    $region64: #{tpu_custom_call.1} parent=1 // pred_region
      _
    $region65: #{tpu_custom_call.1} parent=1 // pred_fallthru
      _
    // Predicated region
    $region66: #{tpu_custom_call.1} parent=1 // pred_check
      _
    $region67: #{tpu_custom_call.1} parent=1 // pred_check_branch
      %60 = sbr.rel (0) target = $region69
    $region68: #{tpu_custom_call.1} parent=1 // pred_region
      _
    $region69: #{tpu_custom_call.1} parent=1 // pred_fallthru
      _
    %v61 = vld [vmem:[%s1] sm:$0xff]
    %v62 = vld [vmem:[%s1 + $0x8] sm:$0xff]
    %v63 = vld [vmem:[%s1 + $0x10] sm:$0xff]
    %v64 = vld [vmem:[%s1 + $0x18] sm:$0xf]
    %v65 = vld [vmem:[%s4] sm:$0xff]
    %v66 = vld [vmem:[%s4 + $0x8] sm:$0xff]
    %v67 = vld [vmem:[%s4 + $0x10] sm:$0x1]
    %vm68 = vcmask 138240
    %v70 = vsel %vm68, %v61, 0
    %v73 = vsel %vm68, %v62, 0
    %v76 = vsel %vm68, %v63, 0
    %v79 = vsel %vm68, %v64, 0
    %vm81 = vcmask 1040384
    %v83 = vsel %vm81, %v67, 0
    %85 = vmatprep.subr.mxu0 0.0
    %86 = vmatpush1.msra.mxu0 %v65
    %87 = vmatprep.subr.mxu0 0.0
    %88 = vmatpush1.msra.mxu0 %v66
    %89 = vmatprep.subr.mxu0 0.0
    %90 = vmatpush1.msra.mxu0 %v83
    %91 = vmatprep.subr.mxu0 0.0
    %92 = vmatpush1.msra.mxu0 0.0
    %93 = vmatprep.subr.mxu0 0.0
    %94 = vmatpush1.msra.mxu0 0.0
    %95 = vmatprep.subr.mxu0 0.0
    %96 = vmatpush1.msra.mxu0 0.0
    %97 = vmatprep.subr.mxu0 0.0
    %98 = vmatpush1.msra.mxu0 0.0
    %99 = vmatprep.subr.mxu0 0.0
    %100 = vmatpush1.msra.mxu0 0.0
    %101 = vmatprep.subr.mxu0 0.0
    %102 = vmatpush1.msra.mxu0 0.0
    %103 = vmatprep.subr.mxu0 0.0
    %104 = vmatpush1.msra.mxu0 0.0
    %105 = vmatprep.subr.mxu0 0.0
    %106 = vmatpush1.msra.mxu0 0.0
    %107 = vmatprep.subr.mxu0 0.0
    %108 = vmatpush1.msra.mxu0 0.0
    %109 = vmatprep.subr.mxu0 0.0
    %110 = vmatpush1.msra.mxu0 0.0
    %111 = vmatprep.subr.mxu0 0.0
    %112 = vmatpush1.msra.mxu0 0.0
    %113 = vmatprep.subr.mxu0 0.0
    %114 = vmatpush1.msra.mxu0 0.0
    %115 = vmatprep.subr.mxu0 0.0
    %116 = vmatpush1.msra.mxu0 0.0
    %117 = vmatprep.subr.mxu0 0.0
    %118 = vmatpush1.msra.mxu0 0.0
    %119 = vmatprep.subr.mxu0 0.0
    %120 = vmatpush1.msra.mxu0 0.0
    %121 = vmatprep.subr.mxu0 0.0
    %122 = vmatpush1.msra.mxu0 0.0
    %123 = vmatprep.subr.mxu0 0.0
    %124 = vmatpush1.msra.mxu0 0.0
    %125 = vmatprep.subr.mxu0 0.0
    %126 = vmatpush1.msra.mxu0 0.0
    %127 = vmatprep.subr.mxu0 0.0
    %128 = vmatpush1.msra.mxu0 0.0
    %129 = vmatprep.subr.mxu0 0.0
    %130 = vmatpush1.msra.mxu0 0.0
    %131 = vmatprep.subr.mxu0 0.0
    %132 = vmatpush1.msra.mxu0 0.0
    %133 = vmatprep.subr.mxu0 0.0
    %134 = vmatpush1.msra.mxu0 0.0
    %135 = vmatprep.subr.mxu0 0.0
    %136 = vmatpush1.msra.mxu0 0.0
    %137 = vmatprep.subr.mxu0 0.0
    %138 = vmatpush1.msra.mxu0 0.0
    %139 = vmatprep.subr.mxu0 0.0
    %140 = vmatpush1.msra.mxu0 0.0
    %141 = vmatprep.subr.mxu0 0.0
    %142 = vmatpush1.msra.mxu0 0.0
    %143 = vmatprep.subr.mxu0 0.0
    %144 = vmatpush1.msra.mxu0 0.0
    %145 = vmatprep.subr.mxu0 0.0
    %146 = vmatpush1.msra.mxu0 0.0
    %147 = vmatprep.subr.mxu0 0.0
    %148 = vmatpush1.msra.mxu0 0.0
    %149 = vmatprep.mubr.f32.mxu0 0.0
    %150 = vmatmul.mubr.f32.gmra.mrb[0].mxu0 %v70
    %v151 = vpop.f32.mrb[0].mxu0
    %v152 = vadd.f32 0.0, %v151
    %v153 = vpop.f32.mrb[0].mxu0
    %154 = vmatprep.mubr.f32.mxu0 0.0
    %155 = vmatmul.mubr.f32.gmra.mrb[0].mxu0 %v73
    %v156 = vpop.f32.mrb[0].mxu0
    %v157 = vadd.f32 0.0, %v156
    %v158 = vpop.f32.mrb[0].mxu0
    %159 = vmatprep.mubr.f32.mxu0 0.0
    %160 = vmatmul.mubr.f32.gmra.mrb[0].mxu0 %v76
    %v161 = vpop.f32.mrb[0].mxu0
    %v162 = vadd.f32 0.0, %v161
    %v163 = vpop.f32.mrb[0].mxu0
    %164 = vmatprep.mubr.f32.mxu0 0.0
    %165 = vmatmul.mubr.f32.gmra.mrb[0].mxu0 %v79
    %v166 = vpop.f32.mrb[0].mxu0
    %v167 = vadd.f32 0.0, %v166
    %v168 = vpop.f32.mrb[0].mxu0
    %169 = vdwg.mxu0
    %v170 = vld [vmem:[%s7] sm:$0xff]
    %v171 = vld [vmem:[%s7 + $0x8] sm:$0xff]
    %v172 = vld [vmem:[%s7 + $0x10] sm:$0xff]
    %v173 = vld [vmem:[%s7 + $0x18] sm:$0xf]
    %v174 = vld [vmem:[%s8] sm:$0xf]
    %v175 = vld [vmem:[%s5] sm:$0xff]
    %v176 = vld [vmem:[%s5 + $0x8] sm:$0xff]
    %v177 = vld [vmem:[%s0] sm:$0xff]
    %v178 = vld [vmem:[%s0 + $0x8] sm:$0xff]
    %v179 = vld [vmem:[%s0 + $0x10] sm:$0xff]
    %v180 = vld [vmem:[%s0 + $0x18] sm:$0xf]
    %v181 = vld [vmem:[%s10] sm:$0xff]
    %v182 = vld [vmem:[%s12] sm:$0x1]
    %v184 = vlaneseq
    %v185 = vshrl.u32 %v184, 7
    %v186 = vsub.s32 0, %v185
    %v187 = vrot.slane %v182, %v186
    %vm189 = vcmask 64512
    %v191 = vsel %vm189, %v177, 0
    %v194 = vsel %vm189, %v178, 0
    %v197 = vsel %vm189, %v179, 0
    %v200 = vsel %vm189, %v180, 0
    %202 = vmatprep.subr.mxu0 0.0
    %203 = vmatpush1.msra.mxu0 %v181
    %204 = vmatprep.subr.mxu0 0.0
    %205 = vmatpush1.msra.mxu0 0.0
    %206 = vmatprep.subr.mxu0 0.0
    %207 = vmatpush1.msra.mxu0 0.0
    %208 = vmatprep.subr.mxu0 0.0
    %209 = vmatpush1.msra.mxu0 0.0
    %210 = vmatprep.subr.mxu0 0.0
    %211 = vmatpush1.msra.mxu0 0.0
    %212 = vmatprep.subr.mxu0 0.0
    %213 = vmatpush1.msra.mxu0 0.0
    %214 = vmatprep.subr.mxu0 0.0
    %215 = vmatpush1.msra.mxu0 0.0
    %216 = vmatprep.subr.mxu0 0.0
    %217 = vmatpush1.msra.mxu0 0.0
    %218 = vmatprep.subr.mxu0 0.0
    %219 = vmatpush1.msra.mxu0 0.0
    %220 = vmatprep.subr.mxu0 0.0
    %221 = vmatpush1.msra.mxu0 0.0
    %222 = vmatprep.subr.mxu0 0.0
    %223 = vmatpush1.msra.mxu0 0.0
    %224 = vmatprep.subr.mxu0 0.0
    %225 = vmatpush1.msra.mxu0 0.0
    %226 = vmatprep.subr.mxu0 0.0
    %227 = vmatpush1.msra.mxu0 0.0
    %228 = vmatprep.subr.mxu0 0.0
    %229 = vmatpush1.msra.mxu0 0.0
    %230 = vmatprep.subr.mxu0 0.0
    %231 = vmatpush1.msra.mxu0 0.0
    %232 = vmatprep.subr.mxu0 0.0
    %233 = vmatpush1.msra.mxu0 0.0
    %234 = vmatprep.subr.mxu0 0.0
    %235 = vmatpush1.msra.mxu0 0.0
    %236 = vmatprep.subr.mxu0 0.0
    %237 = vmatpush1.msra.mxu0 0.0
    %238 = vmatprep.subr.mxu0 0.0
    %239 = vmatpush1.msra.mxu0 0.0
    %240 = vmatprep.subr.mxu0 0.0
    %241 = vmatpush1.msra.mxu0 0.0
    %242 = vmatprep.subr.mxu0 0.0
    %243 = vmatpush1.msra.mxu0 0.0
    %244 = vmatprep.subr.mxu0 0.0
    %245 = vmatpush1.msra.mxu0 0.0
    %246 = vmatprep.subr.mxu0 0.0
    %247 = vmatpush1.msra.mxu0 0.0
    %248 = vmatprep.subr.mxu0 0.0
    %249 = vmatpush1.msra.mxu0 0.0
    %250 = vmatprep.subr.mxu0 0.0
    %251 = vmatpush1.msra.mxu0 0.0
    %252 = vmatprep.subr.mxu0 0.0
    %253 = vmatpush1.msra.mxu0 0.0
    %254 = vmatprep.subr.mxu0 0.0
    %255 = vmatpush1.msra.mxu0 0.0
    %256 = vmatprep.subr.mxu0 0.0
    %257 = vmatpush1.msra.mxu0 0.0
    %258 = vmatprep.subr.mxu0 0.0
    %259 = vmatpush1.msra.mxu0 0.0
    %260 = vmatprep.subr.mxu0 0.0
    %261 = vmatpush1.msra.mxu0 0.0
    %262 = vmatprep.subr.mxu0 0.0
    %263 = vmatpush1.msra.mxu0 0.0
    %264 = vmatprep.subr.mxu0 0.0
    %265 = vmatpush1.msra.mxu0 0.0
    %266 = vmatprep.mubr.f32.mxu0 0.0
    %267 = vmatmul.mubr.f32.gmra.mrb[0].mxu0 %v191
    %v268 = vpop.f32.mrb[0].mxu0
    %v269 = vadd.f32 %v187, %v268
    %v270 = vpop.f32.mrb[0].mxu0
    %271 = vmatprep.mubr.f32.mxu0 0.0
    %272 = vmatmul.mubr.f32.gmra.mrb[0].mxu0 %v194
    %v273 = vpop.f32.mrb[0].mxu0
    %v274 = vadd.f32 %v187, %v273
    %v275 = vpop.f32.mrb[0].mxu0
    %276 = vmatprep.mubr.f32.mxu0 0.0
    %277 = vmatmul.mubr.f32.gmra.mrb[0].mxu0 %v197
    %v278 = vpop.f32.mrb[0].mxu0
    %v279 = vadd.f32 %v187, %v278
    %v280 = vpop.f32.mrb[0].mxu0
    %281 = vmatprep.mubr.f32.mxu0 0.0
    %282 = vmatmul.mubr.f32.gmra.mrb[0].mxu0 %v200
    %v283 = vpop.f32.mrb[0].mxu0
    %v284 = vadd.f32 %v187, %v283
    %v285 = vpop.f32.mrb[0].mxu0
    %286 = vdwg.mxu0
    %v287 = vld [vmem:[%s2] sm:$0xff]
    %v288 = vld [vmem:[%s3] sm:$0xff]
    %v289 = vld [vmem:[%s6] sm:$0xff]
    %v290 = vld [vmem:[%s6 + $0x8] sm:$0xff]
    %v292 = vrot.slane %v287, 4
    %vm293 = vcmask 130048
    %v294 = vsel %vm293, %v292, 0
    %296 = vmatprep.subr.mxu0 0.0
    %297 = vmatpush1.msra.mxu0 %v289
    %298 = vmatprep.subr.mxu0 0.0
    %299 = vmatpush1.msra.mxu0 %v290
    %300 = vmatprep.subr.mxu0 0.0
    %301 = vmatpush1.msra.mxu0 0.0
    %302 = vmatprep.subr.mxu0 0.0
    %303 = vmatpush1.msra.mxu0 0.0
    %304 = vmatprep.subr.mxu0 0.0
    %305 = vmatpush1.msra.mxu0 0.0
    %306 = vmatprep.subr.mxu0 0.0
    %307 = vmatpush1.msra.mxu0 0.0
    %308 = vmatprep.subr.mxu0 0.0
    %309 = vmatpush1.msra.mxu0 0.0
    %310 = vmatprep.subr.mxu0 0.0
    %311 = vmatpush1.msra.mxu0 0.0
    %312 = vmatprep.subr.mxu0 0.0
    %313 = vmatpush1.msra.mxu0 0.0
    %314 = vmatprep.subr.mxu0 0.0
    %315 = vmatpush1.msra.mxu0 0.0
    %316 = vmatprep.subr.mxu0 0.0
    %317 = vmatpush1.msra.mxu0 0.0
    %318 = vmatprep.subr.mxu0 0.0
    %319 = vmatpush1.msra.mxu0 0.0
    %320 = vmatprep.subr.mxu0 0.0
    %321 = vmatpush1.msra.mxu0 0.0
    %322 = vmatprep.subr.mxu0 0.0
    %323 = vmatpush1.msra.mxu0 0.0
    %324 = vmatprep.subr.mxu0 0.0
    %325 = vmatpush1.msra.mxu0 0.0
    %326 = vmatprep.subr.mxu0 0.0
    %327 = vmatpush1.msra.mxu0 0.0
    %328 = vmatprep.subr.mxu0 0.0
    %329 = vmatpush1.msra.mxu0 0.0
    %330 = vmatprep.subr.mxu0 0.0
    %331 = vmatpush1.msra.mxu0 0.0
    %332 = vmatprep.subr.mxu0 0.0
    %333 = vmatpush1.msra.mxu0 0.0
    %334 = vmatprep.subr.mxu0 0.0
    %335 = vmatpush1.msra.mxu0 0.0
    %336 = vmatprep.subr.mxu0 0.0
    %337 = vmatpush1.msra.mxu0 0.0
    %338 = vmatprep.subr.mxu0 0.0
    %339 = vmatpush1.msra.mxu0 0.0
    %340 = vmatprep.subr.mxu0 0.0
    %341 = vmatpush1.msra.mxu0 0.0
    %342 = vmatprep.subr.mxu0 0.0
    %343 = vmatpush1.msra.mxu0 0.0
    %344 = vmatprep.subr.mxu0 0.0
    %345 = vmatpush1.msra.mxu0 0.0
    %346 = vmatprep.subr.mxu0 0.0
    %347 = vmatpush1.msra.mxu0 0.0
    %348 = vmatprep.subr.mxu0 0.0
    %349 = vmatpush1.msra.mxu0 0.0
    %350 = vmatprep.subr.mxu0 0.0
    %351 = vmatpush1.msra.mxu0 0.0
    %352 = vmatprep.subr.mxu0 0.0
    %353 = vmatpush1.msra.mxu0 0.0
    %354 = vmatprep.subr.mxu0 0.0
    %355 = vmatpush1.msra.mxu0 0.0
    %356 = vmatprep.subr.mxu0 0.0
    %357 = vmatpush1.msra.mxu0 0.0
    %358 = vmatprep.subr.mxu0 0.0
    %359 = vmatpush1.msra.mxu0 0.0
    %360 = vmatprep.mubr.f32.mxu0 0.0
    %361 = vmatmul.mubr.f32.gmra.mrb[0].mxu0 %v294
    %v362 = vpop.f32.mrb[0].mxu0
    %v363 = vadd.f32 0.0, %v362
    %v364 = vpop.f32.mrb[0].mxu0
    %365 = vdwg.mxu0
    %v366 = vld [vmem:[%s11] sm:$0xff]
    %v367 = vld [vmem:[%s11 + $0x8] sm:$0xff]
    %v368 = vsel %vm293, %v287, 0
    %370 = vmatprep.subr.mxu0 0.0
    %371 = vmatpush1.msra.mxu0 %v366
    %372 = vmatprep.subr.mxu0 0.0
    %373 = vmatpush1.msra.mxu0 %v367
    %374 = vmatprep.subr.mxu0 0.0
    %375 = vmatpush1.msra.mxu0 0.0
    %376 = vmatprep.subr.mxu0 0.0
    %377 = vmatpush1.msra.mxu0 0.0
    %378 = vmatprep.subr.mxu0 0.0
    %379 = vmatpush1.msra.mxu0 0.0
    %380 = vmatprep.subr.mxu0 0.0
    %381 = vmatpush1.msra.mxu0 0.0
    %382 = vmatprep.subr.mxu0 0.0
    %383 = vmatpush1.msra.mxu0 0.0
    %384 = vmatprep.subr.mxu0 0.0
    %385 = vmatpush1.msra.mxu0 0.0
    %386 = vmatprep.subr.mxu0 0.0
    %387 = vmatpush1.msra.mxu0 0.0
    %388 = vmatprep.subr.mxu0 0.0
    %389 = vmatpush1.msra.mxu0 0.0
    %390 = vmatprep.subr.mxu0 0.0
    %391 = vmatpush1.msra.mxu0 0.0
    %392 = vmatprep.subr.mxu0 0.0
    %393 = vmatpush1.msra.mxu0 0.0
    %394 = vmatprep.subr.mxu0 0.0
    %395 = vmatpush1.msra.mxu0 0.0
    %396 = vmatprep.subr.mxu0 0.0
    %397 = vmatpush1.msra.mxu0 0.0
    %398 = vmatprep.subr.mxu0 0.0
    %399 = vmatpush1.msra.mxu0 0.0
    %400 = vmatprep.subr.mxu0 0.0
    %401 = vmatpush1.msra.mxu0 0.0
    %402 = vmatprep.subr.mxu0 0.0
    %403 = vmatpush1.msra.mxu0 0.0
    %404 = vmatprep.subr.mxu0 0.0
    %405 = vmatpush1.msra.mxu0 0.0
    %406 = vmatprep.subr.mxu0 0.0
    %407 = vmatpush1.msra.mxu0 0.0
    %408 = vmatprep.subr.mxu0 0.0
    %409 = vmatpush1.msra.mxu0 0.0
    %410 = vmatprep.subr.mxu0 0.0
    %411 = vmatpush1.msra.mxu0 0.0
    %412 = vmatprep.subr.mxu0 0.0
    %413 = vmatpush1.msra.mxu0 0.0
    %414 = vmatprep.subr.mxu0 0.0
    %415 = vmatpush1.msra.mxu0 0.0
    %416 = vmatprep.subr.mxu0 0.0
    %417 = vmatpush1.msra.mxu0 0.0
    %418 = vmatprep.subr.mxu0 0.0
    %419 = vmatpush1.msra.mxu0 0.0
    %420 = vmatprep.subr.mxu0 0.0
    %421 = vmatpush1.msra.mxu0 0.0
    %422 = vmatprep.subr.mxu0 0.0
    %423 = vmatpush1.msra.mxu0 0.0
    %424 = vmatprep.subr.mxu0 0.0
    %425 = vmatpush1.msra.mxu0 0.0
    %426 = vmatprep.subr.mxu0 0.0
    %427 = vmatpush1.msra.mxu0 0.0
    %428 = vmatprep.subr.mxu0 0.0
    %429 = vmatpush1.msra.mxu0 0.0
    %430 = vmatprep.subr.mxu0 0.0
    %431 = vmatpush1.msra.mxu0 0.0
    %432 = vmatprep.subr.mxu0 0.0
    %433 = vmatpush1.msra.mxu0 0.0
    %434 = vmatprep.mubr.f32.mxu0 0.0
    %435 = vmatmul.mubr.f32.gmra.mrb[0].mxu0 %v368
    %v436 = vpop.f32.mrb[0].mxu0
    %v437 = vadd.f32 0.0, %v436
    %v438 = vpop.f32.mrb[0].mxu0
    %439 = vdwg.mxu0
    %vm440 = vcmask 31744
    %v442 = vsel %vm440, %v170, 0
    %v445 = vsel %vm440, %v171, 0
    %v448 = vsel %vm440, %v172, 0
    %v451 = vsel %vm440, %v173, 0
    %vm453 = vcmask 1043456
    %v455 = vsel %vm453, %v363, 0
    %457 = vmatprep.subr.mxu0 0.0
    %458 = vmatpush1.msra.mxu0 %v455
    %459 = vmatprep.subr.mxu0 0.0
    %460 = vmatpush1.msra.mxu0 0.0
    %461 = vmatprep.subr.mxu0 0.0
    %462 = vmatpush1.msra.mxu0 0.0
    %463 = vmatprep.subr.mxu0 0.0
    %464 = vmatpush1.msra.mxu0 0.0
    %465 = vmatprep.subr.mxu0 0.0
    %466 = vmatpush1.msra.mxu0 0.0
    %467 = vmatprep.subr.mxu0 0.0
    %468 = vmatpush1.msra.mxu0 0.0
    %469 = vmatprep.subr.mxu0 0.0
    %470 = vmatpush1.msra.mxu0 0.0
    %471 = vmatprep.subr.mxu0 0.0
    %472 = vmatpush1.msra.mxu0 0.0
    %473 = vmatprep.subr.mxu0 0.0
    %474 = vmatpush1.msra.mxu0 0.0
    %475 = vmatprep.subr.mxu0 0.0
    %476 = vmatpush1.msra.mxu0 0.0
    %477 = vmatprep.subr.mxu0 0.0
    %478 = vmatpush1.msra.mxu0 0.0
    %479 = vmatprep.subr.mxu0 0.0
    %480 = vmatpush1.msra.mxu0 0.0
    %481 = vmatprep.subr.mxu0 0.0
    %482 = vmatpush1.msra.mxu0 0.0
    %483 = vmatprep.subr.mxu0 0.0
    %484 = vmatpush1.msra.mxu0 0.0
    %485 = vmatprep.subr.mxu0 0.0
    %486 = vmatpush1.msra.mxu0 0.0
    %487 = vmatprep.subr.mxu0 0.0
    %488 = vmatpush1.msra.mxu0 0.0
    %489 = vmatprep.subr.mxu0 0.0
    %490 = vmatpush1.msra.mxu0 0.0
    %491 = vmatprep.subr.mxu0 0.0
    %492 = vmatpush1.msra.mxu0 0.0
    %493 = vmatprep.subr.mxu0 0.0
    %494 = vmatpush1.msra.mxu0 0.0
    %495 = vmatprep.subr.mxu0 0.0
    %496 = vmatpush1.msra.mxu0 0.0
    %497 = vmatprep.subr.mxu0 0.0
    %498 = vmatpush1.msra.mxu0 0.0
    %499 = vmatprep.subr.mxu0 0.0
    %500 = vmatpush1.msra.mxu0 0.0
    %501 = vmatprep.subr.mxu0 0.0
    %502 = vmatpush1.msra.mxu0 0.0
    %503 = vmatprep.subr.mxu0 0.0
    %504 = vmatpush1.msra.mxu0 0.0
    %505 = vmatprep.subr.mxu0 0.0
    %506 = vmatpush1.msra.mxu0 0.0
    %507 = vmatprep.subr.mxu0 0.0
    %508 = vmatpush1.msra.mxu0 0.0
    %509 = vmatprep.subr.mxu0 0.0
    %510 = vmatpush1.msra.mxu0 0.0
    %511 = vmatprep.subr.mxu0 0.0
    %512 = vmatpush1.msra.mxu0 0.0
    %513 = vmatprep.subr.mxu0 0.0
    %514 = vmatpush1.msra.mxu0 0.0
    %515 = vmatprep.subr.mxu0 0.0
    %516 = vmatpush1.msra.mxu0 0.0
    %517 = vmatprep.subr.mxu0 0.0
    %518 = vmatpush1.msra.mxu0 0.0
    %519 = vmatprep.subr.mxu0 0.0
    %520 = vmatpush1.msra.mxu0 0.0
    %521 = vmatprep.mubr.f32.mxu0 0.0
    %522 = vmatmul.mubr.f32.gmra.mrb[0].mxu0 %v442
    %v523 = vpop.f32.mrb[0].mxu0
    %v524 = vadd.f32 %v152, %v523
    %v525 = vpop.f32.mrb[0].mxu0
    %526 = vmatprep.mubr.f32.mxu0 0.0
    %527 = vmatmul.mubr.f32.gmra.mrb[0].mxu0 %v445
    %v528 = vpop.f32.mrb[0].mxu0
    %v529 = vadd.f32 %v157, %v528
    %v530 = vpop.f32.mrb[0].mxu0
    %531 = vmatprep.mubr.f32.mxu0 0.0
    %532 = vmatmul.mubr.f32.gmra.mrb[0].mxu0 %v448
    %v533 = vpop.f32.mrb[0].mxu0
    %v534 = vadd.f32 %v162, %v533
    %v535 = vpop.f32.mrb[0].mxu0
    %536 = vmatprep.mubr.f32.mxu0 0.0
    %537 = vmatmul.mubr.f32.gmra.mrb[0].mxu0 %v451
    %v538 = vpop.f32.mrb[0].mxu0
    %v539 = vadd.f32 %v167, %v538
    %v540 = vpop.f32.mrb[0].mxu0
    %541 = vdwg.mxu0
    %v542 = vtanh.pop %v524
    %v543 = vtanh.pop %v529
    %v544 = vtanh.pop %v534
    %v545 = vtanh.pop %v539
    %v547 = vsel %vm293, %v542, 0
    %v550 = vsel %vm293, %v543, 0
    %v553 = vsel %vm293, %v544, 0
    %v556 = vsel %vm293, %v545, 0
    %558 = vmatprep.subr.mxu0 0.0
    %559 = vmatpush1.msra.mxu0 %v175
    %560 = vmatprep.subr.mxu0 0.0
    %561 = vmatpush1.msra.mxu0 %v176
    %562 = vmatprep.subr.mxu0 0.0
    %563 = vmatpush1.msra.mxu0 0.0
    %564 = vmatprep.subr.mxu0 0.0
    %565 = vmatpush1.msra.mxu0 0.0
    %566 = vmatprep.subr.mxu0 0.0
    %567 = vmatpush1.msra.mxu0 0.0
    %568 = vmatprep.subr.mxu0 0.0
    %569 = vmatpush1.msra.mxu0 0.0
    %570 = vmatprep.subr.mxu0 0.0
    %571 = vmatpush1.msra.mxu0 0.0
    %572 = vmatprep.subr.mxu0 0.0
    %573 = vmatpush1.msra.mxu0 0.0
    %574 = vmatprep.subr.mxu0 0.0
    %575 = vmatpush1.msra.mxu0 0.0
    %576 = vmatprep.subr.mxu0 0.0
    %577 = vmatpush1.msra.mxu0 0.0
    %578 = vmatprep.subr.mxu0 0.0
    %579 = vmatpush1.msra.mxu0 0.0
    %580 = vmatprep.subr.mxu0 0.0
    %581 = vmatpush1.msra.mxu0 0.0
    %582 = vmatprep.subr.mxu0 0.0
    %583 = vmatpush1.msra.mxu0 0.0
    %584 = vmatprep.subr.mxu0 0.0
    %585 = vmatpush1.msra.mxu0 0.0
    %586 = vmatprep.subr.mxu0 0.0
    %587 = vmatpush1.msra.mxu0 0.0
    %588 = vmatprep.subr.mxu0 0.0
    %589 = vmatpush1.msra.mxu0 0.0
    %590 = vmatprep.subr.mxu0 0.0
    %591 = vmatpush1.msra.mxu0 0.0
    %592 = vmatprep.subr.mxu0 0.0
    %593 = vmatpush1.msra.mxu0 0.0
    %594 = vmatprep.subr.mxu0 0.0
    %595 = vmatpush1.msra.mxu0 0.0
    %596 = vmatprep.subr.mxu0 0.0
    %597 = vmatpush1.msra.mxu0 0.0
    %598 = vmatprep.subr.mxu0 0.0
    %599 = vmatpush1.msra.mxu0 0.0
    %600 = vmatprep.subr.mxu0 0.0
    %601 = vmatpush1.msra.mxu0 0.0
    %602 = vmatprep.subr.mxu0 0.0
    %603 = vmatpush1.msra.mxu0 0.0
    %604 = vmatprep.subr.mxu0 0.0
    %605 = vmatpush1.msra.mxu0 0.0
    %606 = vmatprep.subr.mxu0 0.0
    %607 = vmatpush1.msra.mxu0 0.0
    %608 = vmatprep.subr.mxu0 0.0
    %609 = vmatpush1.msra.mxu0 0.0
    %610 = vmatprep.subr.mxu0 0.0
    %611 = vmatpush1.msra.mxu0 0.0
    %612 = vmatprep.subr.mxu0 0.0
    %613 = vmatpush1.msra.mxu0 0.0
    %614 = vmatprep.subr.mxu0 0.0
    %615 = vmatpush1.msra.mxu0 0.0
    %616 = vmatprep.subr.mxu0 0.0
    %617 = vmatpush1.msra.mxu0 0.0
    %618 = vmatprep.subr.mxu0 0.0
    %619 = vmatpush1.msra.mxu0 0.0
    %620 = vmatprep.subr.mxu0 0.0
    %621 = vmatpush1.msra.mxu0 0.0
    %622 = vmatprep.mubr.f32.mxu0 0.0
    %623 = vmatmul.mubr.f32.gmra.mrb[0].mxu0 %v547
    %v624 = vpop.f32.mrb[0].mxu0
    %v625 = vadd.f32 0.0, %v624
    %v626 = vpop.f32.mrb[0].mxu0
    %627 = vmatprep.mubr.f32.mxu0 0.0
    %628 = vmatmul.mubr.f32.gmra.mrb[0].mxu0 %v550
    %v629 = vpop.f32.mrb[0].mxu0
    %v630 = vadd.f32 0.0, %v629
    %v631 = vpop.f32.mrb[0].mxu0
    %632 = vmatprep.mubr.f32.mxu0 0.0
    %633 = vmatmul.mubr.f32.gmra.mrb[0].mxu0 %v553
    %v634 = vpop.f32.mrb[0].mxu0
    %v635 = vadd.f32 0.0, %v634
    %v636 = vpop.f32.mrb[0].mxu0
    %637 = vmatprep.mubr.f32.mxu0 0.0
    %638 = vmatmul.mubr.f32.gmra.mrb[0].mxu0 %v556
    %v639 = vpop.f32.mrb[0].mxu0
    %v640 = vadd.f32 0.0, %v639
    %v641 = vpop.f32.mrb[0].mxu0
    %642 = vdwg.mxu0
    %vm643 = vcmask 7168
    %v644 = vsel %vm643, %v625, -inf
    %v645 = vsel %vm643, %v630, -inf
    %v646 = vsel %vm643, %v635, -inf
    %vm647 = vcmask 3072
    %v648 = vsel %vm647, %v640, -inf
    %v649 = vmax.f32 %v644, %v645
    %v650 = vmax.f32 %v646, %v648
    %v651 = vmax.f32 %v649, %v650
    %v652 = vrot.slane %v651, 4
    %v653 = vmax.f32 %v651, %v652
    %v654 = vrot.slane %v653, 2
    %v655 = vmax.f32 %v653, %v654
    %v656 = vrot.slane %v655, 1
    %v657 = vmax.f32 %v655, %v656
    %v658 = vsub.f32 %v625, %v657
    %v659 = vsub.f32 %v630, %v657
    %v660 = vsub.f32 %v635, %v657
    %v661 = vsub.f32 %v640, %v657
    %v662 = vmul.f32 %v658, 1.442695
    %v663 = vpow.pop %v662
    %v664 = vmul.f32 %v659, 1.442695
    %v665 = vpow.pop %v664
    %v666 = vmul.f32 %v660, 1.442695
    %v667 = vpow.pop %v666
    %v668 = vmul.f32 %v661, 1.442695
    %v669 = vpow.pop %v668
    %671 = vset.pattern.permute.xlu0 0
    %672 = vperm.xlu0 %671, %v663
    %v673 = vpop.permute.xlu0 %672
    %676 = vset.pattern.permute.xlu0 0
    %677 = vperm.xlu0 %676, %v665
    %v678 = vpop.permute.xlu0 %677
    %681 = vset.pattern.permute.xlu0 0
    %682 = vperm.xlu0 %681, %v667
    %v683 = vpop.permute.xlu0 %682
    %686 = vset.pattern.permute.xlu0 0
    %687 = vperm.xlu0 %686, %v669
    %v688 = vpop.permute.xlu0 %687
    %v690 = vmul.f32 %v673, %v61
    %v691 = vmul.f32 %v678, %v62
    %v692 = vmul.f32 %v683, %v63
    %v693 = vmul.f32 %v688, %v64
    %vm694 = vcmask 228352
    %v696 = vsel %vm694, %v174, 0
    %v699 = vsel %vm453, %v693, 0
    %701 = vmatprep.subr.mxu0 0.0
    %702 = vmatpush1.msra.mxu0 %v690
    %703 = vmatprep.subr.mxu0 0.0
    %704 = vmatpush1.msra.mxu0 %v691
    %705 = vmatprep.subr.mxu0 0.0
    %706 = vmatpush1.msra.mxu0 %v692
    %707 = vmatprep.subr.mxu0 0.0
    %708 = vmatpush1.msra.mxu0 %v699
    %709 = vmatprep.subr.mxu0 0.0
    %710 = vmatpush1.msra.mxu0 0.0
    %711 = vmatprep.subr.mxu0 0.0
    %712 = vmatpush1.msra.mxu0 0.0
    %713 = vmatprep.subr.mxu0 0.0
    %714 = vmatpush1.msra.mxu0 0.0
    %715 = vmatprep.subr.mxu0 0.0
    %716 = vmatpush1.msra.mxu0 0.0
    %717 = vmatprep.subr.mxu0 0.0
    %718 = vmatpush1.msra.mxu0 0.0
    %719 = vmatprep.subr.mxu0 0.0
    %720 = vmatpush1.msra.mxu0 0.0
    %721 = vmatprep.subr.mxu0 0.0
    %722 = vmatpush1.msra.mxu0 0.0
    %723 = vmatprep.subr.mxu0 0.0
    %724 = vmatpush1.msra.mxu0 0.0
    %725 = vmatprep.subr.mxu0 0.0
    %726 = vmatpush1.msra.mxu0 0.0
    %727 = vmatprep.subr.mxu0 0.0
    %728 = vmatpush1.msra.mxu0 0.0
    %729 = vmatprep.subr.mxu0 0.0
    %730 = vmatpush1.msra.mxu0 0.0
    %731 = vmatprep.subr.mxu0 0.0
    %732 = vmatpush1.msra.mxu0 0.0
    %733 = vmatprep.subr.mxu0 0.0
    %734 = vmatpush1.msra.mxu0 0.0
    %735 = vmatprep.subr.mxu0 0.0
    %736 = vmatpush1.msra.mxu0 0.0
    %737 = vmatprep.subr.mxu0 0.0
    %738 = vmatpush1.msra.mxu0 0.0
    %739 = vmatprep.subr.mxu0 0.0
    %740 = vmatpush1.msra.mxu0 0.0
    %741 = vmatprep.subr.mxu0 0.0
    %742 = vmatpush1.msra.mxu0 0.0
    %743 = vmatprep.subr.mxu0 0.0
    %744 = vmatpush1.msra.mxu0 0.0
    %745 = vmatprep.subr.mxu0 0.0
    %746 = vmatpush1.msra.mxu0 0.0
    %747 = vmatprep.subr.mxu0 0.0
    %748 = vmatpush1.msra.mxu0 0.0
    %749 = vmatprep.subr.mxu0 0.0
    %750 = vmatpush1.msra.mxu0 0.0
    %751 = vmatprep.subr.mxu0 0.0
    %752 = vmatpush1.msra.mxu0 0.0
    %753 = vmatprep.subr.mxu0 0.0
    %754 = vmatpush1.msra.mxu0 0.0
    %755 = vmatprep.subr.mxu0 0.0
    %756 = vmatpush1.msra.mxu0 0.0
    %757 = vmatprep.subr.mxu0 0.0
    %758 = vmatpush1.msra.mxu0 0.0
    %759 = vmatprep.subr.mxu0 0.0
    %760 = vmatpush1.msra.mxu0 0.0
    %761 = vmatprep.subr.mxu0 0.0
    %762 = vmatpush1.msra.mxu0 0.0
    %763 = vmatprep.subr.mxu0 0.0
    %764 = vmatpush1.msra.mxu0 0.0
    %765 = vmatprep.mubr.f32.mxu0 0.0
    %766 = vmatmul.mubr.f32.gmra.mrb[0].mxu0 %v696
    %v767 = vpop.f32.mrb[0].mxu0
    %v768 = vadd.f32 0.0, %v767
    %v769 = vpop.f32.mrb[0].mxu0
    %770 = vdwg.mxu0
    %v771 = vrcp.pop %v768
    %773 = vset.pattern.permute.xlu0 16
    %774 = vperm.xlu0 %773, %v771
    %v775 = vpop.permute.xlu0 %774
    %v777 = vmul.f32 %v768, %v775
    %v778 = vld [vmem:[%s9] sm:$0xff]
    %v779 = vld [vmem:[%s9 + $0x8] sm:$0xff]
    %v781 = vsel %vm293, %v777, 0
    %783 = vmatprep.subr.mxu0 0.0
    %784 = vmatpush1.msra.mxu0 %v778
    %785 = vmatprep.subr.mxu0 0.0
    %786 = vmatpush1.msra.mxu0 %v779
    %787 = vmatprep.subr.mxu0 0.0
    %788 = vmatpush1.msra.mxu0 0.0
    %789 = vmatprep.subr.mxu0 0.0
    %790 = vmatpush1.msra.mxu0 0.0
    %791 = vmatprep.subr.mxu0 0.0
    %792 = vmatpush1.msra.mxu0 0.0
    %793 = vmatprep.subr.mxu0 0.0
    %794 = vmatpush1.msra.mxu0 0.0
    %795 = vmatprep.subr.mxu0 0.0
    %796 = vmatpush1.msra.mxu0 0.0
    %797 = vmatprep.subr.mxu0 0.0
    %798 = vmatpush1.msra.mxu0 0.0
    %799 = vmatprep.subr.mxu0 0.0
    %800 = vmatpush1.msra.mxu0 0.0
    %801 = vmatprep.subr.mxu0 0.0
    %802 = vmatpush1.msra.mxu0 0.0
    %803 = vmatprep.subr.mxu0 0.0
    %804 = vmatpush1.msra.mxu0 0.0
    %805 = vmatprep.subr.mxu0 0.0
    %806 = vmatpush1.msra.mxu0 0.0
    %807 = vmatprep.subr.mxu0 0.0
    %808 = vmatpush1.msra.mxu0 0.0
    %809 = vmatprep.subr.mxu0 0.0
    %810 = vmatpush1.msra.mxu0 0.0
    %811 = vmatprep.subr.mxu0 0.0
    %812 = vmatpush1.msra.mxu0 0.0
    %813 = vmatprep.subr.mxu0 0.0
    %814 = vmatpush1.msra.mxu0 0.0
    %815 = vmatprep.subr.mxu0 0.0
    %816 = vmatpush1.msra.mxu0 0.0
    %817 = vmatprep.subr.mxu0 0.0
    %818 = vmatpush1.msra.mxu0 0.0
    %819 = vmatprep.subr.mxu0 0.0
    %820 = vmatpush1.msra.mxu0 0.0
    %821 = vmatprep.subr.mxu0 0.0
    %822 = vmatpush1.msra.mxu0 0.0
    %823 = vmatprep.subr.mxu0 0.0
    %824 = vmatpush1.msra.mxu0 0.0
    %825 = vmatprep.subr.mxu0 0.0
    %826 = vmatpush1.msra.mxu0 0.0
    %827 = vmatprep.subr.mxu0 0.0
    %828 = vmatpush1.msra.mxu0 0.0
    %829 = vmatprep.subr.mxu0 0.0
    %830 = vmatpush1.msra.mxu0 0.0
    %831 = vmatprep.subr.mxu0 0.0
    %832 = vmatpush1.msra.mxu0 0.0
    %833 = vmatprep.subr.mxu0 0.0
    %834 = vmatpush1.msra.mxu0 0.0
    %835 = vmatprep.subr.mxu0 0.0
    %836 = vmatpush1.msra.mxu0 0.0
    %837 = vmatprep.subr.mxu0 0.0
    %838 = vmatpush1.msra.mxu0 0.0
    %839 = vmatprep.subr.mxu0 0.0
    %840 = vmatpush1.msra.mxu0 0.0
    %841 = vmatprep.subr.mxu0 0.0
    %842 = vmatpush1.msra.mxu0 0.0
    %843 = vmatprep.subr.mxu0 0.0
    %844 = vmatpush1.msra.mxu0 0.0
    %845 = vmatprep.subr.mxu0 0.0
    %846 = vmatpush1.msra.mxu0 0.0
    %847 = vmatprep.mubr.f32.mxu0 0.0
    %848 = vmatmul.mubr.f32.gmra.mrb[0].mxu0 %v781
    %v849 = vpop.f32.mrb[0].mxu0
    %v850 = vadd.f32 %v269, %v849
    %v851 = vpop.f32.mrb[0].mxu0
    %852 = vdwg.mxu0
    %v853 = vadd.f32 %v850, %v437
    %v854 = vxor.u32 %v853, 2147483648
    %v855 = vmul.f32 %v854, 1.442695
    %v856 = vpow.pop %v855
    %v857 = vadd.f32 %v856, 1.0
    %v858 = vrcp.pop %v857
    %v859 = vmul.f32 1.0, %v858
    %v860 = vtanh.pop %v853
    %862 = vrot.lane.b32.xlu0 %v288, 16
    %v863 = vpop.permute.xlu0 %862
    %v865 = vmul.f32 %v859, %v863
    %867 = vrot.lane.b32.xlu0 %v860, 96
    %v868 = vpop.permute.xlu0 %867
    %v870 = vmul.f32 %v859, %v868
    %872 = vrot.lane.b32.xlu0 %v870, 16
    %v873 = vpop.permute.xlu0 %872
    %v875 = vadd.f32 %v865, %v873
    %v876 = vtanh.pop %v875
    %878 = vrot.lane.b32.xlu0 %v876, 32
    %v879 = vpop.permute.xlu0 %878
    %v881 = vmul.f32 %v859, %v879
    %v882 = vld [vmem:[%s13] sm:$0xff]
    %v883 = vld [vmem:[%s13 + $0x8] sm:$0xff]
    %885 = vrot.lane.b32.xlu0 %v881, 80
    %v886 = vpop.permute.xlu0 %885
    %887 = vrot.lane.b32.xlu0 %v363, 112
    %v888 = vpop.permute.xlu0 %887
    %v890 = vsel %vm293, %v886, 0
    %892 = vmatprep.subr.mxu0 0.0
    %893 = vmatpush1.msra.mxu0 %v882
    %894 = vmatprep.subr.mxu0 0.0
    %895 = vmatpush1.msra.mxu0 %v883
    %896 = vmatprep.subr.mxu0 0.0
    %897 = vmatpush1.msra.mxu0 0.0
    %898 = vmatprep.subr.mxu0 0.0
    %899 = vmatpush1.msra.mxu0 0.0
    %900 = vmatprep.subr.mxu0 0.0
    %901 = vmatpush1.msra.mxu0 0.0
    %902 = vmatprep.subr.mxu0 0.0
    %903 = vmatpush1.msra.mxu0 0.0
    %904 = vmatprep.subr.mxu0 0.0
    %905 = vmatpush1.msra.mxu0 0.0
    %906 = vmatprep.subr.mxu0 0.0
    %907 = vmatpush1.msra.mxu0 0.0
    %908 = vmatprep.subr.mxu0 0.0
    %909 = vmatpush1.msra.mxu0 0.0
    %910 = vmatprep.subr.mxu0 0.0
    %911 = vmatpush1.msra.mxu0 0.0
    %912 = vmatprep.subr.mxu0 0.0
    %913 = vmatpush1.msra.mxu0 0.0
    %914 = vmatprep.subr.mxu0 0.0
    %915 = vmatpush1.msra.mxu0 0.0
    %916 = vmatprep.subr.mxu0 0.0
    %917 = vmatpush1.msra.mxu0 0.0
    %918 = vmatprep.subr.mxu0 0.0
    %919 = vmatpush1.msra.mxu0 0.0
    %920 = vmatprep.subr.mxu0 0.0
    %921 = vmatpush1.msra.mxu0 0.0
    %922 = vmatprep.subr.mxu0 0.0
    %923 = vmatpush1.msra.mxu0 0.0
    %924 = vmatprep.subr.mxu0 0.0
    %925 = vmatpush1.msra.mxu0 0.0
    %926 = vmatprep.subr.mxu0 0.0
    %927 = vmatpush1.msra.mxu0 0.0
    %928 = vmatprep.subr.mxu0 0.0
    %929 = vmatpush1.msra.mxu0 0.0
    %930 = vmatprep.subr.mxu0 0.0
    %931 = vmatpush1.msra.mxu0 0.0
    %932 = vmatprep.subr.mxu0 0.0
    %933 = vmatpush1.msra.mxu0 0.0
    %934 = vmatprep.subr.mxu0 0.0
    %935 = vmatpush1.msra.mxu0 0.0
    %936 = vmatprep.subr.mxu0 0.0
    %937 = vmatpush1.msra.mxu0 0.0
    %938 = vmatprep.subr.mxu0 0.0
    %939 = vmatpush1.msra.mxu0 0.0
    %940 = vmatprep.subr.mxu0 0.0
    %941 = vmatpush1.msra.mxu0 0.0
    %942 = vmatprep.subr.mxu0 0.0
    %943 = vmatpush1.msra.mxu0 0.0
    %944 = vmatprep.subr.mxu0 0.0
    %945 = vmatpush1.msra.mxu0 0.0
    %946 = vmatprep.subr.mxu0 0.0
    %947 = vmatpush1.msra.mxu0 0.0
    %948 = vmatprep.subr.mxu0 0.0
    %949 = vmatpush1.msra.mxu0 0.0
    %950 = vmatprep.subr.mxu0 0.0
    %951 = vmatpush1.msra.mxu0 0.0
    %952 = vmatprep.subr.mxu0 0.0
    %953 = vmatpush1.msra.mxu0 0.0
    %954 = vmatprep.subr.mxu0 0.0
    %955 = vmatpush1.msra.mxu0 0.0
    %956 = vmatprep.mubr.f32.mxu0 0.0
    %957 = vmatmul.mubr.f32.gmra.mrb[0].mxu0 %v890
    %v958 = vpop.f32.mrb[0].mxu0
    %v959 = vadd.f32 %v888, %v958
    %v960 = vpop.f32.mrb[0].mxu0
    %961 = vdwg.mxu0
    %v962 = vld [vmem:[%s14] sm:$0x1]
    %v964 = vlaneseq
    %v965 = vshrl.u32 %v964, 7
    %v966 = vsub.s32 0, %v965
    %v967 = vrot.slane %v962, %v966
    %v969 = vadd.f32 %v959, %v967
    %v970 = vxor.u32 %v969, 2147483648
    %v971 = vmul.f32 %v970, 1.442695
    %v972 = vpow.pop %v971
    %v973 = vadd.f32 %v972, 1.0
    %v974 = vrcp.pop %v973
    %v975 = vmul.f32 1.0, %v974
    %v976 = vtanh.pop %v969
    %v977 = vrot.slane %v288, 4
    %978 = vrot.lane.b32.xlu0 %v977, 16
    %v979 = vpop.permute.xlu0 %978
    %v981 = vmul.f32 %v975, %v979
    %983 = vrot.lane.b32.xlu0 %v976, 96
    %v984 = vpop.permute.xlu0 %983
    %v986 = vmul.f32 %v975, %v984
    %988 = vrot.lane.b32.xlu0 %v986, 16
    %v989 = vpop.permute.xlu0 %988
    %v991 = vadd.f32 %v981, %v989
    %v992 = vtanh.pop %v991
    %994 = vrot.lane.b32.xlu0 %v992, 32
    %v995 = vpop.permute.xlu0 %994
    %v997 = vmul.f32 %v975, %v995
    %999 = vrot.lane.b32.xlu0 %v997, 80
    %v1000 = vpop.permute.xlu0 %999
    %v1001 = vsel %vm293, %v1000, 0
    %1003 = vmatprep.subr.mxu0 0.0
    %1004 = vmatpush1.msra.mxu0 %v289
    %1005 = vmatprep.subr.mxu0 0.0
    %1006 = vmatpush1.msra.mxu0 %v290
    %1007 = vmatprep.subr.mxu0 0.0
    %1008 = vmatpush1.msra.mxu0 0.0
    %1009 = vmatprep.subr.mxu0 0.0
    %1010 = vmatpush1.msra.mxu0 0.0
    %1011 = vmatprep.subr.mxu0 0.0
    %1012 = vmatpush1.msra.mxu0 0.0
    %1013 = vmatprep.subr.mxu0 0.0
    %1014 = vmatpush1.msra.mxu0 0.0
    %1015 = vmatprep.subr.mxu0 0.0
    %1016 = vmatpush1.msra.mxu0 0.0
    %1017 = vmatprep.subr.mxu0 0.0
    %1018 = vmatpush1.msra.mxu0 0.0
    %1019 = vmatprep.subr.mxu0 0.0
    %1020 = vmatpush1.msra.mxu0 0.0
    %1021 = vmatprep.subr.mxu0 0.0
    %1022 = vmatpush1.msra.mxu0 0.0
    %1023 = vmatprep.subr.mxu0 0.0
    %1024 = vmatpush1.msra.mxu0 0.0
    %1025 = vmatprep.subr.mxu0 0.0
    %1026 = vmatpush1.msra.mxu0 0.0
    %1027 = vmatprep.subr.mxu0 0.0
    %1028 = vmatpush1.msra.mxu0 0.0
    %1029 = vmatprep.subr.mxu0 0.0
    %1030 = vmatpush1.msra.mxu0 0.0
    %1031 = vmatprep.subr.mxu0 0.0
    %1032 = vmatpush1.msra.mxu0 0.0
    %1033 = vmatprep.subr.mxu0 0.0
    %1034 = vmatpush1.msra.mxu0 0.0
    %1035 = vmatprep.subr.mxu0 0.0
    %1036 = vmatpush1.msra.mxu0 0.0
    %1037 = vmatprep.subr.mxu0 0.0
    %1038 = vmatpush1.msra.mxu0 0.0
    %1039 = vmatprep.subr.mxu0 0.0
    %1040 = vmatpush1.msra.mxu0 0.0
    %1041 = vmatprep.subr.mxu0 0.0
    %1042 = vmatpush1.msra.mxu0 0.0
    %1043 = vmatprep.subr.mxu0 0.0
    %1044 = vmatpush1.msra.mxu0 0.0
    %1045 = vmatprep.subr.mxu0 0.0
    %1046 = vmatpush1.msra.mxu0 0.0
    %1047 = vmatprep.subr.mxu0 0.0
    %1048 = vmatpush1.msra.mxu0 0.0
    %1049 = vmatprep.subr.mxu0 0.0
    %1050 = vmatpush1.msra.mxu0 0.0
    %1051 = vmatprep.subr.mxu0 0.0
    %1052 = vmatpush1.msra.mxu0 0.0
    %1053 = vmatprep.subr.mxu0 0.0
    %1054 = vmatpush1.msra.mxu0 0.0
    %1055 = vmatprep.subr.mxu0 0.0
    %1056 = vmatpush1.msra.mxu0 0.0
    %1057 = vmatprep.subr.mxu0 0.0
    %1058 = vmatpush1.msra.mxu0 0.0
    %1059 = vmatprep.subr.mxu0 0.0
    %1060 = vmatpush1.msra.mxu0 0.0
    %1061 = vmatprep.subr.mxu0 0.0
    %1062 = vmatpush1.msra.mxu0 0.0
    %1063 = vmatprep.subr.mxu0 0.0
    %1064 = vmatpush1.msra.mxu0 0.0
    %1065 = vmatprep.subr.mxu0 0.0
    %1066 = vmatpush1.msra.mxu0 0.0
    %1067 = vmatprep.mubr.f32.mxu0 0.0
    %1068 = vmatmul.mubr.f32.gmra.mrb[0].mxu0 %v1001
    %v1069 = vpop.f32.mrb[0].mxu0
    %v1070 = vadd.f32 0.0, %v1069
    %v1071 = vpop.f32.mrb[0].mxu0
    %1072 = vdwg.mxu0
    %1073 = vmatprep.subr.mxu0 0.0
    %1074 = vmatpush1.msra.mxu0 %v366
    %1075 = vmatprep.subr.mxu0 0.0
    %1076 = vmatpush1.msra.mxu0 %v367
    %1077 = vmatprep.subr.mxu0 0.0
    %1078 = vmatpush1.msra.mxu0 0.0
    %1079 = vmatprep.subr.mxu0 0.0
    %1080 = vmatpush1.msra.mxu0 0.0
    %1081 = vmatprep.subr.mxu0 0.0
    %1082 = vmatpush1.msra.mxu0 0.0
    %1083 = vmatprep.subr.mxu0 0.0
    %1084 = vmatpush1.msra.mxu0 0.0
    %1085 = vmatprep.subr.mxu0 0.0
    %1086 = vmatpush1.msra.mxu0 0.0
    %1087 = vmatprep.subr.mxu0 0.0
    %1088 = vmatpush1.msra.mxu0 0.0
    %1089 = vmatprep.subr.mxu0 0.0
    %1090 = vmatpush1.msra.mxu0 0.0
    %1091 = vmatprep.subr.mxu0 0.0
    %1092 = vmatpush1.msra.mxu0 0.0
    %1093 = vmatprep.subr.mxu0 0.0
    %1094 = vmatpush1.msra.mxu0 0.0
    %1095 = vmatprep.subr.mxu0 0.0
    %1096 = vmatpush1.msra.mxu0 0.0
    %1097 = vmatprep.subr.mxu0 0.0
    %1098 = vmatpush1.msra.mxu0 0.0
    %1099 = vmatprep.subr.mxu0 0.0
    %1100 = vmatpush1.msra.mxu0 0.0
    %1101 = vmatprep.subr.mxu0 0.0
    %1102 = vmatpush1.msra.mxu0 0.0
    %1103 = vmatprep.subr.mxu0 0.0
    %1104 = vmatpush1.msra.mxu0 0.0
    %1105 = vmatprep.subr.mxu0 0.0
    %1106 = vmatpush1.msra.mxu0 0.0
    %1107 = vmatprep.subr.mxu0 0.0
    %1108 = vmatpush1.msra.mxu0 0.0
    %1109 = vmatprep.subr.mxu0 0.0
    %1110 = vmatpush1.msra.mxu0 0.0
    %1111 = vmatprep.subr.mxu0 0.0
    %1112 = vmatpush1.msra.mxu0 0.0
    %1113 = vmatprep.subr.mxu0 0.0
    %1114 = vmatpush1.msra.mxu0 0.0
    %1115 = vmatprep.subr.mxu0 0.0
    %1116 = vmatpush1.msra.mxu0 0.0
    %1117 = vmatprep.subr.mxu0 0.0
    %1118 = vmatpush1.msra.mxu0 0.0
    %1119 = vmatprep.subr.mxu0 0.0
    %1120 = vmatpush1.msra.mxu0 0.0
    %1121 = vmatprep.subr.mxu0 0.0
    %1122 = vmatpush1.msra.mxu0 0.0
    %1123 = vmatprep.subr.mxu0 0.0
    %1124 = vmatpush1.msra.mxu0 0.0
    %1125 = vmatprep.subr.mxu0 0.0
    %1126 = vmatpush1.msra.mxu0 0.0
    %1127 = vmatprep.subr.mxu0 0.0
    %1128 = vmatpush1.msra.mxu0 0.0
    %1129 = vmatprep.subr.mxu0 0.0
    %1130 = vmatpush1.msra.mxu0 0.0
    %1131 = vmatprep.subr.mxu0 0.0
    %1132 = vmatpush1.msra.mxu0 0.0
    %1133 = vmatprep.subr.mxu0 0.0
    %1134 = vmatpush1.msra.mxu0 0.0
    %1135 = vmatprep.subr.mxu0 0.0
    %1136 = vmatpush1.msra.mxu0 0.0
    %1137 = vmatprep.mubr.f32.mxu0 0.0
    %1138 = vmatmul.mubr.f32.gmra.mrb[0].mxu0 %v890
    %v1139 = vpop.f32.mrb[0].mxu0
    %v1140 = vadd.f32 0.0, %v1139
    %v1141 = vpop.f32.mrb[0].mxu0
    %1142 = vdwg.mxu0
    %v1144 = vsel %vm453, %v1070, 0
    %1146 = vmatprep.subr.mxu0 0.0
    %1147 = vmatpush1.msra.mxu0 %v1144
    %1148 = vmatprep.subr.mxu0 0.0
    %1149 = vmatpush1.msra.mxu0 0.0
    %1150 = vmatprep.subr.mxu0 0.0
    %1151 = vmatpush1.msra.mxu0 0.0
    %1152 = vmatprep.subr.mxu0 0.0
    %1153 = vmatpush1.msra.mxu0 0.0
    %1154 = vmatprep.subr.mxu0 0.0
    %1155 = vmatpush1.msra.mxu0 0.0
    %1156 = vmatprep.subr.mxu0 0.0
    %1157 = vmatpush1.msra.mxu0 0.0
    %1158 = vmatprep.subr.mxu0 0.0
    %1159 = vmatpush1.msra.mxu0 0.0
    %1160 = vmatprep.subr.mxu0 0.0
    %1161 = vmatpush1.msra.mxu0 0.0
    %1162 = vmatprep.subr.mxu0 0.0
    %1163 = vmatpush1.msra.mxu0 0.0
    %1164 = vmatprep.subr.mxu0 0.0
    %1165 = vmatpush1.msra.mxu0 0.0
    %1166 = vmatprep.subr.mxu0 0.0
    %1167 = vmatpush1.msra.mxu0 0.0
    %1168 = vmatprep.subr.mxu0 0.0
    %1169 = vmatpush1.msra.mxu0 0.0
    %1170 = vmatprep.subr.mxu0 0.0
    %1171 = vmatpush1.msra.mxu0 0.0
    %1172 = vmatprep.subr.mxu0 0.0
    %1173 = vmatpush1.msra.mxu0 0.0
    %1174 = vmatprep.subr.mxu0 0.0
    %1175 = vmatpush1.msra.mxu0 0.0
    %1176 = vmatprep.subr.mxu0 0.0
    %1177 = vmatpush1.msra.mxu0 0.0
    %1178 = vmatprep.subr.mxu0 0.0
    %1179 = vmatpush1.msra.mxu0 0.0
    %1180 = vmatprep.subr.mxu0 0.0
    %1181 = vmatpush1.msra.mxu0 0.0
    %1182 = vmatprep.subr.mxu0 0.0
    %1183 = vmatpush1.msra.mxu0 0.0
    %1184 = vmatprep.subr.mxu0 0.0
    %1185 = vmatpush1.msra.mxu0 0.0
    %1186 = vmatprep.subr.mxu0 0.0
    %1187 = vmatpush1.msra.mxu0 0.0
    %1188 = vmatprep.subr.mxu0 0.0
    %1189 = vmatpush1.msra.mxu0 0.0
    %1190 = vmatprep.subr.mxu0 0.0
    %1191 = vmatpush1.msra.mxu0 0.0
    %1192 = vmatprep.subr.mxu0 0.0
    %1193 = vmatpush1.msra.mxu0 0.0
    %1194 = vmatprep.subr.mxu0 0.0
    %1195 = vmatpush1.msra.mxu0 0.0
    %1196 = vmatprep.subr.mxu0 0.0
    %1197 = vmatpush1.msra.mxu0 0.0
    %1198 = vmatprep.subr.mxu0 0.0
    %1199 = vmatpush1.msra.mxu0 0.0
    %1200 = vmatprep.subr.mxu0 0.0
    %1201 = vmatpush1.msra.mxu0 0.0
    %1202 = vmatprep.subr.mxu0 0.0
    %1203 = vmatpush1.msra.mxu0 0.0
    %1204 = vmatprep.subr.mxu0 0.0
    %1205 = vmatpush1.msra.mxu0 0.0
    %1206 = vmatprep.subr.mxu0 0.0
    %1207 = vmatpush1.msra.mxu0 0.0
    %1208 = vmatprep.subr.mxu0 0.0
    %1209 = vmatpush1.msra.mxu0 0.0
    %1210 = vmatprep.mubr.f32.mxu0 0.0
    %1211 = vmatmul.mubr.f32.gmra.mrb[0].mxu0 %v442
    %v1212 = vpop.f32.mrb[0].mxu0
    %v1213 = vadd.f32 %v152, %v1212
    %v1214 = vpop.f32.mrb[0].mxu0
    %1215 = vmatprep.mubr.f32.mxu0 0.0
    %1216 = vmatmul.mubr.f32.gmra.mrb[0].mxu0 %v445
    %v1217 = vpop.f32.mrb[0].mxu0
    %v1218 = vadd.f32 %v157, %v1217
    %v1219 = vpop.f32.mrb[0].mxu0
    %1220 = vmatprep.mubr.f32.mxu0 0.0
    %1221 = vmatmul.mubr.f32.gmra.mrb[0].mxu0 %v448
    %v1222 = vpop.f32.mrb[0].mxu0
    %v1223 = vadd.f32 %v162, %v1222
    %v1224 = vpop.f32.mrb[0].mxu0
    %1225 = vmatprep.mubr.f32.mxu0 0.0
    %1226 = vmatmul.mubr.f32.gmra.mrb[0].mxu0 %v451
    %v1227 = vpop.f32.mrb[0].mxu0
    %v1228 = vadd.f32 %v167, %v1227
    %v1229 = vpop.f32.mrb[0].mxu0
    %1230 = vdwg.mxu0
    %v1231 = vtanh.pop %v1213
    %v1232 = vtanh.pop %v1218
    %v1233 = vtanh.pop %v1223
    %v1234 = vtanh.pop %v1228
    %v1236 = vsel %vm293, %v1231, 0
    %v1239 = vsel %vm293, %v1232, 0
    %v1242 = vsel %vm293, %v1233, 0
    %v1245 = vsel %vm293, %v1234, 0
    %1247 = vmatprep.subr.mxu0 0.0
    %1248 = vmatpush1.msra.mxu0 %v175
    %1249 = vmatprep.subr.mxu0 0.0
    %1250 = vmatpush1.msra.mxu0 %v176
    %1251 = vmatprep.subr.mxu0 0.0
    %1252 = vmatpush1.msra.mxu0 0.0
    %1253 = vmatprep.subr.mxu0 0.0
    %1254 = vmatpush1.msra.mxu0 0.0
    %1255 = vmatprep.subr.mxu0 0.0
    %1256 = vmatpush1.msra.mxu0 0.0
    %1257 = vmatprep.subr.mxu0 0.0
    %1258 = vmatpush1.msra.mxu0 0.0
    %1259 = vmatprep.subr.mxu0 0.0
    %1260 = vmatpush1.msra.mxu0 0.0
    %1261 = vmatprep.subr.mxu0 0.0
    %1262 = vmatpush1.msra.mxu0 0.0
    %1263 = vmatprep.subr.mxu0 0.0
    %1264 = vmatpush1.msra.mxu0 0.0
    %1265 = vmatprep.subr.mxu0 0.0
    %1266 = vmatpush1.msra.mxu0 0.0
    %1267 = vmatprep.subr.mxu0 0.0
    %1268 = vmatpush1.msra.mxu0 0.0
    %1269 = vmatprep.subr.mxu0 0.0
    %1270 = vmatpush1.msra.mxu0 0.0
    %1271 = vmatprep.subr.mxu0 0.0
    %1272 = vmatpush1.msra.mxu0 0.0
    %1273 = vmatprep.subr.mxu0 0.0
    %1274 = vmatpush1.msra.mxu0 0.0
    %1275 = vmatprep.subr.mxu0 0.0
    %1276 = vmatpush1.msra.mxu0 0.0
    %1277 = vmatprep.subr.mxu0 0.0
    %1278 = vmatpush1.msra.mxu0 0.0
    %1279 = vmatprep.subr.mxu0 0.0
    %1280 = vmatpush1.msra.mxu0 0.0
    %1281 = vmatprep.subr.mxu0 0.0
    %1282 = vmatpush1.msra.mxu0 0.0
    %1283 = vmatprep.subr.mxu0 0.0
    %1284 = vmatpush1.msra.mxu0 0.0
    %1285 = vmatprep.subr.mxu0 0.0
    %1286 = vmatpush1.msra.mxu0 0.0
    %1287 = vmatprep.subr.mxu0 0.0
    %1288 = vmatpush1.msra.mxu0 0.0
    %1289 = vmatprep.subr.mxu0 0.0
    %1290 = vmatpush1.msra.mxu0 0.0
    %1291 = vmatprep.subr.mxu0 0.0
    %1292 = vmatpush1.msra.mxu0 0.0
    %1293 = vmatprep.subr.mxu0 0.0
    %1294 = vmatpush1.msra.mxu0 0.0
    %1295 = vmatprep.subr.mxu0 0.0
    %1296 = vmatpush1.msra.mxu0 0.0
    %1297 = vmatprep.subr.mxu0 0.0
    %1298 = vmatpush1.msra.mxu0 0.0
    %1299 = vmatprep.subr.mxu0 0.0
    %1300 = vmatpush1.msra.mxu0 0.0
    %1301 = vmatprep.subr.mxu0 0.0
    %1302 = vmatpush1.msra.mxu0 0.0
    %1303 = vmatprep.subr.mxu0 0.0
    %1304 = vmatpush1.msra.mxu0 0.0
    %1305 = vmatprep.subr.mxu0 0.0
    %1306 = vmatpush1.msra.mxu0 0.0
    %1307 = vmatprep.subr.mxu0 0.0
    %1308 = vmatpush1.msra.mxu0 0.0
    %1309 = vmatprep.subr.mxu0 0.0
    %1310 = vmatpush1.msra.mxu0 0.0
    %1311 = vmatprep.mubr.f32.mxu0 0.0
    %1312 = vmatmul.mubr.f32.gmra.mrb[0].mxu0 %v1236
    %v1313 = vpop.f32.mrb[0].mxu0
    %v1314 = vadd.f32 0.0, %v1313
    %v1315 = vpop.f32.mrb[0].mxu0
    %1316 = vmatprep.mubr.f32.mxu0 0.0
    %1317 = vmatmul.mubr.f32.gmra.mrb[0].mxu0 %v1239
    %v1318 = vpop.f32.mrb[0].mxu0
    %v1319 = vadd.f32 0.0, %v1318
    %v1320 = vpop.f32.mrb[0].mxu0
    %1321 = vmatprep.mubr.f32.mxu0 0.0
    %1322 = vmatmul.mubr.f32.gmra.mrb[0].mxu0 %v1242
    %v1323 = vpop.f32.mrb[0].mxu0
    %v1324 = vadd.f32 0.0, %v1323
    %v1325 = vpop.f32.mrb[0].mxu0
    %1326 = vmatprep.mubr.f32.mxu0 0.0
    %1327 = vmatmul.mubr.f32.gmra.mrb[0].mxu0 %v1245
    %v1328 = vpop.f32.mrb[0].mxu0
    %v1329 = vadd.f32 0.0, %v1328
    %v1330 = vpop.f32.mrb[0].mxu0
    %1331 = vdwg.mxu0
    %v1332 = vsel %vm643, %v1314, -inf
    %v1333 = vsel %vm643, %v1319, -inf
    %v1334 = vsel %vm643, %v1324, -inf
    %v1335 = vsel %vm647, %v1329, -inf
    %v1336 = vmax.f32 %v1332, %v1333
    %v1337 = vmax.f32 %v1334, %v1335
    %v1338 = vmax.f32 %v1336, %v1337
    %v1339 = vrot.slane %v1338, 4
    %v1340 = vmax.f32 %v1338, %v1339
    %v1341 = vrot.slane %v1340, 2
    %v1342 = vmax.f32 %v1340, %v1341
    %v1343 = vrot.slane %v1342, 1
    %v1344 = vmax.f32 %v1342, %v1343
    %v1345 = vsub.f32 %v1314, %v1344
    %v1346 = vsub.f32 %v1319, %v1344
    %v1347 = vsub.f32 %v1324, %v1344
    %v1348 = vsub.f32 %v1329, %v1344
    %v1349 = vmul.f32 %v1345, 1.442695
    %v1350 = vpow.pop %v1349
    %v1351 = vmul.f32 %v1346, 1.442695
    %v1352 = vpow.pop %v1351
    %v1353 = vmul.f32 %v1347, 1.442695
    %v1354 = vpow.pop %v1353
    %v1355 = vmul.f32 %v1348, 1.442695
    %v1356 = vpow.pop %v1355
    %1358 = vset.pattern.permute.xlu0 0
    %1359 = vperm.xlu0 %1358, %v1350
    %v1360 = vpop.permute.xlu0 %1359
    %1363 = vset.pattern.permute.xlu0 0
    %1364 = vperm.xlu0 %1363, %v1352
    %v1365 = vpop.permute.xlu0 %1364
    %1368 = vset.pattern.permute.xlu0 0
    %1369 = vperm.xlu0 %1368, %v1354
    %v1370 = vpop.permute.xlu0 %1369
    %1373 = vset.pattern.permute.xlu0 0
    %1374 = vperm.xlu0 %1373, %v1356
    %v1375 = vpop.permute.xlu0 %1374
    %v1377 = vmul.f32 %v1360, %v61
    %v1378 = vmul.f32 %v1365, %v62
    %v1379 = vmul.f32 %v1370, %v63
    %v1380 = vmul.f32 %v1375, %v64
    %v1382 = vsel %vm453, %v1380, 0
    %1384 = vmatprep.subr.mxu0 0.0
    %1385 = vmatpush1.msra.mxu0 %v1377
    %1386 = vmatprep.subr.mxu0 0.0
    %1387 = vmatpush1.msra.mxu0 %v1378
    %1388 = vmatprep.subr.mxu0 0.0
    %1389 = vmatpush1.msra.mxu0 %v1379
    %1390 = vmatprep.subr.mxu0 0.0
    %1391 = vmatpush1.msra.mxu0 %v1382
    %1392 = vmatprep.subr.mxu0 0.0
    %1393 = vmatpush1.msra.mxu0 0.0
    %1394 = vmatprep.subr.mxu0 0.0
    %1395 = vmatpush1.msra.mxu0 0.0
    %1396 = vmatprep.subr.mxu0 0.0
    %1397 = vmatpush1.msra.mxu0 0.0
    %1398 = vmatprep.subr.mxu0 0.0
    %1399 = vmatpush1.msra.mxu0 0.0
    %1400 = vmatprep.subr.mxu0 0.0
    %1401 = vmatpush1.msra.mxu0 0.0
    %1402 = vmatprep.subr.mxu0 0.0
    %1403 = vmatpush1.msra.mxu0 0.0
    %1404 = vmatprep.subr.mxu0 0.0
    %1405 = vmatpush1.msra.mxu0 0.0
    %1406 = vmatprep.subr.mxu0 0.0
    %1407 = vmatpush1.msra.mxu0 0.0
    %1408 = vmatprep.subr.mxu0 0.0
    %1409 = vmatpush1.msra.mxu0 0.0
    %1410 = vmatprep.subr.mxu0 0.0
    %1411 = vmatpush1.msra.mxu0 0.0
    %1412 = vmatprep.subr.mxu0 0.0
    %1413 = vmatpush1.msra.mxu0 0.0
    %1414 = vmatprep.subr.mxu0 0.0
    %1415 = vmatpush1.msra.mxu0 0.0
    %1416 = vmatprep.subr.mxu0 0.0
    %1417 = vmatpush1.msra.mxu0 0.0
    %1418 = vmatprep.subr.mxu0 0.0
    %1419 = vmatpush1.msra.mxu0 0.0
    %1420 = vmatprep.subr.mxu0 0.0
    %1421 = vmatpush1.msra.mxu0 0.0
    %1422 = vmatprep.subr.mxu0 0.0
    %1423 = vmatpush1.msra.mxu0 0.0
    %1424 = vmatprep.subr.mxu0 0.0
    %1425 = vmatpush1.msra.mxu0 0.0
    %1426 = vmatprep.subr.mxu0 0.0
    %1427 = vmatpush1.msra.mxu0 0.0
    %1428 = vmatprep.subr.mxu0 0.0
    %1429 = vmatpush1.msra.mxu0 0.0
    %1430 = vmatprep.subr.mxu0 0.0
    %1431 = vmatpush1.msra.mxu0 0.0
    %1432 = vmatprep.subr.mxu0 0.0
    %1433 = vmatpush1.msra.mxu0 0.0
    %1434 = vmatprep.subr.mxu0 0.0
    %1435 = vmatpush1.msra.mxu0 0.0
    %1436 = vmatprep.subr.mxu0 0.0
    %1437 = vmatpush1.msra.mxu0 0.0
    %1438 = vmatprep.subr.mxu0 0.0
    %1439 = vmatpush1.msra.mxu0 0.0
    %1440 = vmatprep.subr.mxu0 0.0
    %1441 = vmatpush1.msra.mxu0 0.0
    %1442 = vmatprep.subr.mxu0 0.0
    %1443 = vmatpush1.msra.mxu0 0.0
    %1444 = vmatprep.subr.mxu0 0.0
    %1445 = vmatpush1.msra.mxu0 0.0
    %1446 = vmatprep.subr.mxu0 0.0
    %1447 = vmatpush1.msra.mxu0 0.0
    %1448 = vmatprep.mubr.f32.mxu0 0.0
    %1449 = vmatmul.mubr.f32.gmra.mrb[0].mxu0 %v696
    %v1450 = vpop.f32.mrb[0].mxu0
    %v1451 = vadd.f32 0.0, %v1450
    %v1452 = vpop.f32.mrb[0].mxu0
    %1453 = vdwg.mxu0
    %v1454 = vrcp.pop %v1451
    %1456 = vset.pattern.permute.xlu0 16
    %1457 = vperm.xlu0 %1456, %v1454
    %v1458 = vpop.permute.xlu0 %1457
    %v1460 = vmul.f32 %v1451, %v1458
    %v1462 = vrot.slane %v269, 4
    %v1465 = vsel %vm293, %v1460, 0
    %1467 = vmatprep.subr.mxu0 0.0
    %1468 = vmatpush1.msra.mxu0 %v778
    %1469 = vmatprep.subr.mxu0 0.0
    %1470 = vmatpush1.msra.mxu0 %v779
    %1471 = vmatprep.subr.mxu0 0.0
    %1472 = vmatpush1.msra.mxu0 0.0
    %1473 = vmatprep.subr.mxu0 0.0
    %1474 = vmatpush1.msra.mxu0 0.0
    %1475 = vmatprep.subr.mxu0 0.0
    %1476 = vmatpush1.msra.mxu0 0.0
    %1477 = vmatprep.subr.mxu0 0.0
    %1478 = vmatpush1.msra.mxu0 0.0
    %1479 = vmatprep.subr.mxu0 0.0
    %1480 = vmatpush1.msra.mxu0 0.0
    %1481 = vmatprep.subr.mxu0 0.0
    %1482 = vmatpush1.msra.mxu0 0.0
    %1483 = vmatprep.subr.mxu0 0.0
    %1484 = vmatpush1.msra.mxu0 0.0
    %1485 = vmatprep.subr.mxu0 0.0
    %1486 = vmatpush1.msra.mxu0 0.0
    %1487 = vmatprep.subr.mxu0 0.0
    %1488 = vmatpush1.msra.mxu0 0.0
    %1489 = vmatprep.subr.mxu0 0.0
    %1490 = vmatpush1.msra.mxu0 0.0
    %1491 = vmatprep.subr.mxu0 0.0
    %1492 = vmatpush1.msra.mxu0 0.0
    %1493 = vmatprep.subr.mxu0 0.0
    %1494 = vmatpush1.msra.mxu0 0.0
    %1495 = vmatprep.subr.mxu0 0.0
    %1496 = vmatpush1.msra.mxu0 0.0
    %1497 = vmatprep.subr.mxu0 0.0
    %1498 = vmatpush1.msra.mxu0 0.0
    %1499 = vmatprep.subr.mxu0 0.0
    %1500 = vmatpush1.msra.mxu0 0.0
    %1501 = vmatprep.subr.mxu0 0.0
    %1502 = vmatpush1.msra.mxu0 0.0
    %1503 = vmatprep.subr.mxu0 0.0
    %1504 = vmatpush1.msra.mxu0 0.0
    %1505 = vmatprep.subr.mxu0 0.0
    %1506 = vmatpush1.msra.mxu0 0.0
    %1507 = vmatprep.subr.mxu0 0.0
    %1508 = vmatpush1.msra.mxu0 0.0
    %1509 = vmatprep.subr.mxu0 0.0
    %1510 = vmatpush1.msra.mxu0 0.0
    %1511 = vmatprep.subr.mxu0 0.0
    %1512 = vmatpush1.msra.mxu0 0.0
    %1513 = vmatprep.subr.mxu0 0.0
    %1514 = vmatpush1.msra.mxu0 0.0
    %1515 = vmatprep.subr.mxu0 0.0
    %1516 = vmatpush1.msra.mxu0 0.0
    %1517 = vmatprep.subr.mxu0 0.0
    %1518 = vmatpush1.msra.mxu0 0.0
    %1519 = vmatprep.subr.mxu0 0.0
    %1520 = vmatpush1.msra.mxu0 0.0
    %1521 = vmatprep.subr.mxu0 0.0
    %1522 = vmatpush1.msra.mxu0 0.0
    %1523 = vmatprep.subr.mxu0 0.0
    %1524 = vmatpush1.msra.mxu0 0.0
    %1525 = vmatprep.subr.mxu0 0.0
    %1526 = vmatpush1.msra.mxu0 0.0
    %1527 = vmatprep.subr.mxu0 0.0
    %1528 = vmatpush1.msra.mxu0 0.0
    %1529 = vmatprep.subr.mxu0 0.0
    %1530 = vmatpush1.msra.mxu0 0.0
    %1531 = vmatprep.mubr.f32.mxu0 0.0
    %1532 = vmatmul.mubr.f32.gmra.mrb[0].mxu0 %v1465
    %v1533 = vpop.f32.mrb[0].mxu0
    %v1534 = vadd.f32 %v1462, %v1533
    %v1535 = vpop.f32.mrb[0].mxu0
    %1536 = vdwg.mxu0
    %v1537 = vadd.f32 %v1534, %v1140
    %v1538 = vxor.u32 %v1537, 2147483648
    %v1539 = vmul.f32 %v1538, 1.442695
    %v1540 = vpow.pop %v1539
    %v1541 = vadd.f32 %v1540, 1.0
    %v1542 = vrcp.pop %v1541
    %v1543 = vmul.f32 1.0, %v1542
    %v1544 = vtanh.pop %v1537
    %v1545 = vmul.f32 %v1543, %v875
    %1547 = vrot.lane.b32.xlu0 %v1544, 96
    %v1548 = vpop.permute.xlu0 %1547
    %v1550 = vmul.f32 %v1543, %v1548
    %1552 = vrot.lane.b32.xlu0 %v1550, 16
    %v1553 = vpop.permute.xlu0 %1552
    %v1555 = vadd.f32 %v1545, %v1553
    %v1556 = vtanh.pop %v1555
    %1558 = vrot.lane.b32.xlu0 %v1556, 32
    %v1559 = vpop.permute.xlu0 %1558
    %v1561 = vmul.f32 %v1543, %v1559
    %1563 = vrot.lane.b32.xlu0 %v1561, 80
    %v1564 = vpop.permute.xlu0 %1563
    %1565 = vrot.lane.b32.xlu0 %v1070, 112
    %v1566 = vpop.permute.xlu0 %1565
    %v1568 = vsel %vm293, %v1564, 0
    %1570 = vmatprep.subr.mxu0 0.0
    %1571 = vmatpush1.msra.mxu0 %v882
    %1572 = vmatprep.subr.mxu0 0.0
    %1573 = vmatpush1.msra.mxu0 %v883
    %1574 = vmatprep.subr.mxu0 0.0
    %1575 = vmatpush1.msra.mxu0 0.0
    %1576 = vmatprep.subr.mxu0 0.0
    %1577 = vmatpush1.msra.mxu0 0.0
    %1578 = vmatprep.subr.mxu0 0.0
    %1579 = vmatpush1.msra.mxu0 0.0
    %1580 = vmatprep.subr.mxu0 0.0
    %1581 = vmatpush1.msra.mxu0 0.0
    %1582 = vmatprep.subr.mxu0 0.0
    %1583 = vmatpush1.msra.mxu0 0.0
    %1584 = vmatprep.subr.mxu0 0.0
    %1585 = vmatpush1.msra.mxu0 0.0
    %1586 = vmatprep.subr.mxu0 0.0
    %1587 = vmatpush1.msra.mxu0 0.0
    %1588 = vmatprep.subr.mxu0 0.0
    %1589 = vmatpush1.msra.mxu0 0.0
    %1590 = vmatprep.subr.mxu0 0.0
    %1591 = vmatpush1.msra.mxu0 0.0
    %1592 = vmatprep.subr.mxu0 0.0
    %1593 = vmatpush1.msra.mxu0 0.0
    %1594 = vmatprep.subr.mxu0 0.0
    %1595 = vmatpush1.msra.mxu0 0.0
    %1596 = vmatprep.subr.mxu0 0.0
    %1597 = vmatpush1.msra.mxu0 0.0
    %1598 = vmatprep.subr.mxu0 0.0
    %1599 = vmatpush1.msra.mxu0 0.0
    %1600 = vmatprep.subr.mxu0 0.0
    %1601 = vmatpush1.msra.mxu0 0.0
    %1602 = vmatprep.subr.mxu0 0.0
    %1603 = vmatpush1.msra.mxu0 0.0
    %1604 = vmatprep.subr.mxu0 0.0
    %1605 = vmatpush1.msra.mxu0 0.0
    %1606 = vmatprep.subr.mxu0 0.0
    %1607 = vmatpush1.msra.mxu0 0.0
    %1608 = vmatprep.subr.mxu0 0.0
    %1609 = vmatpush1.msra.mxu0 0.0
    %1610 = vmatprep.subr.mxu0 0.0
    %1611 = vmatpush1.msra.mxu0 0.0
    %1612 = vmatprep.subr.mxu0 0.0
    %1613 = vmatpush1.msra.mxu0 0.0
    %1614 = vmatprep.subr.mxu0 0.0
    %1615 = vmatpush1.msra.mxu0 0.0
    %1616 = vmatprep.subr.mxu0 0.0
    %1617 = vmatpush1.msra.mxu0 0.0
    %1618 = vmatprep.subr.mxu0 0.0
    %1619 = vmatpush1.msra.mxu0 0.0
    %1620 = vmatprep.subr.mxu0 0.0
    %1621 = vmatpush1.msra.mxu0 0.0
    %1622 = vmatprep.subr.mxu0 0.0
    %1623 = vmatpush1.msra.mxu0 0.0
    %1624 = vmatprep.subr.mxu0 0.0
    %1625 = vmatpush1.msra.mxu0 0.0
    %1626 = vmatprep.subr.mxu0 0.0
    %1627 = vmatpush1.msra.mxu0 0.0
    %1628 = vmatprep.subr.mxu0 0.0
    %1629 = vmatpush1.msra.mxu0 0.0
    %1630 = vmatprep.subr.mxu0 0.0
    %1631 = vmatpush1.msra.mxu0 0.0
    %1632 = vmatprep.subr.mxu0 0.0
    %1633 = vmatpush1.msra.mxu0 0.0
    %1634 = vmatprep.mubr.f32.mxu0 0.0
    %1635 = vmatmul.mubr.f32.gmra.mrb[0].mxu0 %v1568
    %v1636 = vpop.f32.mrb[0].mxu0
    %v1637 = vadd.f32 %v1566, %v1636
    %v1638 = vpop.f32.mrb[0].mxu0
    %1639 = vdwg.mxu0
    %v1640 = vadd.f32 %v1637, %v967
    %v1641 = vxor.u32 %v1640, 2147483648
    %v1642 = vmul.f32 %v1641, 1.442695
    %v1643 = vpow.pop %v1642
    %v1644 = vadd.f32 %v1643, 1.0
    %v1645 = vrcp.pop %v1644
    %v1646 = vmul.f32 1.0, %v1645
    %v1647 = vtanh.pop %v1640
    %v1648 = vmul.f32 %v1646, %v991
    %1650 = vrot.lane.b32.xlu0 %v1647, 96
    %v1651 = vpop.permute.xlu0 %1650
    %v1653 = vmul.f32 %v1646, %v1651
    %1655 = vrot.lane.b32.xlu0 %v1653, 16
    %v1656 = vpop.permute.xlu0 %1655
    %v1658 = vadd.f32 %v1648, %v1656
    %v1659 = vtanh.pop %v1658
    %1661 = vrot.lane.b32.xlu0 %v1659, 32
    %v1662 = vpop.permute.xlu0 %1661
    %v1664 = vmul.f32 %v1646, %v1662
    %1666 = vrot.lane.b32.xlu0 %v1664, 80
    %v1667 = vpop.permute.xlu0 %1666
    %v1668 = vsel %vm293, %v1667, 0
    %1670 = vmatprep.subr.mxu0 0.0
    %1671 = vmatpush1.msra.mxu0 %v289
    %1672 = vmatprep.subr.mxu0 0.0
    %1673 = vmatpush1.msra.mxu0 %v290
    %1674 = vmatprep.subr.mxu0 0.0
    %1675 = vmatpush1.msra.mxu0 0.0
    %1676 = vmatprep.subr.mxu0 0.0
    %1677 = vmatpush1.msra.mxu0 0.0
    %1678 = vmatprep.subr.mxu0 0.0
    %1679 = vmatpush1.msra.mxu0 0.0
    %1680 = vmatprep.subr.mxu0 0.0
    %1681 = vmatpush1.msra.mxu0 0.0
    %1682 = vmatprep.subr.mxu0 0.0
    %1683 = vmatpush1.msra.mxu0 0.0
    %1684 = vmatprep.subr.mxu0 0.0
    %1685 = vmatpush1.msra.mxu0 0.0
    %1686 = vmatprep.subr.mxu0 0.0
    %1687 = vmatpush1.msra.mxu0 0.0
    %1688 = vmatprep.subr.mxu0 0.0
    %1689 = vmatpush1.msra.mxu0 0.0
    %1690 = vmatprep.subr.mxu0 0.0
    %1691 = vmatpush1.msra.mxu0 0.0
    %1692 = vmatprep.subr.mxu0 0.0
    %1693 = vmatpush1.msra.mxu0 0.0
    %1694 = vmatprep.subr.mxu0 0.0
    %1695 = vmatpush1.msra.mxu0 0.0
    %1696 = vmatprep.subr.mxu0 0.0
    %1697 = vmatpush1.msra.mxu0 0.0
    %1698 = vmatprep.subr.mxu0 0.0
    %1699 = vmatpush1.msra.mxu0 0.0
    %1700 = vmatprep.subr.mxu0 0.0
    %1701 = vmatpush1.msra.mxu0 0.0
    %1702 = vmatprep.subr.mxu0 0.0
    %1703 = vmatpush1.msra.mxu0 0.0
    %1704 = vmatprep.subr.mxu0 0.0
    %1705 = vmatpush1.msra.mxu0 0.0
    %1706 = vmatprep.subr.mxu0 0.0
    %1707 = vmatpush1.msra.mxu0 0.0
    %1708 = vmatprep.subr.mxu0 0.0
    %1709 = vmatpush1.msra.mxu0 0.0
    %1710 = vmatprep.subr.mxu0 0.0
    %1711 = vmatpush1.msra.mxu0 0.0
    %1712 = vmatprep.subr.mxu0 0.0
    %1713 = vmatpush1.msra.mxu0 0.0
    %1714 = vmatprep.subr.mxu0 0.0
    %1715 = vmatpush1.msra.mxu0 0.0
    %1716 = vmatprep.subr.mxu0 0.0
    %1717 = vmatpush1.msra.mxu0 0.0
    %1718 = vmatprep.subr.mxu0 0.0
    %1719 = vmatpush1.msra.mxu0 0.0
    %1720 = vmatprep.subr.mxu0 0.0
    %1721 = vmatpush1.msra.mxu0 0.0
    %1722 = vmatprep.subr.mxu0 0.0
    %1723 = vmatpush1.msra.mxu0 0.0
    %1724 = vmatprep.subr.mxu0 0.0
    %1725 = vmatpush1.msra.mxu0 0.0
    %1726 = vmatprep.subr.mxu0 0.0
    %1727 = vmatpush1.msra.mxu0 0.0
    %1728 = vmatprep.subr.mxu0 0.0
    %1729 = vmatpush1.msra.mxu0 0.0
    %1730 = vmatprep.subr.mxu0 0.0
    %1731 = vmatpush1.msra.mxu0 0.0
    %1732 = vmatprep.subr.mxu0 0.0
    %1733 = vmatpush1.msra.mxu0 0.0
    %1734 = vmatprep.mubr.f32.mxu0 0.0
    %1735 = vmatmul.mubr.f32.gmra.mrb[0].mxu0 %v1668
    %v1736 = vpop.f32.mrb[0].mxu0
    %v1737 = vadd.f32 0.0, %v1736
    %v1738 = vpop.f32.mrb[0].mxu0
    %1739 = vdwg.mxu0
    %1740 = vmatprep.subr.mxu0 0.0
    %1741 = vmatpush1.msra.mxu0 %v366
    %1742 = vmatprep.subr.mxu0 0.0
    %1743 = vmatpush1.msra.mxu0 %v367
    %1744 = vmatprep.subr.mxu0 0.0
    %1745 = vmatpush1.msra.mxu0 0.0
    %1746 = vmatprep.subr.mxu0 0.0
    %1747 = vmatpush1.msra.mxu0 0.0
    %1748 = vmatprep.subr.mxu0 0.0
    %1749 = vmatpush1.msra.mxu0 0.0
    %1750 = vmatprep.subr.mxu0 0.0
    %1751 = vmatpush1.msra.mxu0 0.0
    %1752 = vmatprep.subr.mxu0 0.0
    %1753 = vmatpush1.msra.mxu0 0.0
    %1754 = vmatprep.subr.mxu0 0.0
    %1755 = vmatpush1.msra.mxu0 0.0
    %1756 = vmatprep.subr.mxu0 0.0
    %1757 = vmatpush1.msra.mxu0 0.0
    %1758 = vmatprep.subr.mxu0 0.0
    %1759 = vmatpush1.msra.mxu0 0.0
    %1760 = vmatprep.subr.mxu0 0.0
    %1761 = vmatpush1.msra.mxu0 0.0
    %1762 = vmatprep.subr.mxu0 0.0
    %1763 = vmatpush1.msra.mxu0 0.0
    %1764 = vmatprep.subr.mxu0 0.0
    %1765 = vmatpush1.msra.mxu0 0.0
    %1766 = vmatprep.subr.mxu0 0.0
    %1767 = vmatpush1.msra.mxu0 0.0
    %1768 = vmatprep.subr.mxu0 0.0
    %1769 = vmatpush1.msra.mxu0 0.0
    %1770 = vmatprep.subr.mxu0 0.0
    %1771 = vmatpush1.msra.mxu0 0.0
    %1772 = vmatprep.subr.mxu0 0.0
    %1773 = vmatpush1.msra.mxu0 0.0
    %1774 = vmatprep.subr.mxu0 0.0
    %1775 = vmatpush1.msra.mxu0 0.0
    %1776 = vmatprep.subr.mxu0 0.0
    %1777 = vmatpush1.msra.mxu0 0.0
    %1778 = vmatprep.subr.mxu0 0.0
    %1779 = vmatpush1.msra.mxu0 0.0
    %1780 = vmatprep.subr.mxu0 0.0
    %1781 = vmatpush1.msra.mxu0 0.0
    %1782 = vmatprep.subr.mxu0 0.0
    %1783 = vmatpush1.msra.mxu0 0.0
    %1784 = vmatprep.subr.mxu0 0.0
    %1785 = vmatpush1.msra.mxu0 0.0
    %1786 = vmatprep.subr.mxu0 0.0
    %1787 = vmatpush1.msra.mxu0 0.0
    %1788 = vmatprep.subr.mxu0 0.0
    %1789 = vmatpush1.msra.mxu0 0.0
    %1790 = vmatprep.subr.mxu0 0.0
    %1791 = vmatpush1.msra.mxu0 0.0
    %1792 = vmatprep.subr.mxu0 0.0
    %1793 = vmatpush1.msra.mxu0 0.0
    %1794 = vmatprep.subr.mxu0 0.0
    %1795 = vmatpush1.msra.mxu0 0.0
    %1796 = vmatprep.subr.mxu0 0.0
    %1797 = vmatpush1.msra.mxu0 0.0
    %1798 = vmatprep.subr.mxu0 0.0
    %1799 = vmatpush1.msra.mxu0 0.0
    %1800 = vmatprep.subr.mxu0 0.0
    %1801 = vmatpush1.msra.mxu0 0.0
    %1802 = vmatprep.subr.mxu0 0.0
    %1803 = vmatpush1.msra.mxu0 0.0
    %1804 = vmatprep.mubr.f32.mxu0 0.0
    %1805 = vmatmul.mubr.f32.gmra.mrb[0].mxu0 %v1568
    %v1806 = vpop.f32.mrb[0].mxu0
    %v1807 = vadd.f32 0.0, %v1806
    %v1808 = vpop.f32.mrb[0].mxu0
    %1809 = vdwg.mxu0
    %v1811 = vsel %vm453, %v1737, 0
    %1813 = vmatprep.subr.mxu0 0.0
    %1814 = vmatpush1.msra.mxu0 %v1811
    %1815 = vmatprep.subr.mxu0 0.0
    %1816 = vmatpush1.msra.mxu0 0.0
    %1817 = vmatprep.subr.mxu0 0.0
    %1818 = vmatpush1.msra.mxu0 0.0
    %1819 = vmatprep.subr.mxu0 0.0
    %1820 = vmatpush1.msra.mxu0 0.0
    %1821 = vmatprep.subr.mxu0 0.0
    %1822 = vmatpush1.msra.mxu0 0.0
    %1823 = vmatprep.subr.mxu0 0.0
    %1824 = vmatpush1.msra.mxu0 0.0
    %1825 = vmatprep.subr.mxu0 0.0
    %1826 = vmatpush1.msra.mxu0 0.0
    %1827 = vmatprep.subr.mxu0 0.0
    %1828 = vmatpush1.msra.mxu0 0.0
    %1829 = vmatprep.subr.mxu0 0.0
    %1830 = vmatpush1.msra.mxu0 0.0
    %1831 = vmatprep.subr.mxu0 0.0
    %1832 = vmatpush1.msra.mxu0 0.0
    %1833 = vmatprep.subr.mxu0 0.0
    %1834 = vmatpush1.msra.mxu0 0.0
    %1835 = vmatprep.subr.mxu0 0.0
    %1836 = vmatpush1.msra.mxu0 0.0
    %1837 = vmatprep.subr.mxu0 0.0
    %1838 = vmatpush1.msra.mxu0 0.0
    %1839 = vmatprep.subr.mxu0 0.0
    %1840 = vmatpush1.msra.mxu0 0.0
    %1841 = vmatprep.subr.mxu0 0.0
    %1842 = vmatpush1.msra.mxu0 0.0
    %1843 = vmatprep.subr.mxu0 0.0
    %1844 = vmatpush1.msra.mxu0 0.0
    %1845 = vmatprep.subr.mxu0 0.0
    %1846 = vmatpush1.msra.mxu0 0.0
    %1847 = vmatprep.subr.mxu0 0.0
    %1848 = vmatpush1.msra.mxu0 0.0
    %1849 = vmatprep.subr.mxu0 0.0
    %1850 = vmatpush1.msra.mxu0 0.0
    %1851 = vmatprep.subr.mxu0 0.0
    %1852 = vmatpush1.msra.mxu0 0.0
    %1853 = vmatprep.subr.mxu0 0.0
    %1854 = vmatpush1.msra.mxu0 0.0
    %1855 = vmatprep.subr.mxu0 0.0
    %1856 = vmatpush1.msra.mxu0 0.0
    %1857 = vmatprep.subr.mxu0 0.0
    %1858 = vmatpush1.msra.mxu0 0.0
    %1859 = vmatprep.subr.mxu0 0.0
    %1860 = vmatpush1.msra.mxu0 0.0
    %1861 = vmatprep.subr.mxu0 0.0
    %1862 = vmatpush1.msra.mxu0 0.0
    %1863 = vmatprep.subr.mxu0 0.0
    %1864 = vmatpush1.msra.mxu0 0.0
    %1865 = vmatprep.subr.mxu0 0.0
    %1866 = vmatpush1.msra.mxu0 0.0
    %1867 = vmatprep.subr.mxu0 0.0
    %1868 = vmatpush1.msra.mxu0 0.0
    %1869 = vmatprep.subr.mxu0 0.0
    %1870 = vmatpush1.msra.mxu0 0.0
    %1871 = vmatprep.subr.mxu0 0.0
    %1872 = vmatpush1.msra.mxu0 0.0
    %1873 = vmatprep.subr.mxu0 0.0
    %1874 = vmatpush1.msra.mxu0 0.0
    %1875 = vmatprep.subr.mxu0 0.0
    %1876 = vmatpush1.msra.mxu0 0.0
    %1877 = vmatprep.mubr.f32.mxu0 0.0
    %1878 = vmatmul.mubr.f32.gmra.mrb[0].mxu0 %v442
    %v1879 = vpop.f32.mrb[0].mxu0
    %v1880 = vadd.f32 %v152, %v1879
    %v1881 = vpop.f32.mrb[0].mxu0
    %1882 = vmatprep.mubr.f32.mxu0 0.0
    %1883 = vmatmul.mubr.f32.gmra.mrb[0].mxu0 %v445
    %v1884 = vpop.f32.mrb[0].mxu0
    %v1885 = vadd.f32 %v157, %v1884
    %v1886 = vpop.f32.mrb[0].mxu0
    %1887 = vmatprep.mubr.f32.mxu0 0.0
    %1888 = vmatmul.mubr.f32.gmra.mrb[0].mxu0 %v448
    %v1889 = vpop.f32.mrb[0].mxu0
    %v1890 = vadd.f32 %v162, %v1889
    %v1891 = vpop.f32.mrb[0].mxu0
    %1892 = vmatprep.mubr.f32.mxu0 0.0
    %1893 = vmatmul.mubr.f32.gmra.mrb[0].mxu0 %v451
    %v1894 = vpop.f32.mrb[0].mxu0
    %v1895 = vadd.f32 %v167, %v1894
    %v1896 = vpop.f32.mrb[0].mxu0
    %1897 = vdwg.mxu0
    %v1898 = vtanh.pop %v1880
    %v1899 = vtanh.pop %v1885
    %v1900 = vtanh.pop %v1890
    %v1901 = vtanh.pop %v1895
    %v1903 = vsel %vm293, %v1898, 0
    %v1906 = vsel %vm293, %v1899, 0
    %v1909 = vsel %vm293, %v1900, 0
    %v1912 = vsel %vm293, %v1901, 0
    %1914 = vmatprep.subr.mxu0 0.0
    %1915 = vmatpush1.msra.mxu0 %v175
    %1916 = vmatprep.subr.mxu0 0.0
    %1917 = vmatpush1.msra.mxu0 %v176
    %1918 = vmatprep.subr.mxu0 0.0
    %1919 = vmatpush1.msra.mxu0 0.0
    %1920 = vmatprep.subr.mxu0 0.0
    %1921 = vmatpush1.msra.mxu0 0.0
    %1922 = vmatprep.subr.mxu0 0.0
    %1923 = vmatpush1.msra.mxu0 0.0
    %1924 = vmatprep.subr.mxu0 0.0
    %1925 = vmatpush1.msra.mxu0 0.0
    %1926 = vmatprep.subr.mxu0 0.0
    %1927 = vmatpush1.msra.mxu0 0.0
    %1928 = vmatprep.subr.mxu0 0.0
    %1929 = vmatpush1.msra.mxu0 0.0
    %1930 = vmatprep.subr.mxu0 0.0
    %1931 = vmatpush1.msra.mxu0 0.0
    %1932 = vmatprep.subr.mxu0 0.0
    %1933 = vmatpush1.msra.mxu0 0.0
    %1934 = vmatprep.subr.mxu0 0.0
    %1935 = vmatpush1.msra.mxu0 0.0
    %1936 = vmatprep.subr.mxu0 0.0
    %1937 = vmatpush1.msra.mxu0 0.0
    %1938 = vmatprep.subr.mxu0 0.0
    %1939 = vmatpush1.msra.mxu0 0.0
    %1940 = vmatprep.subr.mxu0 0.0
    %1941 = vmatpush1.msra.mxu0 0.0
    %1942 = vmatprep.subr.mxu0 0.0
    %1943 = vmatpush1.msra.mxu0 0.0
    %1944 = vmatprep.subr.mxu0 0.0
    %1945 = vmatpush1.msra.mxu0 0.0
    %1946 = vmatprep.subr.mxu0 0.0
    %1947 = vmatpush1.msra.mxu0 0.0
    %1948 = vmatprep.subr.mxu0 0.0
    %1949 = vmatpush1.msra.mxu0 0.0
    %1950 = vmatprep.subr.mxu0 0.0
    %1951 = vmatpush1.msra.mxu0 0.0
    %1952 = vmatprep.subr.mxu0 0.0
    %1953 = vmatpush1.msra.mxu0 0.0
    %1954 = vmatprep.subr.mxu0 0.0
    %1955 = vmatpush1.msra.mxu0 0.0
    %1956 = vmatprep.subr.mxu0 0.0
    %1957 = vmatpush1.msra.mxu0 0.0
    %1958 = vmatprep.subr.mxu0 0.0
    %1959 = vmatpush1.msra.mxu0 0.0
    %1960 = vmatprep.subr.mxu0 0.0
    %1961 = vmatpush1.msra.mxu0 0.0
    %1962 = vmatprep.subr.mxu0 0.0
    %1963 = vmatpush1.msra.mxu0 0.0
    %1964 = vmatprep.subr.mxu0 0.0
    %1965 = vmatpush1.msra.mxu0 0.0
    %1966 = vmatprep.subr.mxu0 0.0
    %1967 = vmatpush1.msra.mxu0 0.0
    %1968 = vmatprep.subr.mxu0 0.0
    %1969 = vmatpush1.msra.mxu0 0.0
    %1970 = vmatprep.subr.mxu0 0.0
    %1971 = vmatpush1.msra.mxu0 0.0
    %1972 = vmatprep.subr.mxu0 0.0
    %1973 = vmatpush1.msra.mxu0 0.0
    %1974 = vmatprep.subr.mxu0 0.0
    %1975 = vmatpush1.msra.mxu0 0.0
    %1976 = vmatprep.subr.mxu0 0.0
    %1977 = vmatpush1.msra.mxu0 0.0
    %1978 = vmatprep.mubr.f32.mxu0 0.0
    %1979 = vmatmul.mubr.f32.gmra.mrb[0].mxu0 %v1903
    %v1980 = vpop.f32.mrb[0].mxu0
    %v1981 = vadd.f32 0.0, %v1980
    %v1982 = vpop.f32.mrb[0].mxu0
    %1983 = vmatprep.mubr.f32.mxu0 0.0
    %1984 = vmatmul.mubr.f32.gmra.mrb[0].mxu0 %v1906
    %v1985 = vpop.f32.mrb[0].mxu0
    %v1986 = vadd.f32 0.0, %v1985
    %v1987 = vpop.f32.mrb[0].mxu0
    %1988 = vmatprep.mubr.f32.mxu0 0.0
    %1989 = vmatmul.mubr.f32.gmra.mrb[0].mxu0 %v1909
    %v1990 = vpop.f32.mrb[0].mxu0
    %v1991 = vadd.f32 0.0, %v1990
    %v1992 = vpop.f32.mrb[0].mxu0
    %1993 = vmatprep.mubr.f32.mxu0 0.0
    %1994 = vmatmul.mubr.f32.gmra.mrb[0].mxu0 %v1912
    %v1995 = vpop.f32.mrb[0].mxu0
    %v1996 = vadd.f32 0.0, %v1995
    %v1997 = vpop.f32.mrb[0].mxu0
    %1998 = vdwg.mxu0
    %v1999 = vsel %vm643, %v1981, -inf
    %v2000 = vsel %vm643, %v1986, -inf
    %v2001 = vsel %vm643, %v1991, -inf
    %v2002 = vsel %vm647, %v1996, -inf
    %v2003 = vmax.f32 %v1999, %v2000
    %v2004 = vmax.f32 %v2001, %v2002
    %v2005 = vmax.f32 %v2003, %v2004
    %v2006 = vrot.slane %v2005, 4
    %v2007 = vmax.f32 %v2005, %v2006
    %v2008 = vrot.slane %v2007, 2
    %v2009 = vmax.f32 %v2007, %v2008
    %v2010 = vrot.slane %v2009, 1
    %v2011 = vmax.f32 %v2009, %v2010
    %v2012 = vsub.f32 %v1981, %v2011
    %v2013 = vsub.f32 %v1986, %v2011
    %v2014 = vsub.f32 %v1991, %v2011
    %v2015 = vsub.f32 %v1996, %v2011
    %v2016 = vmul.f32 %v2012, 1.442695
    %v2017 = vpow.pop %v2016
    %v2018 = vmul.f32 %v2013, 1.442695
    %v2019 = vpow.pop %v2018
    %v2020 = vmul.f32 %v2014, 1.442695
    %v2021 = vpow.pop %v2020
    %v2022 = vmul.f32 %v2015, 1.442695
    %v2023 = vpow.pop %v2022
    %2025 = vset.pattern.permute.xlu0 0
    %2026 = vperm.xlu0 %2025, %v2017
    %v2027 = vpop.permute.xlu0 %2026
    %2030 = vset.pattern.permute.xlu0 0
    %2031 = vperm.xlu0 %2030, %v2019
    %v2032 = vpop.permute.xlu0 %2031
    %2035 = vset.pattern.permute.xlu0 0
    %2036 = vperm.xlu0 %2035, %v2021
    %v2037 = vpop.permute.xlu0 %2036
    %2040 = vset.pattern.permute.xlu0 0
    %2041 = vperm.xlu0 %2040, %v2023
    %v2042 = vpop.permute.xlu0 %2041
    %v2044 = vmul.f32 %v2027, %v61
    %v2045 = vmul.f32 %v2032, %v62
    %v2046 = vmul.f32 %v2037, %v63
    %v2047 = vmul.f32 %v2042, %v64
    %v2049 = vsel %vm453, %v2047, 0
    %2051 = vmatprep.subr.mxu0 0.0
    %2052 = vmatpush1.msra.mxu0 %v2044
    %2053 = vmatprep.subr.mxu0 0.0
    %2054 = vmatpush1.msra.mxu0 %v2045
    %2055 = vmatprep.subr.mxu0 0.0
    %2056 = vmatpush1.msra.mxu0 %v2046
    %2057 = vmatprep.subr.mxu0 0.0
    %2058 = vmatpush1.msra.mxu0 %v2049
    %2059 = vmatprep.subr.mxu0 0.0
    %2060 = vmatpush1.msra.mxu0 0.0
    %2061 = vmatprep.subr.mxu0 0.0
    %2062 = vmatpush1.msra.mxu0 0.0
    %2063 = vmatprep.subr.mxu0 0.0
    %2064 = vmatpush1.msra.mxu0 0.0
    %2065 = vmatprep.subr.mxu0 0.0
    %2066 = vmatpush1.msra.mxu0 0.0
    %2067 = vmatprep.subr.mxu0 0.0
    %2068 = vmatpush1.msra.mxu0 0.0
    %2069 = vmatprep.subr.mxu0 0.0
    %2070 = vmatpush1.msra.mxu0 0.0
    %2071 = vmatprep.subr.mxu0 0.0
    %2072 = vmatpush1.msra.mxu0 0.0
    %2073 = vmatprep.subr.mxu0 0.0
    %2074 = vmatpush1.msra.mxu0 0.0
    %2075 = vmatprep.subr.mxu0 0.0
    %2076 = vmatpush1.msra.mxu0 0.0
    %2077 = vmatprep.subr.mxu0 0.0
    %2078 = vmatpush1.msra.mxu0 0.0
    %2079 = vmatprep.subr.mxu0 0.0
    %2080 = vmatpush1.msra.mxu0 0.0
    %2081 = vmatprep.subr.mxu0 0.0
    %2082 = vmatpush1.msra.mxu0 0.0
    %2083 = vmatprep.subr.mxu0 0.0
    %2084 = vmatpush1.msra.mxu0 0.0
    %2085 = vmatprep.subr.mxu0 0.0
    %2086 = vmatpush1.msra.mxu0 0.0
    %2087 = vmatprep.subr.mxu0 0.0
    %2088 = vmatpush1.msra.mxu0 0.0
    %2089 = vmatprep.subr.mxu0 0.0
    %2090 = vmatpush1.msra.mxu0 0.0
    %2091 = vmatprep.subr.mxu0 0.0
    %2092 = vmatpush1.msra.mxu0 0.0
    %2093 = vmatprep.subr.mxu0 0.0
    %2094 = vmatpush1.msra.mxu0 0.0
    %2095 = vmatprep.subr.mxu0 0.0
    %2096 = vmatpush1.msra.mxu0 0.0
    %2097 = vmatprep.subr.mxu0 0.0
    %2098 = vmatpush1.msra.mxu0 0.0
    %2099 = vmatprep.subr.mxu0 0.0
    %2100 = vmatpush1.msra.mxu0 0.0
    %2101 = vmatprep.subr.mxu0 0.0
    %2102 = vmatpush1.msra.mxu0 0.0
    %2103 = vmatprep.subr.mxu0 0.0
    %2104 = vmatpush1.msra.mxu0 0.0
    %2105 = vmatprep.subr.mxu0 0.0
    %2106 = vmatpush1.msra.mxu0 0.0
    %2107 = vmatprep.subr.mxu0 0.0
    %2108 = vmatpush1.msra.mxu0 0.0
    %2109 = vmatprep.subr.mxu0 0.0
    %2110 = vmatpush1.msra.mxu0 0.0
    %2111 = vmatprep.subr.mxu0 0.0
    %2112 = vmatpush1.msra.mxu0 0.0
    %2113 = vmatprep.subr.mxu0 0.0
    %2114 = vmatpush1.msra.mxu0 0.0
    %2115 = vmatprep.mubr.f32.mxu0 0.0
    %2116 = vmatmul.mubr.f32.gmra.mrb[0].mxu0 %v696
    %v2117 = vpop.f32.mrb[0].mxu0
    %v2118 = vadd.f32 0.0, %v2117
    %v2119 = vpop.f32.mrb[0].mxu0
    %2120 = vdwg.mxu0
    %v2121 = vrcp.pop %v2118
    %2123 = vset.pattern.permute.xlu0 16
    %2124 = vperm.xlu0 %2123, %v2121
    %v2125 = vpop.permute.xlu0 %2124
    %v2127 = vmul.f32 %v2118, %v2125
    %v2129 = vsel %vm293, %v2127, 0
    %2131 = vmatprep.subr.mxu0 0.0
    %2132 = vmatpush1.msra.mxu0 %v778
    %2133 = vmatprep.subr.mxu0 0.0
    %2134 = vmatpush1.msra.mxu0 %v779
    %2135 = vmatprep.subr.mxu0 0.0
    %2136 = vmatpush1.msra.mxu0 0.0
    %2137 = vmatprep.subr.mxu0 0.0
    %2138 = vmatpush1.msra.mxu0 0.0
    %2139 = vmatprep.subr.mxu0 0.0
    %2140 = vmatpush1.msra.mxu0 0.0
    %2141 = vmatprep.subr.mxu0 0.0
    %2142 = vmatpush1.msra.mxu0 0.0
    %2143 = vmatprep.subr.mxu0 0.0
    %2144 = vmatpush1.msra.mxu0 0.0
    %2145 = vmatprep.subr.mxu0 0.0
    %2146 = vmatpush1.msra.mxu0 0.0
    %2147 = vmatprep.subr.mxu0 0.0
    %2148 = vmatpush1.msra.mxu0 0.0
    %2149 = vmatprep.subr.mxu0 0.0
    %2150 = vmatpush1.msra.mxu0 0.0
    %2151 = vmatprep.subr.mxu0 0.0
    %2152 = vmatpush1.msra.mxu0 0.0
    %2153 = vmatprep.subr.mxu0 0.0
    %2154 = vmatpush1.msra.mxu0 0.0
    %2155 = vmatprep.subr.mxu0 0.0
    %2156 = vmatpush1.msra.mxu0 0.0
    %2157 = vmatprep.subr.mxu0 0.0
    %2158 = vmatpush1.msra.mxu0 0.0
    %2159 = vmatprep.subr.mxu0 0.0
    %2160 = vmatpush1.msra.mxu0 0.0
    %2161 = vmatprep.subr.mxu0 0.0
    %2162 = vmatpush1.msra.mxu0 0.0
    %2163 = vmatprep.subr.mxu0 0.0
    %2164 = vmatpush1.msra.mxu0 0.0
    %2165 = vmatprep.subr.mxu0 0.0
    %2166 = vmatpush1.msra.mxu0 0.0
    %2167 = vmatprep.subr.mxu0 0.0
    %2168 = vmatpush1.msra.mxu0 0.0
    %2169 = vmatprep.subr.mxu0 0.0
    %2170 = vmatpush1.msra.mxu0 0.0
    %2171 = vmatprep.subr.mxu0 0.0
    %2172 = vmatpush1.msra.mxu0 0.0
    %2173 = vmatprep.subr.mxu0 0.0
    %2174 = vmatpush1.msra.mxu0 0.0
    %2175 = vmatprep.subr.mxu0 0.0
    %2176 = vmatpush1.msra.mxu0 0.0
    %2177 = vmatprep.subr.mxu0 0.0
    %2178 = vmatpush1.msra.mxu0 0.0
    %2179 = vmatprep.subr.mxu0 0.0
    %2180 = vmatpush1.msra.mxu0 0.0
    %2181 = vmatprep.subr.mxu0 0.0
    %2182 = vmatpush1.msra.mxu0 0.0
    %2183 = vmatprep.subr.mxu0 0.0
    %2184 = vmatpush1.msra.mxu0 0.0
    %2185 = vmatprep.subr.mxu0 0.0
    %2186 = vmatpush1.msra.mxu0 0.0
    %2187 = vmatprep.subr.mxu0 0.0
    %2188 = vmatpush1.msra.mxu0 0.0
    %2189 = vmatprep.subr.mxu0 0.0
    %2190 = vmatpush1.msra.mxu0 0.0
    %2191 = vmatprep.subr.mxu0 0.0
    %2192 = vmatpush1.msra.mxu0 0.0
    %2193 = vmatprep.subr.mxu0 0.0
    %2194 = vmatpush1.msra.mxu0 0.0
    %2195 = vmatprep.mubr.f32.mxu0 0.0
    %2196 = vmatmul.mubr.f32.gmra.mrb[0].mxu0 %v2129
    %v2197 = vpop.f32.mrb[0].mxu0
    %v2198 = vadd.f32 %v274, %v2197
    %v2199 = vpop.f32.mrb[0].mxu0
    %2200 = vdwg.mxu0
    %v2201 = vadd.f32 %v2198, %v1807
    %v2202 = vxor.u32 %v2201, 2147483648
    %v2203 = vmul.f32 %v2202, 1.442695
    %v2204 = vpow.pop %v2203
    %v2205 = vadd.f32 %v2204, 1.0
    %v2206 = vrcp.pop %v2205
    %v2207 = vmul.f32 1.0, %v2206
    %v2208 = vtanh.pop %v2201
    %v2209 = vmul.f32 %v2207, %v1555
    %2211 = vrot.lane.b32.xlu0 %v2208, 96
    %v2212 = vpop.permute.xlu0 %2211
    %v2214 = vmul.f32 %v2207, %v2212
    %2216 = vrot.lane.b32.xlu0 %v2214, 16
    %v2217 = vpop.permute.xlu0 %2216
    %v2219 = vadd.f32 %v2209, %v2217
    %v2220 = vtanh.pop %v2219
    %2222 = vrot.lane.b32.xlu0 %v2220, 32
    %v2223 = vpop.permute.xlu0 %2222
    %v2225 = vmul.f32 %v2207, %v2223
    %2227 = vrot.lane.b32.xlu0 %v2225, 80
    %v2228 = vpop.permute.xlu0 %2227
    %2229 = vrot.lane.b32.xlu0 %v1737, 112
    %v2230 = vpop.permute.xlu0 %2229
    %v2232 = vsel %vm293, %v2228, 0
    %2234 = vmatprep.subr.mxu0 0.0
    %2235 = vmatpush1.msra.mxu0 %v882
    %2236 = vmatprep.subr.mxu0 0.0
    %2237 = vmatpush1.msra.mxu0 %v883
    %2238 = vmatprep.subr.mxu0 0.0
    %2239 = vmatpush1.msra.mxu0 0.0
    %2240 = vmatprep.subr.mxu0 0.0
    %2241 = vmatpush1.msra.mxu0 0.0
    %2242 = vmatprep.subr.mxu0 0.0
    %2243 = vmatpush1.msra.mxu0 0.0
    %2244 = vmatprep.subr.mxu0 0.0
    %2245 = vmatpush1.msra.mxu0 0.0
    %2246 = vmatprep.subr.mxu0 0.0
    %2247 = vmatpush1.msra.mxu0 0.0
    %2248 = vmatprep.subr.mxu0 0.0
    %2249 = vmatpush1.msra.mxu0 0.0
    %2250 = vmatprep.subr.mxu0 0.0
    %2251 = vmatpush1.msra.mxu0 0.0
    %2252 = vmatprep.subr.mxu0 0.0
    %2253 = vmatpush1.msra.mxu0 0.0
    %2254 = vmatprep.subr.mxu0 0.0
    %2255 = vmatpush1.msra.mxu0 0.0
    %2256 = vmatprep.subr.mxu0 0.0
    %2257 = vmatpush1.msra.mxu0 0.0
    %2258 = vmatprep.subr.mxu0 0.0
    %2259 = vmatpush1.msra.mxu0 0.0
    %2260 = vmatprep.subr.mxu0 0.0
    %2261 = vmatpush1.msra.mxu0 0.0
    %2262 = vmatprep.subr.mxu0 0.0
    %2263 = vmatpush1.msra.mxu0 0.0
    %2264 = vmatprep.subr.mxu0 0.0
    %2265 = vmatpush1.msra.mxu0 0.0
    %2266 = vmatprep.subr.mxu0 0.0
    %2267 = vmatpush1.msra.mxu0 0.0
    %2268 = vmatprep.subr.mxu0 0.0
    %2269 = vmatpush1.msra.mxu0 0.0
    %2270 = vmatprep.subr.mxu0 0.0
    %2271 = vmatpush1.msra.mxu0 0.0
    %2272 = vmatprep.subr.mxu0 0.0
    %2273 = vmatpush1.msra.mxu0 0.0
    %2274 = vmatprep.subr.mxu0 0.0
    %2275 = vmatpush1.msra.mxu0 0.0
    %2276 = vmatprep.subr.mxu0 0.0
    %2277 = vmatpush1.msra.mxu0 0.0
    %2278 = vmatprep.subr.mxu0 0.0
    %2279 = vmatpush1.msra.mxu0 0.0
    %2280 = vmatprep.subr.mxu0 0.0
    %2281 = vmatpush1.msra.mxu0 0.0
    %2282 = vmatprep.subr.mxu0 0.0
    %2283 = vmatpush1.msra.mxu0 0.0
    %2284 = vmatprep.subr.mxu0 0.0
    %2285 = vmatpush1.msra.mxu0 0.0
    %2286 = vmatprep.subr.mxu0 0.0
    %2287 = vmatpush1.msra.mxu0 0.0
    %2288 = vmatprep.subr.mxu0 0.0
    %2289 = vmatpush1.msra.mxu0 0.0
    %2290 = vmatprep.subr.mxu0 0.0
    %2291 = vmatpush1.msra.mxu0 0.0
    %2292 = vmatprep.subr.mxu0 0.0
    %2293 = vmatpush1.msra.mxu0 0.0
    %2294 = vmatprep.subr.mxu0 0.0
    %2295 = vmatpush1.msra.mxu0 0.0
    %2296 = vmatprep.subr.mxu0 0.0
    %2297 = vmatpush1.msra.mxu0 0.0
    %2298 = vmatprep.mubr.f32.mxu0 0.0
    %2299 = vmatmul.mubr.f32.gmra.mrb[0].mxu0 %v2232
    %v2300 = vpop.f32.mrb[0].mxu0
    %v2301 = vadd.f32 %v2230, %v2300
    %v2302 = vpop.f32.mrb[0].mxu0
    %2303 = vdwg.mxu0
    %v2304 = vadd.f32 %v2301, %v967
    %v2305 = vxor.u32 %v2304, 2147483648
    %v2306 = vmul.f32 %v2305, 1.442695
    %v2307 = vpow.pop %v2306
    %v2308 = vadd.f32 %v2307, 1.0
    %v2309 = vrcp.pop %v2308
    %v2310 = vmul.f32 1.0, %v2309
    %v2311 = vtanh.pop %v2304
    %v2312 = vmul.f32 %v2310, %v1658
    %2314 = vrot.lane.b32.xlu0 %v2311, 96
    %v2315 = vpop.permute.xlu0 %2314
    %v2317 = vmul.f32 %v2310, %v2315
    %2319 = vrot.lane.b32.xlu0 %v2317, 16
    %v2320 = vpop.permute.xlu0 %2319
    %v2322 = vadd.f32 %v2312, %v2320
    %v2323 = vtanh.pop %v2322
    %2325 = vrot.lane.b32.xlu0 %v2323, 32
    %v2326 = vpop.permute.xlu0 %2325
    %v2328 = vmul.f32 %v2310, %v2326
    %2330 = vrot.lane.b32.xlu0 %v2328, 80
    %v2331 = vpop.permute.xlu0 %2330
    %v2332 = vsel %vm293, %v2331, 0
    %2334 = vmatprep.subr.mxu0 0.0
    %2335 = vmatpush1.msra.mxu0 %v289
    %2336 = vmatprep.subr.mxu0 0.0
    %2337 = vmatpush1.msra.mxu0 %v290
    %2338 = vmatprep.subr.mxu0 0.0
    %2339 = vmatpush1.msra.mxu0 0.0
    %2340 = vmatprep.subr.mxu0 0.0
    %2341 = vmatpush1.msra.mxu0 0.0
    %2342 = vmatprep.subr.mxu0 0.0
    %2343 = vmatpush1.msra.mxu0 0.0
    %2344 = vmatprep.subr.mxu0 0.0
    %2345 = vmatpush1.msra.mxu0 0.0
    %2346 = vmatprep.subr.mxu0 0.0
    %2347 = vmatpush1.msra.mxu0 0.0
    %2348 = vmatprep.subr.mxu0 0.0
    %2349 = vmatpush1.msra.mxu0 0.0
    %2350 = vmatprep.subr.mxu0 0.0
    %2351 = vmatpush1.msra.mxu0 0.0
    %2352 = vmatprep.subr.mxu0 0.0
    %2353 = vmatpush1.msra.mxu0 0.0
    %2354 = vmatprep.subr.mxu0 0.0
    %2355 = vmatpush1.msra.mxu0 0.0
    %2356 = vmatprep.subr.mxu0 0.0
    %2357 = vmatpush1.msra.mxu0 0.0
    %2358 = vmatprep.subr.mxu0 0.0
    %2359 = vmatpush1.msra.mxu0 0.0
    %2360 = vmatprep.subr.mxu0 0.0
    %2361 = vmatpush1.msra.mxu0 0.0
    %2362 = vmatprep.subr.mxu0 0.0
    %2363 = vmatpush1.msra.mxu0 0.0
    %2364 = vmatprep.subr.mxu0 0.0
    %2365 = vmatpush1.msra.mxu0 0.0
    %2366 = vmatprep.subr.mxu0 0.0
    %2367 = vmatpush1.msra.mxu0 0.0
    %2368 = vmatprep.subr.mxu0 0.0
    %2369 = vmatpush1.msra.mxu0 0.0
    %2370 = vmatprep.subr.mxu0 0.0
    %2371 = vmatpush1.msra.mxu0 0.0
    %2372 = vmatprep.subr.mxu0 0.0
    %2373 = vmatpush1.msra.mxu0 0.0
    %2374 = vmatprep.subr.mxu0 0.0
    %2375 = vmatpush1.msra.mxu0 0.0
    %2376 = vmatprep.subr.mxu0 0.0
    %2377 = vmatpush1.msra.mxu0 0.0
    %2378 = vmatprep.subr.mxu0 0.0
    %2379 = vmatpush1.msra.mxu0 0.0
    %2380 = vmatprep.subr.mxu0 0.0
    %2381 = vmatpush1.msra.mxu0 0.0
    %2382 = vmatprep.subr.mxu0 0.0
    %2383 = vmatpush1.msra.mxu0 0.0
    %2384 = vmatprep.subr.mxu0 0.0
    %2385 = vmatpush1.msra.mxu0 0.0
    %2386 = vmatprep.subr.mxu0 0.0
    %2387 = vmatpush1.msra.mxu0 0.0
    %2388 = vmatprep.subr.mxu0 0.0
    %2389 = vmatpush1.msra.mxu0 0.0
    %2390 = vmatprep.subr.mxu0 0.0
    %2391 = vmatpush1.msra.mxu0 0.0
    %2392 = vmatprep.subr.mxu0 0.0
    %2393 = vmatpush1.msra.mxu0 0.0
    %2394 = vmatprep.subr.mxu0 0.0
    %2395 = vmatpush1.msra.mxu0 0.0
    %2396 = vmatprep.subr.mxu0 0.0
    %2397 = vmatpush1.msra.mxu0 0.0
    %2398 = vmatprep.mubr.f32.mxu0 0.0
    %2399 = vmatmul.mubr.f32.gmra.mrb[0].mxu0 %v2332
    %v2400 = vpop.f32.mrb[0].mxu0
    %v2401 = vadd.f32 0.0, %v2400
    %v2402 = vpop.f32.mrb[0].mxu0
    %2403 = vdwg.mxu0
    %2404 = vmatprep.subr.mxu0 0.0
    %2405 = vmatpush1.msra.mxu0 %v366
    %2406 = vmatprep.subr.mxu0 0.0
    %2407 = vmatpush1.msra.mxu0 %v367
    %2408 = vmatprep.subr.mxu0 0.0
    %2409 = vmatpush1.msra.mxu0 0.0
    %2410 = vmatprep.subr.mxu0 0.0
    %2411 = vmatpush1.msra.mxu0 0.0
    %2412 = vmatprep.subr.mxu0 0.0
    %2413 = vmatpush1.msra.mxu0 0.0
    %2414 = vmatprep.subr.mxu0 0.0
    %2415 = vmatpush1.msra.mxu0 0.0
    %2416 = vmatprep.subr.mxu0 0.0
    %2417 = vmatpush1.msra.mxu0 0.0
    %2418 = vmatprep.subr.mxu0 0.0
    %2419 = vmatpush1.msra.mxu0 0.0
    %2420 = vmatprep.subr.mxu0 0.0
    %2421 = vmatpush1.msra.mxu0 0.0
    %2422 = vmatprep.subr.mxu0 0.0
    %2423 = vmatpush1.msra.mxu0 0.0
    %2424 = vmatprep.subr.mxu0 0.0
    %2425 = vmatpush1.msra.mxu0 0.0
    %2426 = vmatprep.subr.mxu0 0.0
    %2427 = vmatpush1.msra.mxu0 0.0
    %2428 = vmatprep.subr.mxu0 0.0
    %2429 = vmatpush1.msra.mxu0 0.0
    %2430 = vmatprep.subr.mxu0 0.0
    %2431 = vmatpush1.msra.mxu0 0.0
    %2432 = vmatprep.subr.mxu0 0.0
    %2433 = vmatpush1.msra.mxu0 0.0
    %2434 = vmatprep.subr.mxu0 0.0
    %2435 = vmatpush1.msra.mxu0 0.0
    %2436 = vmatprep.subr.mxu0 0.0
    %2437 = vmatpush1.msra.mxu0 0.0
    %2438 = vmatprep.subr.mxu0 0.0
    %2439 = vmatpush1.msra.mxu0 0.0
    %2440 = vmatprep.subr.mxu0 0.0
    %2441 = vmatpush1.msra.mxu0 0.0
    %2442 = vmatprep.subr.mxu0 0.0
    %2443 = vmatpush1.msra.mxu0 0.0
    %2444 = vmatprep.subr.mxu0 0.0
    %2445 = vmatpush1.msra.mxu0 0.0
    %2446 = vmatprep.subr.mxu0 0.0
    %2447 = vmatpush1.msra.mxu0 0.0
    %2448 = vmatprep.subr.mxu0 0.0
    %2449 = vmatpush1.msra.mxu0 0.0
    %2450 = vmatprep.subr.mxu0 0.0
    %2451 = vmatpush1.msra.mxu0 0.0
    %2452 = vmatprep.subr.mxu0 0.0
    %2453 = vmatpush1.msra.mxu0 0.0
    %2454 = vmatprep.subr.mxu0 0.0
    %2455 = vmatpush1.msra.mxu0 0.0
    %2456 = vmatprep.subr.mxu0 0.0
    %2457 = vmatpush1.msra.mxu0 0.0
    %2458 = vmatprep.subr.mxu0 0.0
    %2459 = vmatpush1.msra.mxu0 0.0
    %2460 = vmatprep.subr.mxu0 0.0
    %2461 = vmatpush1.msra.mxu0 0.0
    %2462 = vmatprep.subr.mxu0 0.0
    %2463 = vmatpush1.msra.mxu0 0.0
    %2464 = vmatprep.subr.mxu0 0.0
    %2465 = vmatpush1.msra.mxu0 0.0
    %2466 = vmatprep.subr.mxu0 0.0
    %2467 = vmatpush1.msra.mxu0 0.0
    %2468 = vmatprep.mubr.f32.mxu0 0.0
    %2469 = vmatmul.mubr.f32.gmra.mrb[0].mxu0 %v2232
    %v2470 = vpop.f32.mrb[0].mxu0
    %v2471 = vadd.f32 0.0, %v2470
    %v2472 = vpop.f32.mrb[0].mxu0
    %2473 = vdwg.mxu0
    %v2475 = vsel %vm453, %v2401, 0
    %2477 = vmatprep.subr.mxu0 0.0
    %2478 = vmatpush1.msra.mxu0 %v2475
    %2479 = vmatprep.subr.mxu0 0.0
    %2480 = vmatpush1.msra.mxu0 0.0
    %2481 = vmatprep.subr.mxu0 0.0
    %2482 = vmatpush1.msra.mxu0 0.0
    %2483 = vmatprep.subr.mxu0 0.0
    %2484 = vmatpush1.msra.mxu0 0.0
    %2485 = vmatprep.subr.mxu0 0.0
    %2486 = vmatpush1.msra.mxu0 0.0
    %2487 = vmatprep.subr.mxu0 0.0
    %2488 = vmatpush1.msra.mxu0 0.0
    %2489 = vmatprep.subr.mxu0 0.0
    %2490 = vmatpush1.msra.mxu0 0.0
    %2491 = vmatprep.subr.mxu0 0.0
    %2492 = vmatpush1.msra.mxu0 0.0
    %2493 = vmatprep.subr.mxu0 0.0
    %2494 = vmatpush1.msra.mxu0 0.0
    %2495 = vmatprep.subr.mxu0 0.0
    %2496 = vmatpush1.msra.mxu0 0.0
    %2497 = vmatprep.subr.mxu0 0.0
    %2498 = vmatpush1.msra.mxu0 0.0
    %2499 = vmatprep.subr.mxu0 0.0
    %2500 = vmatpush1.msra.mxu0 0.0
    %2501 = vmatprep.subr.mxu0 0.0
    %2502 = vmatpush1.msra.mxu0 0.0
    %2503 = vmatprep.subr.mxu0 0.0
    %2504 = vmatpush1.msra.mxu0 0.0
    %2505 = vmatprep.subr.mxu0 0.0
    %2506 = vmatpush1.msra.mxu0 0.0
    %2507 = vmatprep.subr.mxu0 0.0
    %2508 = vmatpush1.msra.mxu0 0.0
    %2509 = vmatprep.subr.mxu0 0.0
    %2510 = vmatpush1.msra.mxu0 0.0
    %2511 = vmatprep.subr.mxu0 0.0
    %2512 = vmatpush1.msra.mxu0 0.0
    %2513 = vmatprep.subr.mxu0 0.0
    %2514 = vmatpush1.msra.mxu0 0.0
    %2515 = vmatprep.subr.mxu0 0.0
    %2516 = vmatpush1.msra.mxu0 0.0
    %2517 = vmatprep.subr.mxu0 0.0
    %2518 = vmatpush1.msra.mxu0 0.0
    %2519 = vmatprep.subr.mxu0 0.0
    %2520 = vmatpush1.msra.mxu0 0.0
    %2521 = vmatprep.subr.mxu0 0.0
    %2522 = vmatpush1.msra.mxu0 0.0
    %2523 = vmatprep.subr.mxu0 0.0
    %2524 = vmatpush1.msra.mxu0 0.0
    %2525 = vmatprep.subr.mxu0 0.0
    %2526 = vmatpush1.msra.mxu0 0.0
    %2527 = vmatprep.subr.mxu0 0.0
    %2528 = vmatpush1.msra.mxu0 0.0
    %2529 = vmatprep.subr.mxu0 0.0
    %2530 = vmatpush1.msra.mxu0 0.0
    %2531 = vmatprep.subr.mxu0 0.0
    %2532 = vmatpush1.msra.mxu0 0.0
    %2533 = vmatprep.subr.mxu0 0.0
    %2534 = vmatpush1.msra.mxu0 0.0
    %2535 = vmatprep.subr.mxu0 0.0
    %2536 = vmatpush1.msra.mxu0 0.0
    %2537 = vmatprep.subr.mxu0 0.0
    %2538 = vmatpush1.msra.mxu0 0.0
    %2539 = vmatprep.subr.mxu0 0.0
    %2540 = vmatpush1.msra.mxu0 0.0
    %2541 = vmatprep.mubr.f32.mxu0 0.0
    %2542 = vmatmul.mubr.f32.gmra.mrb[0].mxu0 %v442
    %v2543 = vpop.f32.mrb[0].mxu0
    %v2544 = vadd.f32 %v152, %v2543
    %v2545 = vpop.f32.mrb[0].mxu0
    %2546 = vmatprep.mubr.f32.mxu0 0.0
    %2547 = vmatmul.mubr.f32.gmra.mrb[0].mxu0 %v445
    %v2548 = vpop.f32.mrb[0].mxu0
    %v2549 = vadd.f32 %v157, %v2548
    %v2550 = vpop.f32.mrb[0].mxu0
    %2551 = vmatprep.mubr.f32.mxu0 0.0
    %2552 = vmatmul.mubr.f32.gmra.mrb[0].mxu0 %v448
    %v2553 = vpop.f32.mrb[0].mxu0
    %v2554 = vadd.f32 %v162, %v2553
    %v2555 = vpop.f32.mrb[0].mxu0
    %2556 = vmatprep.mubr.f32.mxu0 0.0
    %2557 = vmatmul.mubr.f32.gmra.mrb[0].mxu0 %v451
    %v2558 = vpop.f32.mrb[0].mxu0
    %v2559 = vadd.f32 %v167, %v2558
    %v2560 = vpop.f32.mrb[0].mxu0
    %2561 = vdwg.mxu0
    %v2562 = vtanh.pop %v2544
    %v2563 = vtanh.pop %v2549
    %v2564 = vtanh.pop %v2554
    %v2565 = vtanh.pop %v2559
    %v2567 = vsel %vm293, %v2562, 0
    %v2570 = vsel %vm293, %v2563, 0
    %v2573 = vsel %vm293, %v2564, 0
    %v2576 = vsel %vm293, %v2565, 0
    %2578 = vmatprep.subr.mxu0 0.0
    %2579 = vmatpush1.msra.mxu0 %v175
    %2580 = vmatprep.subr.mxu0 0.0
    %2581 = vmatpush1.msra.mxu0 %v176
    %2582 = vmatprep.subr.mxu0 0.0
    %2583 = vmatpush1.msra.mxu0 0.0
    %2584 = vmatprep.subr.mxu0 0.0
    %2585 = vmatpush1.msra.mxu0 0.0
    %2586 = vmatprep.subr.mxu0 0.0
    %2587 = vmatpush1.msra.mxu0 0.0
    %2588 = vmatprep.subr.mxu0 0.0
    %2589 = vmatpush1.msra.mxu0 0.0
    %2590 = vmatprep.subr.mxu0 0.0
    %2591 = vmatpush1.msra.mxu0 0.0
    %2592 = vmatprep.subr.mxu0 0.0
    %2593 = vmatpush1.msra.mxu0 0.0
    %2594 = vmatprep.subr.mxu0 0.0
    %2595 = vmatpush1.msra.mxu0 0.0
    %2596 = vmatprep.subr.mxu0 0.0
    %2597 = vmatpush1.msra.mxu0 0.0
    %2598 = vmatprep.subr.mxu0 0.0
    %2599 = vmatpush1.msra.mxu0 0.0
    %2600 = vmatprep.subr.mxu0 0.0
    %2601 = vmatpush1.msra.mxu0 0.0
    %2602 = vmatprep.subr.mxu0 0.0
    %2603 = vmatpush1.msra.mxu0 0.0
    %2604 = vmatprep.subr.mxu0 0.0
    %2605 = vmatpush1.msra.mxu0 0.0
    %2606 = vmatprep.subr.mxu0 0.0
    %2607 = vmatpush1.msra.mxu0 0.0
    %2608 = vmatprep.subr.mxu0 0.0
    %2609 = vmatpush1.msra.mxu0 0.0
    %2610 = vmatprep.subr.mxu0 0.0
    %2611 = vmatpush1.msra.mxu0 0.0
    %2612 = vmatprep.subr.mxu0 0.0
    %2613 = vmatpush1.msra.mxu0 0.0
    %2614 = vmatprep.subr.mxu0 0.0
    %2615 = vmatpush1.msra.mxu0 0.0
    %2616 = vmatprep.subr.mxu0 0.0
    %2617 = vmatpush1.msra.mxu0 0.0
    %2618 = vmatprep.subr.mxu0 0.0
    %2619 = vmatpush1.msra.mxu0 0.0
    %2620 = vmatprep.subr.mxu0 0.0
    %2621 = vmatpush1.msra.mxu0 0.0
    %2622 = vmatprep.subr.mxu0 0.0
    %2623 = vmatpush1.msra.mxu0 0.0
    %2624 = vmatprep.subr.mxu0 0.0
    %2625 = vmatpush1.msra.mxu0 0.0
    %2626 = vmatprep.subr.mxu0 0.0
    %2627 = vmatpush1.msra.mxu0 0.0
    %2628 = vmatprep.subr.mxu0 0.0
    %2629 = vmatpush1.msra.mxu0 0.0
    %2630 = vmatprep.subr.mxu0 0.0
    %2631 = vmatpush1.msra.mxu0 0.0
    %2632 = vmatprep.subr.mxu0 0.0
    %2633 = vmatpush1.msra.mxu0 0.0
    %2634 = vmatprep.subr.mxu0 0.0
    %2635 = vmatpush1.msra.mxu0 0.0
    %2636 = vmatprep.subr.mxu0 0.0
    %2637 = vmatpush1.msra.mxu0 0.0
    %2638 = vmatprep.subr.mxu0 0.0
    %2639 = vmatpush1.msra.mxu0 0.0
    %2640 = vmatprep.subr.mxu0 0.0
    %2641 = vmatpush1.msra.mxu0 0.0
    %2642 = vmatprep.mubr.f32.mxu0 0.0
    %2643 = vmatmul.mubr.f32.gmra.mrb[0].mxu0 %v2567
    %v2644 = vpop.f32.mrb[0].mxu0
    %v2645 = vadd.f32 0.0, %v2644
    %v2646 = vpop.f32.mrb[0].mxu0
    %2647 = vmatprep.mubr.f32.mxu0 0.0
    %2648 = vmatmul.mubr.f32.gmra.mrb[0].mxu0 %v2570
    %v2649 = vpop.f32.mrb[0].mxu0
    %v2650 = vadd.f32 0.0, %v2649
    %v2651 = vpop.f32.mrb[0].mxu0
    %2652 = vmatprep.mubr.f32.mxu0 0.0
    %2653 = vmatmul.mubr.f32.gmra.mrb[0].mxu0 %v2573
    %v2654 = vpop.f32.mrb[0].mxu0
    %v2655 = vadd.f32 0.0, %v2654
    %v2656 = vpop.f32.mrb[0].mxu0
    %2657 = vmatprep.mubr.f32.mxu0 0.0
    %2658 = vmatmul.mubr.f32.gmra.mrb[0].mxu0 %v2576
    %v2659 = vpop.f32.mrb[0].mxu0
    %v2660 = vadd.f32 0.0, %v2659
    %v2661 = vpop.f32.mrb[0].mxu0
    %2662 = vdwg.mxu0
    %v2663 = vsel %vm643, %v2645, -inf
    %v2664 = vsel %vm643, %v2650, -inf
    %v2665 = vsel %vm643, %v2655, -inf
    %v2666 = vsel %vm647, %v2660, -inf
    %v2667 = vmax.f32 %v2663, %v2664
    %v2668 = vmax.f32 %v2665, %v2666
    %v2669 = vmax.f32 %v2667, %v2668
    %v2670 = vrot.slane %v2669, 4
    %v2671 = vmax.f32 %v2669, %v2670
    %v2672 = vrot.slane %v2671, 2
    %v2673 = vmax.f32 %v2671, %v2672
    %v2674 = vrot.slane %v2673, 1
    %v2675 = vmax.f32 %v2673, %v2674
    %v2676 = vsub.f32 %v2645, %v2675
    %v2677 = vsub.f32 %v2650, %v2675
    %v2678 = vsub.f32 %v2655, %v2675
    %v2679 = vsub.f32 %v2660, %v2675
    %v2680 = vmul.f32 %v2676, 1.442695
    %v2681 = vpow.pop %v2680
    %v2682 = vmul.f32 %v2677, 1.442695
    %v2683 = vpow.pop %v2682
    %v2684 = vmul.f32 %v2678, 1.442695
    %v2685 = vpow.pop %v2684
    %v2686 = vmul.f32 %v2679, 1.442695
    %v2687 = vpow.pop %v2686
    %2689 = vset.pattern.permute.xlu0 0
    %2690 = vperm.xlu0 %2689, %v2681
    %v2691 = vpop.permute.xlu0 %2690
    %2694 = vset.pattern.permute.xlu0 0
    %2695 = vperm.xlu0 %2694, %v2683
    %v2696 = vpop.permute.xlu0 %2695
    %2699 = vset.pattern.permute.xlu0 0
    %2700 = vperm.xlu0 %2699, %v2685
    %v2701 = vpop.permute.xlu0 %2700
    %2704 = vset.pattern.permute.xlu0 0
    %2705 = vperm.xlu0 %2704, %v2687
    %v2706 = vpop.permute.xlu0 %2705
    %v2708 = vmul.f32 %v2691, %v61
    %v2709 = vmul.f32 %v2696, %v62
    %v2710 = vmul.f32 %v2701, %v63
    %v2711 = vmul.f32 %v2706, %v64
    %v2713 = vsel %vm453, %v2711, 0
    %2715 = vmatprep.subr.mxu0 0.0
    %2716 = vmatpush1.msra.mxu0 %v2708
    %2717 = vmatprep.subr.mxu0 0.0
    %2718 = vmatpush1.msra.mxu0 %v2709
    %2719 = vmatprep.subr.mxu0 0.0
    %2720 = vmatpush1.msra.mxu0 %v2710
    %2721 = vmatprep.subr.mxu0 0.0
    %2722 = vmatpush1.msra.mxu0 %v2713
    %2723 = vmatprep.subr.mxu0 0.0
    %2724 = vmatpush1.msra.mxu0 0.0
    %2725 = vmatprep.subr.mxu0 0.0
    %2726 = vmatpush1.msra.mxu0 0.0
    %2727 = vmatprep.subr.mxu0 0.0
    %2728 = vmatpush1.msra.mxu0 0.0
    %2729 = vmatprep.subr.mxu0 0.0
    %2730 = vmatpush1.msra.mxu0 0.0
    %2731 = vmatprep.subr.mxu0 0.0
    %2732 = vmatpush1.msra.mxu0 0.0
    %2733 = vmatprep.subr.mxu0 0.0
    %2734 = vmatpush1.msra.mxu0 0.0
    %2735 = vmatprep.subr.mxu0 0.0
    %2736 = vmatpush1.msra.mxu0 0.0
    %2737 = vmatprep.subr.mxu0 0.0
    %2738 = vmatpush1.msra.mxu0 0.0
    %2739 = vmatprep.subr.mxu0 0.0
    %2740 = vmatpush1.msra.mxu0 0.0
    %2741 = vmatprep.subr.mxu0 0.0
    %2742 = vmatpush1.msra.mxu0 0.0
    %2743 = vmatprep.subr.mxu0 0.0
    %2744 = vmatpush1.msra.mxu0 0.0
    %2745 = vmatprep.subr.mxu0 0.0
    %2746 = vmatpush1.msra.mxu0 0.0
    %2747 = vmatprep.subr.mxu0 0.0
    %2748 = vmatpush1.msra.mxu0 0.0
    %2749 = vmatprep.subr.mxu0 0.0
    %2750 = vmatpush1.msra.mxu0 0.0
    %2751 = vmatprep.subr.mxu0 0.0
    %2752 = vmatpush1.msra.mxu0 0.0
    %2753 = vmatprep.subr.mxu0 0.0
    %2754 = vmatpush1.msra.mxu0 0.0
    %2755 = vmatprep.subr.mxu0 0.0
    %2756 = vmatpush1.msra.mxu0 0.0
    %2757 = vmatprep.subr.mxu0 0.0
    %2758 = vmatpush1.msra.mxu0 0.0
    %2759 = vmatprep.subr.mxu0 0.0
    %2760 = vmatpush1.msra.mxu0 0.0
    %2761 = vmatprep.subr.mxu0 0.0
    %2762 = vmatpush1.msra.mxu0 0.0
    %2763 = vmatprep.subr.mxu0 0.0
    %2764 = vmatpush1.msra.mxu0 0.0
    %2765 = vmatprep.subr.mxu0 0.0
    %2766 = vmatpush1.msra.mxu0 0.0
    %2767 = vmatprep.subr.mxu0 0.0
    %2768 = vmatpush1.msra.mxu0 0.0
    %2769 = vmatprep.subr.mxu0 0.0
    %2770 = vmatpush1.msra.mxu0 0.0
    %2771 = vmatprep.subr.mxu0 0.0
    %2772 = vmatpush1.msra.mxu0 0.0
    %2773 = vmatprep.subr.mxu0 0.0
    %2774 = vmatpush1.msra.mxu0 0.0
    %2775 = vmatprep.subr.mxu0 0.0
    %2776 = vmatpush1.msra.mxu0 0.0
    %2777 = vmatprep.subr.mxu0 0.0
    %2778 = vmatpush1.msra.mxu0 0.0
    %2779 = vmatprep.mubr.f32.mxu0 0.0
    %2780 = vmatmul.mubr.f32.gmra.mrb[0].mxu0 %v696
    %v2781 = vpop.f32.mrb[0].mxu0
    %v2782 = vadd.f32 0.0, %v2781
    %v2783 = vpop.f32.mrb[0].mxu0
    %2784 = vdwg.mxu0
    %v2785 = vrcp.pop %v2782
    %2787 = vset.pattern.permute.xlu0 16
    %2788 = vperm.xlu0 %2787, %v2785
    %v2789 = vpop.permute.xlu0 %2788
    %v2791 = vmul.f32 %v2782, %v2789
    %v2793 = vrot.slane %v274, 4
    %v2796 = vsel %vm293, %v2791, 0
    %2798 = vmatprep.subr.mxu0 0.0
    %2799 = vmatpush1.msra.mxu0 %v778
    %2800 = vmatprep.subr.mxu0 0.0
    %2801 = vmatpush1.msra.mxu0 %v779
    %2802 = vmatprep.subr.mxu0 0.0
    %2803 = vmatpush1.msra.mxu0 0.0
    %2804 = vmatprep.subr.mxu0 0.0
    %2805 = vmatpush1.msra.mxu0 0.0
    %2806 = vmatprep.subr.mxu0 0.0
    %2807 = vmatpush1.msra.mxu0 0.0
    %2808 = vmatprep.subr.mxu0 0.0
    %2809 = vmatpush1.msra.mxu0 0.0
    %2810 = vmatprep.subr.mxu0 0.0
    %2811 = vmatpush1.msra.mxu0 0.0
    %2812 = vmatprep.subr.mxu0 0.0
    %2813 = vmatpush1.msra.mxu0 0.0
    %2814 = vmatprep.subr.mxu0 0.0
    %2815 = vmatpush1.msra.mxu0 0.0
    %2816 = vmatprep.subr.mxu0 0.0
    %2817 = vmatpush1.msra.mxu0 0.0
    %2818 = vmatprep.subr.mxu0 0.0
    %2819 = vmatpush1.msra.mxu0 0.0
    %2820 = vmatprep.subr.mxu0 0.0
    %2821 = vmatpush1.msra.mxu0 0.0
    %2822 = vmatprep.subr.mxu0 0.0
    %2823 = vmatpush1.msra.mxu0 0.0
    %2824 = vmatprep.subr.mxu0 0.0
    %2825 = vmatpush1.msra.mxu0 0.0
    %2826 = vmatprep.subr.mxu0 0.0
    %2827 = vmatpush1.msra.mxu0 0.0
    %2828 = vmatprep.subr.mxu0 0.0
    %2829 = vmatpush1.msra.mxu0 0.0
    %2830 = vmatprep.subr.mxu0 0.0
    %2831 = vmatpush1.msra.mxu0 0.0
    %2832 = vmatprep.subr.mxu0 0.0
    %2833 = vmatpush1.msra.mxu0 0.0
    %2834 = vmatprep.subr.mxu0 0.0
    %2835 = vmatpush1.msra.mxu0 0.0
    %2836 = vmatprep.subr.mxu0 0.0
    %2837 = vmatpush1.msra.mxu0 0.0
    %2838 = vmatprep.subr.mxu0 0.0
    %2839 = vmatpush1.msra.mxu0 0.0
    %2840 = vmatprep.subr.mxu0 0.0
    %2841 = vmatpush1.msra.mxu0 0.0
    %2842 = vmatprep.subr.mxu0 0.0
    %2843 = vmatpush1.msra.mxu0 0.0
    %2844 = vmatprep.subr.mxu0 0.0
    %2845 = vmatpush1.msra.mxu0 0.0
    %2846 = vmatprep.subr.mxu0 0.0
    %2847 = vmatpush1.msra.mxu0 0.0
    %2848 = vmatprep.subr.mxu0 0.0
    %2849 = vmatpush1.msra.mxu0 0.0
    %2850 = vmatprep.subr.mxu0 0.0
    %2851 = vmatpush1.msra.mxu0 0.0
    %2852 = vmatprep.subr.mxu0 0.0
    %2853 = vmatpush1.msra.mxu0 0.0
    %2854 = vmatprep.subr.mxu0 0.0
    %2855 = vmatpush1.msra.mxu0 0.0
    %2856 = vmatprep.subr.mxu0 0.0
    %2857 = vmatpush1.msra.mxu0 0.0
    %2858 = vmatprep.subr.mxu0 0.0
    %2859 = vmatpush1.msra.mxu0 0.0
    %2860 = vmatprep.subr.mxu0 0.0
    %2861 = vmatpush1.msra.mxu0 0.0
    %2862 = vmatprep.mubr.f32.mxu0 0.0
    %2863 = vmatmul.mubr.f32.gmra.mrb[0].mxu0 %v2796
    %v2864 = vpop.f32.mrb[0].mxu0
    %v2865 = vadd.f32 %v2793, %v2864
    %v2866 = vpop.f32.mrb[0].mxu0
    %2867 = vdwg.mxu0
    %v2868 = vadd.f32 %v2865, %v2471
    %v2869 = vxor.u32 %v2868, 2147483648
    %v2870 = vmul.f32 %v2869, 1.442695
    %v2871 = vpow.pop %v2870
    %v2872 = vadd.f32 %v2871, 1.0
    %v2873 = vrcp.pop %v2872
    %v2874 = vmul.f32 1.0, %v2873
    %v2875 = vtanh.pop %v2868
    %v2876 = vmul.f32 %v2874, %v2219
    %2878 = vrot.lane.b32.xlu0 %v2875, 96
    %v2879 = vpop.permute.xlu0 %2878
    %v2881 = vmul.f32 %v2874, %v2879
    %2883 = vrot.lane.b32.xlu0 %v2881, 16
    %v2884 = vpop.permute.xlu0 %2883
    %v2886 = vadd.f32 %v2876, %v2884
    %v2887 = vtanh.pop %v2886
    %2889 = vrot.lane.b32.xlu0 %v2887, 32
    %v2890 = vpop.permute.xlu0 %2889
    %v2892 = vmul.f32 %v2874, %v2890
    %2894 = vrot.lane.b32.xlu0 %v2892, 80
    %v2895 = vpop.permute.xlu0 %2894
    %2896 = vrot.lane.b32.xlu0 %v2401, 112
    %v2897 = vpop.permute.xlu0 %2896
    %v2899 = vsel %vm293, %v2895, 0
    %2901 = vmatprep.subr.mxu0 0.0
    %2902 = vmatpush1.msra.mxu0 %v882
    %2903 = vmatprep.subr.mxu0 0.0
    %2904 = vmatpush1.msra.mxu0 %v883
    %2905 = vmatprep.subr.mxu0 0.0
    %2906 = vmatpush1.msra.mxu0 0.0
    %2907 = vmatprep.subr.mxu0 0.0
    %2908 = vmatpush1.msra.mxu0 0.0
    %2909 = vmatprep.subr.mxu0 0.0
    %2910 = vmatpush1.msra.mxu0 0.0
    %2911 = vmatprep.subr.mxu0 0.0
    %2912 = vmatpush1.msra.mxu0 0.0
    %2913 = vmatprep.subr.mxu0 0.0
    %2914 = vmatpush1.msra.mxu0 0.0
    %2915 = vmatprep.subr.mxu0 0.0
    %2916 = vmatpush1.msra.mxu0 0.0
    %2917 = vmatprep.subr.mxu0 0.0
    %2918 = vmatpush1.msra.mxu0 0.0
    %2919 = vmatprep.subr.mxu0 0.0
    %2920 = vmatpush1.msra.mxu0 0.0
    %2921 = vmatprep.subr.mxu0 0.0
    %2922 = vmatpush1.msra.mxu0 0.0
    %2923 = vmatprep.subr.mxu0 0.0
    %2924 = vmatpush1.msra.mxu0 0.0
    %2925 = vmatprep.subr.mxu0 0.0
    %2926 = vmatpush1.msra.mxu0 0.0
    %2927 = vmatprep.subr.mxu0 0.0
    %2928 = vmatpush1.msra.mxu0 0.0
    %2929 = vmatprep.subr.mxu0 0.0
    %2930 = vmatpush1.msra.mxu0 0.0
    %2931 = vmatprep.subr.mxu0 0.0
    %2932 = vmatpush1.msra.mxu0 0.0
    %2933 = vmatprep.subr.mxu0 0.0
    %2934 = vmatpush1.msra.mxu0 0.0
    %2935 = vmatprep.subr.mxu0 0.0
    %2936 = vmatpush1.msra.mxu0 0.0
    %2937 = vmatprep.subr.mxu0 0.0
    %2938 = vmatpush1.msra.mxu0 0.0
    %2939 = vmatprep.subr.mxu0 0.0
    %2940 = vmatpush1.msra.mxu0 0.0
    %2941 = vmatprep.subr.mxu0 0.0
    %2942 = vmatpush1.msra.mxu0 0.0
    %2943 = vmatprep.subr.mxu0 0.0
    %2944 = vmatpush1.msra.mxu0 0.0
    %2945 = vmatprep.subr.mxu0 0.0
    %2946 = vmatpush1.msra.mxu0 0.0
    %2947 = vmatprep.subr.mxu0 0.0
    %2948 = vmatpush1.msra.mxu0 0.0
    %2949 = vmatprep.subr.mxu0 0.0
    %2950 = vmatpush1.msra.mxu0 0.0
    %2951 = vmatprep.subr.mxu0 0.0
    %2952 = vmatpush1.msra.mxu0 0.0
    %2953 = vmatprep.subr.mxu0 0.0
    %2954 = vmatpush1.msra.mxu0 0.0
    %2955 = vmatprep.subr.mxu0 0.0
    %2956 = vmatpush1.msra.mxu0 0.0
    %2957 = vmatprep.subr.mxu0 0.0
    %2958 = vmatpush1.msra.mxu0 0.0
    %2959 = vmatprep.subr.mxu0 0.0
    %2960 = vmatpush1.msra.mxu0 0.0
    %2961 = vmatprep.subr.mxu0 0.0
    %2962 = vmatpush1.msra.mxu0 0.0
    %2963 = vmatprep.subr.mxu0 0.0
    %2964 = vmatpush1.msra.mxu0 0.0
    %2965 = vmatprep.mubr.f32.mxu0 0.0
    %2966 = vmatmul.mubr.f32.gmra.mrb[0].mxu0 %v2899
    %v2967 = vpop.f32.mrb[0].mxu0
    %v2968 = vadd.f32 %v2897, %v2967
    %v2969 = vpop.f32.mrb[0].mxu0
    %2970 = vdwg.mxu0
    %v2971 = vadd.f32 %v2968, %v967
    %v2972 = vxor.u32 %v2971, 2147483648
    %v2973 = vmul.f32 %v2972, 1.442695
    %v2974 = vpow.pop %v2973
    %v2975 = vadd.f32 %v2974, 1.0
    %v2976 = vrcp.pop %v2975
    %v2977 = vmul.f32 1.0, %v2976
    %v2978 = vtanh.pop %v2971
    %v2979 = vmul.f32 %v2977, %v2322
    %2981 = vrot.lane.b32.xlu0 %v2978, 96
    %v2982 = vpop.permute.xlu0 %2981
    %v2984 = vmul.f32 %v2977, %v2982
    %2986 = vrot.lane.b32.xlu0 %v2984, 16
    %v2987 = vpop.permute.xlu0 %2986
    %v2989 = vadd.f32 %v2979, %v2987
    %v2990 = vtanh.pop %v2989
    %2992 = vrot.lane.b32.xlu0 %v2990, 32
    %v2993 = vpop.permute.xlu0 %2992
    %v2995 = vmul.f32 %v2977, %v2993
    %2997 = vrot.lane.b32.xlu0 %v2995, 80
    %v2998 = vpop.permute.xlu0 %2997
    %v2999 = vsel %vm293, %v2998, 0
    %3001 = vmatprep.subr.mxu0 0.0
    %3002 = vmatpush1.msra.mxu0 %v289
    %3003 = vmatprep.subr.mxu0 0.0
    %3004 = vmatpush1.msra.mxu0 %v290
    %3005 = vmatprep.subr.mxu0 0.0
    %3006 = vmatpush1.msra.mxu0 0.0
    %3007 = vmatprep.subr.mxu0 0.0
    %3008 = vmatpush1.msra.mxu0 0.0
    %3009 = vmatprep.subr.mxu0 0.0
    %3010 = vmatpush1.msra.mxu0 0.0
    %3011 = vmatprep.subr.mxu0 0.0
    %3012 = vmatpush1.msra.mxu0 0.0
    %3013 = vmatprep.subr.mxu0 0.0
    %3014 = vmatpush1.msra.mxu0 0.0
    %3015 = vmatprep.subr.mxu0 0.0
    %3016 = vmatpush1.msra.mxu0 0.0
    %3017 = vmatprep.subr.mxu0 0.0
    %3018 = vmatpush1.msra.mxu0 0.0
    %3019 = vmatprep.subr.mxu0 0.0
    %3020 = vmatpush1.msra.mxu0 0.0
    %3021 = vmatprep.subr.mxu0 0.0
    %3022 = vmatpush1.msra.mxu0 0.0
    %3023 = vmatprep.subr.mxu0 0.0
    %3024 = vmatpush1.msra.mxu0 0.0
    %3025 = vmatprep.subr.mxu0 0.0
    %3026 = vmatpush1.msra.mxu0 0.0
    %3027 = vmatprep.subr.mxu0 0.0
    %3028 = vmatpush1.msra.mxu0 0.0
    %3029 = vmatprep.subr.mxu0 0.0
    %3030 = vmatpush1.msra.mxu0 0.0
    %3031 = vmatprep.subr.mxu0 0.0
    %3032 = vmatpush1.msra.mxu0 0.0
    %3033 = vmatprep.subr.mxu0 0.0
    %3034 = vmatpush1.msra.mxu0 0.0
    %3035 = vmatprep.subr.mxu0 0.0
    %3036 = vmatpush1.msra.mxu0 0.0
    %3037 = vmatprep.subr.mxu0 0.0
    %3038 = vmatpush1.msra.mxu0 0.0
    %3039 = vmatprep.subr.mxu0 0.0
    %3040 = vmatpush1.msra.mxu0 0.0
    %3041 = vmatprep.subr.mxu0 0.0
    %3042 = vmatpush1.msra.mxu0 0.0
    %3043 = vmatprep.subr.mxu0 0.0
    %3044 = vmatpush1.msra.mxu0 0.0
    %3045 = vmatprep.subr.mxu0 0.0
    %3046 = vmatpush1.msra.mxu0 0.0
    %3047 = vmatprep.subr.mxu0 0.0
    %3048 = vmatpush1.msra.mxu0 0.0
    %3049 = vmatprep.subr.mxu0 0.0
    %3050 = vmatpush1.msra.mxu0 0.0
    %3051 = vmatprep.subr.mxu0 0.0
    %3052 = vmatpush1.msra.mxu0 0.0
    %3053 = vmatprep.subr.mxu0 0.0
    %3054 = vmatpush1.msra.mxu0 0.0
    %3055 = vmatprep.subr.mxu0 0.0
    %3056 = vmatpush1.msra.mxu0 0.0
    %3057 = vmatprep.subr.mxu0 0.0
    %3058 = vmatpush1.msra.mxu0 0.0
    %3059 = vmatprep.subr.mxu0 0.0
    %3060 = vmatpush1.msra.mxu0 0.0
    %3061 = vmatprep.subr.mxu0 0.0
    %3062 = vmatpush1.msra.mxu0 0.0
    %3063 = vmatprep.subr.mxu0 0.0
    %3064 = vmatpush1.msra.mxu0 0.0
    %3065 = vmatprep.mubr.f32.mxu0 0.0
    %3066 = vmatmul.mubr.f32.gmra.mrb[0].mxu0 %v2999
    %v3067 = vpop.f32.mrb[0].mxu0
    %v3068 = vadd.f32 0.0, %v3067
    %v3069 = vpop.f32.mrb[0].mxu0
    %3070 = vdwg.mxu0
    %3071 = vmatprep.subr.mxu0 0.0
    %3072 = vmatpush1.msra.mxu0 %v366
    %3073 = vmatprep.subr.mxu0 0.0
    %3074 = vmatpush1.msra.mxu0 %v367
    %3075 = vmatprep.subr.mxu0 0.0
    %3076 = vmatpush1.msra.mxu0 0.0
    %3077 = vmatprep.subr.mxu0 0.0
    %3078 = vmatpush1.msra.mxu0 0.0
    %3079 = vmatprep.subr.mxu0 0.0
    %3080 = vmatpush1.msra.mxu0 0.0
    %3081 = vmatprep.subr.mxu0 0.0
    %3082 = vmatpush1.msra.mxu0 0.0
    %3083 = vmatprep.subr.mxu0 0.0
    %3084 = vmatpush1.msra.mxu0 0.0
    %3085 = vmatprep.subr.mxu0 0.0
    %3086 = vmatpush1.msra.mxu0 0.0
    %3087 = vmatprep.subr.mxu0 0.0
    %3088 = vmatpush1.msra.mxu0 0.0
    %3089 = vmatprep.subr.mxu0 0.0
    %3090 = vmatpush1.msra.mxu0 0.0
    %3091 = vmatprep.subr.mxu0 0.0
    %3092 = vmatpush1.msra.mxu0 0.0
    %3093 = vmatprep.subr.mxu0 0.0
    %3094 = vmatpush1.msra.mxu0 0.0
    %3095 = vmatprep.subr.mxu0 0.0
    %3096 = vmatpush1.msra.mxu0 0.0
    %3097 = vmatprep.subr.mxu0 0.0
    %3098 = vmatpush1.msra.mxu0 0.0
    %3099 = vmatprep.subr.mxu0 0.0
    %3100 = vmatpush1.msra.mxu0 0.0
    %3101 = vmatprep.subr.mxu0 0.0
    %3102 = vmatpush1.msra.mxu0 0.0
    %3103 = vmatprep.subr.mxu0 0.0
    %3104 = vmatpush1.msra.mxu0 0.0
    %3105 = vmatprep.subr.mxu0 0.0
    %3106 = vmatpush1.msra.mxu0 0.0
    %3107 = vmatprep.subr.mxu0 0.0
    %3108 = vmatpush1.msra.mxu0 0.0
    %3109 = vmatprep.subr.mxu0 0.0
    %3110 = vmatpush1.msra.mxu0 0.0
    %3111 = vmatprep.subr.mxu0 0.0
    %3112 = vmatpush1.msra.mxu0 0.0
    %3113 = vmatprep.subr.mxu0 0.0
    %3114 = vmatpush1.msra.mxu0 0.0
    %3115 = vmatprep.subr.mxu0 0.0
    %3116 = vmatpush1.msra.mxu0 0.0
    %3117 = vmatprep.subr.mxu0 0.0
    %3118 = vmatpush1.msra.mxu0 0.0
    %3119 = vmatprep.subr.mxu0 0.0
    %3120 = vmatpush1.msra.mxu0 0.0
    %3121 = vmatprep.subr.mxu0 0.0
    %3122 = vmatpush1.msra.mxu0 0.0
    %3123 = vmatprep.subr.mxu0 0.0
    %3124 = vmatpush1.msra.mxu0 0.0
    %3125 = vmatprep.subr.mxu0 0.0
    %3126 = vmatpush1.msra.mxu0 0.0
    %3127 = vmatprep.subr.mxu0 0.0
    %3128 = vmatpush1.msra.mxu0 0.0
    %3129 = vmatprep.subr.mxu0 0.0
    %3130 = vmatpush1.msra.mxu0 0.0
    %3131 = vmatprep.subr.mxu0 0.0
    %3132 = vmatpush1.msra.mxu0 0.0
    %3133 = vmatprep.subr.mxu0 0.0
    %3134 = vmatpush1.msra.mxu0 0.0
    %3135 = vmatprep.mubr.f32.mxu0 0.0
    %3136 = vmatmul.mubr.f32.gmra.mrb[0].mxu0 %v2899
    %v3137 = vpop.f32.mrb[0].mxu0
    %v3138 = vadd.f32 0.0, %v3137
    %v3139 = vpop.f32.mrb[0].mxu0
    %3140 = vdwg.mxu0
    %v3142 = vsel %vm453, %v3068, 0
    %3144 = vmatprep.subr.mxu0 0.0
    %3145 = vmatpush1.msra.mxu0 %v3142
    %3146 = vmatprep.subr.mxu0 0.0
    %3147 = vmatpush1.msra.mxu0 0.0
    %3148 = vmatprep.subr.mxu0 0.0
    %3149 = vmatpush1.msra.mxu0 0.0
    %3150 = vmatprep.subr.mxu0 0.0
    %3151 = vmatpush1.msra.mxu0 0.0
    %3152 = vmatprep.subr.mxu0 0.0
    %3153 = vmatpush1.msra.mxu0 0.0
    %3154 = vmatprep.subr.mxu0 0.0
    %3155 = vmatpush1.msra.mxu0 0.0
    %3156 = vmatprep.subr.mxu0 0.0
    %3157 = vmatpush1.msra.mxu0 0.0
    %3158 = vmatprep.subr.mxu0 0.0
    %3159 = vmatpush1.msra.mxu0 0.0
    %3160 = vmatprep.subr.mxu0 0.0
    %3161 = vmatpush1.msra.mxu0 0.0
    %3162 = vmatprep.subr.mxu0 0.0
    %3163 = vmatpush1.msra.mxu0 0.0
    %3164 = vmatprep.subr.mxu0 0.0
    %3165 = vmatpush1.msra.mxu0 0.0
    %3166 = vmatprep.subr.mxu0 0.0
    %3167 = vmatpush1.msra.mxu0 0.0
    %3168 = vmatprep.subr.mxu0 0.0
    %3169 = vmatpush1.msra.mxu0 0.0
    %3170 = vmatprep.subr.mxu0 0.0
    %3171 = vmatpush1.msra.mxu0 0.0
    %3172 = vmatprep.subr.mxu0 0.0
    %3173 = vmatpush1.msra.mxu0 0.0
    %3174 = vmatprep.subr.mxu0 0.0
    %3175 = vmatpush1.msra.mxu0 0.0
    %3176 = vmatprep.subr.mxu0 0.0
    %3177 = vmatpush1.msra.mxu0 0.0
    %3178 = vmatprep.subr.mxu0 0.0
    %3179 = vmatpush1.msra.mxu0 0.0
    %3180 = vmatprep.subr.mxu0 0.0
    %3181 = vmatpush1.msra.mxu0 0.0
    %3182 = vmatprep.subr.mxu0 0.0
    %3183 = vmatpush1.msra.mxu0 0.0
    %3184 = vmatprep.subr.mxu0 0.0
    %3185 = vmatpush1.msra.mxu0 0.0
    %3186 = vmatprep.subr.mxu0 0.0
    %3187 = vmatpush1.msra.mxu0 0.0
    %3188 = vmatprep.subr.mxu0 0.0
    %3189 = vmatpush1.msra.mxu0 0.0
    %3190 = vmatprep.subr.mxu0 0.0
    %3191 = vmatpush1.msra.mxu0 0.0
    %3192 = vmatprep.subr.mxu0 0.0
    %3193 = vmatpush1.msra.mxu0 0.0
    %3194 = vmatprep.subr.mxu0 0.0
    %3195 = vmatpush1.msra.mxu0 0.0
    %3196 = vmatprep.subr.mxu0 0.0
    %3197 = vmatpush1.msra.mxu0 0.0
    %3198 = vmatprep.subr.mxu0 0.0
    %3199 = vmatpush1.msra.mxu0 0.0
    %3200 = vmatprep.subr.mxu0 0.0
    %3201 = vmatpush1.msra.mxu0 0.0
    %3202 = vmatprep.subr.mxu0 0.0
    %3203 = vmatpush1.msra.mxu0 0.0
    %3204 = vmatprep.subr.mxu0 0.0
    %3205 = vmatpush1.msra.mxu0 0.0
    %3206 = vmatprep.subr.mxu0 0.0
    %3207 = vmatpush1.msra.mxu0 0.0
    %3208 = vmatprep.mubr.f32.mxu0 0.0
    %3209 = vmatmul.mubr.f32.gmra.mrb[0].mxu0 %v442
    %v3210 = vpop.f32.mrb[0].mxu0
    %v3211 = vadd.f32 %v152, %v3210
    %v3212 = vpop.f32.mrb[0].mxu0
    %3213 = vmatprep.mubr.f32.mxu0 0.0
    %3214 = vmatmul.mubr.f32.gmra.mrb[0].mxu0 %v445
    %v3215 = vpop.f32.mrb[0].mxu0
    %v3216 = vadd.f32 %v157, %v3215
    %v3217 = vpop.f32.mrb[0].mxu0
    %3218 = vmatprep.mubr.f32.mxu0 0.0
    %3219 = vmatmul.mubr.f32.gmra.mrb[0].mxu0 %v448
    %v3220 = vpop.f32.mrb[0].mxu0
    %v3221 = vadd.f32 %v162, %v3220
    %v3222 = vpop.f32.mrb[0].mxu0
    %3223 = vmatprep.mubr.f32.mxu0 0.0
    %3224 = vmatmul.mubr.f32.gmra.mrb[0].mxu0 %v451
    %v3225 = vpop.f32.mrb[0].mxu0
    %v3226 = vadd.f32 %v167, %v3225
    %v3227 = vpop.f32.mrb[0].mxu0
    %3228 = vdwg.mxu0
    %v3229 = vtanh.pop %v3211
    %v3230 = vtanh.pop %v3216
    %v3231 = vtanh.pop %v3221
    %v3232 = vtanh.pop %v3226
    %v3234 = vsel %vm293, %v3229, 0
    %v3237 = vsel %vm293, %v3230, 0
    %v3240 = vsel %vm293, %v3231, 0
    %v3243 = vsel %vm293, %v3232, 0
    %3245 = vmatprep.subr.mxu0 0.0
    %3246 = vmatpush1.msra.mxu0 %v175
    %3247 = vmatprep.subr.mxu0 0.0
    %3248 = vmatpush1.msra.mxu0 %v176
    %3249 = vmatprep.subr.mxu0 0.0
    %3250 = vmatpush1.msra.mxu0 0.0
    %3251 = vmatprep.subr.mxu0 0.0
    %3252 = vmatpush1.msra.mxu0 0.0
    %3253 = vmatprep.subr.mxu0 0.0
    %3254 = vmatpush1.msra.mxu0 0.0
    %3255 = vmatprep.subr.mxu0 0.0
    %3256 = vmatpush1.msra.mxu0 0.0
    %3257 = vmatprep.subr.mxu0 0.0
    %3258 = vmatpush1.msra.mxu0 0.0
    %3259 = vmatprep.subr.mxu0 0.0
    %3260 = vmatpush1.msra.mxu0 0.0
    %3261 = vmatprep.subr.mxu0 0.0
    %3262 = vmatpush1.msra.mxu0 0.0
    %3263 = vmatprep.subr.mxu0 0.0
    %3264 = vmatpush1.msra.mxu0 0.0
    %3265 = vmatprep.subr.mxu0 0.0
    %3266 = vmatpush1.msra.mxu0 0.0
    %3267 = vmatprep.subr.mxu0 0.0
    %3268 = vmatpush1.msra.mxu0 0.0
    %3269 = vmatprep.subr.mxu0 0.0
    %3270 = vmatpush1.msra.mxu0 0.0
    %3271 = vmatprep.subr.mxu0 0.0
    %3272 = vmatpush1.msra.mxu0 0.0
    %3273 = vmatprep.subr.mxu0 0.0
    %3274 = vmatpush1.msra.mxu0 0.0
    %3275 = vmatprep.subr.mxu0 0.0
    %3276 = vmatpush1.msra.mxu0 0.0
    %3277 = vmatprep.subr.mxu0 0.0
    %3278 = vmatpush1.msra.mxu0 0.0
    %3279 = vmatprep.subr.mxu0 0.0
    %3280 = vmatpush1.msra.mxu0 0.0
    %3281 = vmatprep.subr.mxu0 0.0
    %3282 = vmatpush1.msra.mxu0 0.0
    %3283 = vmatprep.subr.mxu0 0.0
    %3284 = vmatpush1.msra.mxu0 0.0
    %3285 = vmatprep.subr.mxu0 0.0
    %3286 = vmatpush1.msra.mxu0 0.0
    %3287 = vmatprep.subr.mxu0 0.0
    %3288 = vmatpush1.msra.mxu0 0.0
    %3289 = vmatprep.subr.mxu0 0.0
    %3290 = vmatpush1.msra.mxu0 0.0
    %3291 = vmatprep.subr.mxu0 0.0
    %3292 = vmatpush1.msra.mxu0 0.0
    %3293 = vmatprep.subr.mxu0 0.0
    %3294 = vmatpush1.msra.mxu0 0.0
    %3295 = vmatprep.subr.mxu0 0.0
    %3296 = vmatpush1.msra.mxu0 0.0
    %3297 = vmatprep.subr.mxu0 0.0
    %3298 = vmatpush1.msra.mxu0 0.0
    %3299 = vmatprep.subr.mxu0 0.0
    %3300 = vmatpush1.msra.mxu0 0.0
    %3301 = vmatprep.subr.mxu0 0.0
    %3302 = vmatpush1.msra.mxu0 0.0
    %3303 = vmatprep.subr.mxu0 0.0
    %3304 = vmatpush1.msra.mxu0 0.0
    %3305 = vmatprep.subr.mxu0 0.0
    %3306 = vmatpush1.msra.mxu0 0.0
    %3307 = vmatprep.subr.mxu0 0.0
    %3308 = vmatpush1.msra.mxu0 0.0
    %3309 = vmatprep.mubr.f32.mxu0 0.0
    %3310 = vmatmul.mubr.f32.gmra.mrb[0].mxu0 %v3234
    %v3311 = vpop.f32.mrb[0].mxu0
    %v3312 = vadd.f32 0.0, %v3311
    %v3313 = vpop.f32.mrb[0].mxu0
    %3314 = vmatprep.mubr.f32.mxu0 0.0
    %3315 = vmatmul.mubr.f32.gmra.mrb[0].mxu0 %v3237
    %v3316 = vpop.f32.mrb[0].mxu0
    %v3317 = vadd.f32 0.0, %v3316
    %v3318 = vpop.f32.mrb[0].mxu0
    %3319 = vmatprep.mubr.f32.mxu0 0.0
    %3320 = vmatmul.mubr.f32.gmra.mrb[0].mxu0 %v3240
    %v3321 = vpop.f32.mrb[0].mxu0
    %v3322 = vadd.f32 0.0, %v3321
    %v3323 = vpop.f32.mrb[0].mxu0
    %3324 = vmatprep.mubr.f32.mxu0 0.0
    %3325 = vmatmul.mubr.f32.gmra.mrb[0].mxu0 %v3243
    %v3326 = vpop.f32.mrb[0].mxu0
    %v3327 = vadd.f32 0.0, %v3326
    %v3328 = vpop.f32.mrb[0].mxu0
    %3329 = vdwg.mxu0
    %v3330 = vsel %vm643, %v3312, -inf
    %v3331 = vsel %vm643, %v3317, -inf
    %v3332 = vsel %vm643, %v3322, -inf
    %v3333 = vsel %vm647, %v3327, -inf
    %v3334 = vmax.f32 %v3330, %v3331
    %v3335 = vmax.f32 %v3332, %v3333
    %v3336 = vmax.f32 %v3334, %v3335
    %v3337 = vrot.slane %v3336, 4
    %v3338 = vmax.f32 %v3336, %v3337
    %v3339 = vrot.slane %v3338, 2
    %v3340 = vmax.f32 %v3338, %v3339
    %v3341 = vrot.slane %v3340, 1
    %v3342 = vmax.f32 %v3340, %v3341
    %v3343 = vsub.f32 %v3312, %v3342
    %v3344 = vsub.f32 %v3317, %v3342
    %v3345 = vsub.f32 %v3322, %v3342
    %v3346 = vsub.f32 %v3327, %v3342
    %v3347 = vmul.f32 %v3343, 1.442695
    %v3348 = vpow.pop %v3347
    %v3349 = vmul.f32 %v3344, 1.442695
    %v3350 = vpow.pop %v3349
    %v3351 = vmul.f32 %v3345, 1.442695
    %v3352 = vpow.pop %v3351
    %v3353 = vmul.f32 %v3346, 1.442695
    %v3354 = vpow.pop %v3353
    %3356 = vset.pattern.permute.xlu0 0
    %3357 = vperm.xlu0 %3356, %v3348
    %v3358 = vpop.permute.xlu0 %3357
    %3361 = vset.pattern.permute.xlu0 0
    %3362 = vperm.xlu0 %3361, %v3350
    %v3363 = vpop.permute.xlu0 %3362
    %3366 = vset.pattern.permute.xlu0 0
    %3367 = vperm.xlu0 %3366, %v3352
    %v3368 = vpop.permute.xlu0 %3367
    %3371 = vset.pattern.permute.xlu0 0
    %3372 = vperm.xlu0 %3371, %v3354
    %v3373 = vpop.permute.xlu0 %3372
    %v3375 = vmul.f32 %v3358, %v61
    %v3376 = vmul.f32 %v3363, %v62
    %v3377 = vmul.f32 %v3368, %v63
    %v3378 = vmul.f32 %v3373, %v64
    %v3380 = vsel %vm453, %v3378, 0
    %3382 = vmatprep.subr.mxu0 0.0
    %3383 = vmatpush1.msra.mxu0 %v3375
    %3384 = vmatprep.subr.mxu0 0.0
    %3385 = vmatpush1.msra.mxu0 %v3376
    %3386 = vmatprep.subr.mxu0 0.0
    %3387 = vmatpush1.msra.mxu0 %v3377
    %3388 = vmatprep.subr.mxu0 0.0
    %3389 = vmatpush1.msra.mxu0 %v3380
    %3390 = vmatprep.subr.mxu0 0.0
    %3391 = vmatpush1.msra.mxu0 0.0
    %3392 = vmatprep.subr.mxu0 0.0
    %3393 = vmatpush1.msra.mxu0 0.0
    %3394 = vmatprep.subr.mxu0 0.0
    %3395 = vmatpush1.msra.mxu0 0.0
    %3396 = vmatprep.subr.mxu0 0.0
    %3397 = vmatpush1.msra.mxu0 0.0
    %3398 = vmatprep.subr.mxu0 0.0
    %3399 = vmatpush1.msra.mxu0 0.0
    %3400 = vmatprep.subr.mxu0 0.0
    %3401 = vmatpush1.msra.mxu0 0.0
    %3402 = vmatprep.subr.mxu0 0.0
    %3403 = vmatpush1.msra.mxu0 0.0
    %3404 = vmatprep.subr.mxu0 0.0
    %3405 = vmatpush1.msra.mxu0 0.0
    %3406 = vmatprep.subr.mxu0 0.0
    %3407 = vmatpush1.msra.mxu0 0.0
    %3408 = vmatprep.subr.mxu0 0.0
    %3409 = vmatpush1.msra.mxu0 0.0
    %3410 = vmatprep.subr.mxu0 0.0
    %3411 = vmatpush1.msra.mxu0 0.0
    %3412 = vmatprep.subr.mxu0 0.0
    %3413 = vmatpush1.msra.mxu0 0.0
    %3414 = vmatprep.subr.mxu0 0.0
    %3415 = vmatpush1.msra.mxu0 0.0
    %3416 = vmatprep.subr.mxu0 0.0
    %3417 = vmatpush1.msra.mxu0 0.0
    %3418 = vmatprep.subr.mxu0 0.0
    %3419 = vmatpush1.msra.mxu0 0.0
    %3420 = vmatprep.subr.mxu0 0.0
    %3421 = vmatpush1.msra.mxu0 0.0
    %3422 = vmatprep.subr.mxu0 0.0
    %3423 = vmatpush1.msra.mxu0 0.0
    %3424 = vmatprep.subr.mxu0 0.0
    %3425 = vmatpush1.msra.mxu0 0.0
    %3426 = vmatprep.subr.mxu0 0.0
    %3427 = vmatpush1.msra.mxu0 0.0
    %3428 = vmatprep.subr.mxu0 0.0
    %3429 = vmatpush1.msra.mxu0 0.0
    %3430 = vmatprep.subr.mxu0 0.0
    %3431 = vmatpush1.msra.mxu0 0.0
    %3432 = vmatprep.subr.mxu0 0.0
    %3433 = vmatpush1.msra.mxu0 0.0
    %3434 = vmatprep.subr.mxu0 0.0
    %3435 = vmatpush1.msra.mxu0 0.0
    %3436 = vmatprep.subr.mxu0 0.0
    %3437 = vmatpush1.msra.mxu0 0.0
    %3438 = vmatprep.subr.mxu0 0.0
    %3439 = vmatpush1.msra.mxu0 0.0
    %3440 = vmatprep.subr.mxu0 0.0
    %3441 = vmatpush1.msra.mxu0 0.0
    %3442 = vmatprep.subr.mxu0 0.0
    %3443 = vmatpush1.msra.mxu0 0.0
    %3444 = vmatprep.subr.mxu0 0.0
    %3445 = vmatpush1.msra.mxu0 0.0
    %3446 = vmatprep.mubr.f32.mxu0 0.0
    %3447 = vmatmul.mubr.f32.gmra.mrb[0].mxu0 %v696
    %v3448 = vpop.f32.mrb[0].mxu0
    %v3449 = vadd.f32 0.0, %v3448
    %v3450 = vpop.f32.mrb[0].mxu0
    %3451 = vdwg.mxu0
    %v3452 = vrcp.pop %v3449
    %3454 = vset.pattern.permute.xlu0 16
    %3455 = vperm.xlu0 %3454, %v3452
    %v3456 = vpop.permute.xlu0 %3455
    %v3458 = vmul.f32 %v3449, %v3456
    %v3460 = vsel %vm293, %v3458, 0
    %3462 = vmatprep.subr.mxu0 0.0
    %3463 = vmatpush1.msra.mxu0 %v778
    %3464 = vmatprep.subr.mxu0 0.0
    %3465 = vmatpush1.msra.mxu0 %v779
    %3466 = vmatprep.subr.mxu0 0.0
    %3467 = vmatpush1.msra.mxu0 0.0
    %3468 = vmatprep.subr.mxu0 0.0
    %3469 = vmatpush1.msra.mxu0 0.0
    %3470 = vmatprep.subr.mxu0 0.0
    %3471 = vmatpush1.msra.mxu0 0.0
    %3472 = vmatprep.subr.mxu0 0.0
    %3473 = vmatpush1.msra.mxu0 0.0
    %3474 = vmatprep.subr.mxu0 0.0
    %3475 = vmatpush1.msra.mxu0 0.0
    %3476 = vmatprep.subr.mxu0 0.0
    %3477 = vmatpush1.msra.mxu0 0.0
    %3478 = vmatprep.subr.mxu0 0.0
    %3479 = vmatpush1.msra.mxu0 0.0
    %3480 = vmatprep.subr.mxu0 0.0
    %3481 = vmatpush1.msra.mxu0 0.0
    %3482 = vmatprep.subr.mxu0 0.0
    %3483 = vmatpush1.msra.mxu0 0.0
    %3484 = vmatprep.subr.mxu0 0.0
    %3485 = vmatpush1.msra.mxu0 0.0
    %3486 = vmatprep.subr.mxu0 0.0
    %3487 = vmatpush1.msra.mxu0 0.0
    %3488 = vmatprep.subr.mxu0 0.0
    %3489 = vmatpush1.msra.mxu0 0.0
    %3490 = vmatprep.subr.mxu0 0.0
    %3491 = vmatpush1.msra.mxu0 0.0
    %3492 = vmatprep.subr.mxu0 0.0
    %3493 = vmatpush1.msra.mxu0 0.0
    %3494 = vmatprep.subr.mxu0 0.0
    %3495 = vmatpush1.msra.mxu0 0.0
    %3496 = vmatprep.subr.mxu0 0.0
    %3497 = vmatpush1.msra.mxu0 0.0
    %3498 = vmatprep.subr.mxu0 0.0
    %3499 = vmatpush1.msra.mxu0 0.0
    %3500 = vmatprep.subr.mxu0 0.0
    %3501 = vmatpush1.msra.mxu0 0.0
    %3502 = vmatprep.subr.mxu0 0.0
    %3503 = vmatpush1.msra.mxu0 0.0
    %3504 = vmatprep.subr.mxu0 0.0
    %3505 = vmatpush1.msra.mxu0 0.0
    %3506 = vmatprep.subr.mxu0 0.0
    %3507 = vmatpush1.msra.mxu0 0.0
    %3508 = vmatprep.subr.mxu0 0.0
    %3509 = vmatpush1.msra.mxu0 0.0
    %3510 = vmatprep.subr.mxu0 0.0
    %3511 = vmatpush1.msra.mxu0 0.0
    %3512 = vmatprep.subr.mxu0 0.0
    %3513 = vmatpush1.msra.mxu0 0.0
    %3514 = vmatprep.subr.mxu0 0.0
    %3515 = vmatpush1.msra.mxu0 0.0
    %3516 = vmatprep.subr.mxu0 0.0
    %3517 = vmatpush1.msra.mxu0 0.0
    %3518 = vmatprep.subr.mxu0 0.0
    %3519 = vmatpush1.msra.mxu0 0.0
    %3520 = vmatprep.subr.mxu0 0.0
    %3521 = vmatpush1.msra.mxu0 0.0
    %3522 = vmatprep.subr.mxu0 0.0
    %3523 = vmatpush1.msra.mxu0 0.0
    %3524 = vmatprep.subr.mxu0 0.0
    %3525 = vmatpush1.msra.mxu0 0.0
    %3526 = vmatprep.mubr.f32.mxu0 0.0
    %3527 = vmatmul.mubr.f32.gmra.mrb[0].mxu0 %v3460
    %v3528 = vpop.f32.mrb[0].mxu0
    %v3529 = vadd.f32 %v279, %v3528
    %v3530 = vpop.f32.mrb[0].mxu0
    %3531 = vdwg.mxu0
    %v3532 = vadd.f32 %v3529, %v3138
    %v3533 = vxor.u32 %v3532, 2147483648
    %v3534 = vmul.f32 %v3533, 1.442695
    %v3535 = vpow.pop %v3534
    %v3536 = vadd.f32 %v3535, 1.0
    %v3537 = vrcp.pop %v3536
    %v3538 = vmul.f32 1.0, %v3537
    %v3539 = vtanh.pop %v3532
    %v3540 = vmul.f32 %v3538, %v2886
    %3542 = vrot.lane.b32.xlu0 %v3539, 96
    %v3543 = vpop.permute.xlu0 %3542
    %v3545 = vmul.f32 %v3538, %v3543
    %3547 = vrot.lane.b32.xlu0 %v3545, 16
    %v3548 = vpop.permute.xlu0 %3547
    %v3550 = vadd.f32 %v3540, %v3548
    %v3551 = vtanh.pop %v3550
    %3553 = vrot.lane.b32.xlu0 %v3551, 32
    %v3554 = vpop.permute.xlu0 %3553
    %v3556 = vmul.f32 %v3538, %v3554
    %3558 = vrot.lane.b32.xlu0 %v3556, 80
    %v3559 = vpop.permute.xlu0 %3558
    %3560 = vrot.lane.b32.xlu0 %v3068, 112
    %v3561 = vpop.permute.xlu0 %3560
    %v3563 = vsel %vm293, %v3559, 0
    %3565 = vmatprep.subr.mxu0 0.0
    %3566 = vmatpush1.msra.mxu0 %v882
    %3567 = vmatprep.subr.mxu0 0.0
    %3568 = vmatpush1.msra.mxu0 %v883
    %3569 = vmatprep.subr.mxu0 0.0
    %3570 = vmatpush1.msra.mxu0 0.0
    %3571 = vmatprep.subr.mxu0 0.0
    %3572 = vmatpush1.msra.mxu0 0.0
    %3573 = vmatprep.subr.mxu0 0.0
    %3574 = vmatpush1.msra.mxu0 0.0
    %3575 = vmatprep.subr.mxu0 0.0
    %3576 = vmatpush1.msra.mxu0 0.0
    %3577 = vmatprep.subr.mxu0 0.0
    %3578 = vmatpush1.msra.mxu0 0.0
    %3579 = vmatprep.subr.mxu0 0.0
    %3580 = vmatpush1.msra.mxu0 0.0
    %3581 = vmatprep.subr.mxu0 0.0
    %3582 = vmatpush1.msra.mxu0 0.0
    %3583 = vmatprep.subr.mxu0 0.0
    %3584 = vmatpush1.msra.mxu0 0.0
    %3585 = vmatprep.subr.mxu0 0.0
    %3586 = vmatpush1.msra.mxu0 0.0
    %3587 = vmatprep.subr.mxu0 0.0
    %3588 = vmatpush1.msra.mxu0 0.0
    %3589 = vmatprep.subr.mxu0 0.0
    %3590 = vmatpush1.msra.mxu0 0.0
    %3591 = vmatprep.subr.mxu0 0.0
    %3592 = vmatpush1.msra.mxu0 0.0
    %3593 = vmatprep.subr.mxu0 0.0
    %3594 = vmatpush1.msra.mxu0 0.0
    %3595 = vmatprep.subr.mxu0 0.0
    %3596 = vmatpush1.msra.mxu0 0.0
    %3597 = vmatprep.subr.mxu0 0.0
    %3598 = vmatpush1.msra.mxu0 0.0
    %3599 = vmatprep.subr.mxu0 0.0
    %3600 = vmatpush1.msra.mxu0 0.0
    %3601 = vmatprep.subr.mxu0 0.0
    %3602 = vmatpush1.msra.mxu0 0.0
    %3603 = vmatprep.subr.mxu0 0.0
    %3604 = vmatpush1.msra.mxu0 0.0
    %3605 = vmatprep.subr.mxu0 0.0
    %3606 = vmatpush1.msra.mxu0 0.0
    %3607 = vmatprep.subr.mxu0 0.0
    %3608 = vmatpush1.msra.mxu0 0.0
    %3609 = vmatprep.subr.mxu0 0.0
    %3610 = vmatpush1.msra.mxu0 0.0
    %3611 = vmatprep.subr.mxu0 0.0
    %3612 = vmatpush1.msra.mxu0 0.0
    %3613 = vmatprep.subr.mxu0 0.0
    %3614 = vmatpush1.msra.mxu0 0.0
    %3615 = vmatprep.subr.mxu0 0.0
    %3616 = vmatpush1.msra.mxu0 0.0
    %3617 = vmatprep.subr.mxu0 0.0
    %3618 = vmatpush1.msra.mxu0 0.0
    %3619 = vmatprep.subr.mxu0 0.0
    %3620 = vmatpush1.msra.mxu0 0.0
    %3621 = vmatprep.subr.mxu0 0.0
    %3622 = vmatpush1.msra.mxu0 0.0
    %3623 = vmatprep.subr.mxu0 0.0
    %3624 = vmatpush1.msra.mxu0 0.0
    %3625 = vmatprep.subr.mxu0 0.0
    %3626 = vmatpush1.msra.mxu0 0.0
    %3627 = vmatprep.subr.mxu0 0.0
    %3628 = vmatpush1.msra.mxu0 0.0
    %3629 = vmatprep.mubr.f32.mxu0 0.0
    %3630 = vmatmul.mubr.f32.gmra.mrb[0].mxu0 %v3563
    %v3631 = vpop.f32.mrb[0].mxu0
    %v3632 = vadd.f32 %v3561, %v3631
    %v3633 = vpop.f32.mrb[0].mxu0
    %3634 = vdwg.mxu0
    %v3635 = vadd.f32 %v3632, %v967
    %v3636 = vxor.u32 %v3635, 2147483648
    %v3637 = vmul.f32 %v3636, 1.442695
    %v3638 = vpow.pop %v3637
    %v3639 = vadd.f32 %v3638, 1.0
    %v3640 = vrcp.pop %v3639
    %v3641 = vmul.f32 1.0, %v3640
    %v3642 = vtanh.pop %v3635
    %v3643 = vmul.f32 %v3641, %v2989
    %3645 = vrot.lane.b32.xlu0 %v3642, 96
    %v3646 = vpop.permute.xlu0 %3645
    %v3648 = vmul.f32 %v3641, %v3646
    %3650 = vrot.lane.b32.xlu0 %v3648, 16
    %v3651 = vpop.permute.xlu0 %3650
    %v3653 = vadd.f32 %v3643, %v3651
    %v3654 = vtanh.pop %v3653
    %3656 = vrot.lane.b32.xlu0 %v3654, 32
    %v3657 = vpop.permute.xlu0 %3656
    %v3659 = vmul.f32 %v3641, %v3657
    %3661 = vrot.lane.b32.xlu0 %v3659, 80
    %v3662 = vpop.permute.xlu0 %3661
    %v3663 = vsel %vm293, %v3662, 0
    %3665 = vmatprep.subr.mxu0 0.0
    %3666 = vmatpush1.msra.mxu0 %v289
    %3667 = vmatprep.subr.mxu0 0.0
    %3668 = vmatpush1.msra.mxu0 %v290
    %3669 = vmatprep.subr.mxu0 0.0
    %3670 = vmatpush1.msra.mxu0 0.0
    %3671 = vmatprep.subr.mxu0 0.0
    %3672 = vmatpush1.msra.mxu0 0.0
    %3673 = vmatprep.subr.mxu0 0.0
    %3674 = vmatpush1.msra.mxu0 0.0
    %3675 = vmatprep.subr.mxu0 0.0
    %3676 = vmatpush1.msra.mxu0 0.0
    %3677 = vmatprep.subr.mxu0 0.0
    %3678 = vmatpush1.msra.mxu0 0.0
    %3679 = vmatprep.subr.mxu0 0.0
    %3680 = vmatpush1.msra.mxu0 0.0
    %3681 = vmatprep.subr.mxu0 0.0
    %3682 = vmatpush1.msra.mxu0 0.0
    %3683 = vmatprep.subr.mxu0 0.0
    %3684 = vmatpush1.msra.mxu0 0.0
    %3685 = vmatprep.subr.mxu0 0.0
    %3686 = vmatpush1.msra.mxu0 0.0
    %3687 = vmatprep.subr.mxu0 0.0
    %3688 = vmatpush1.msra.mxu0 0.0
    %3689 = vmatprep.subr.mxu0 0.0
    %3690 = vmatpush1.msra.mxu0 0.0
    %3691 = vmatprep.subr.mxu0 0.0
    %3692 = vmatpush1.msra.mxu0 0.0
    %3693 = vmatprep.subr.mxu0 0.0
    %3694 = vmatpush1.msra.mxu0 0.0
    %3695 = vmatprep.subr.mxu0 0.0
    %3696 = vmatpush1.msra.mxu0 0.0
    %3697 = vmatprep.subr.mxu0 0.0
    %3698 = vmatpush1.msra.mxu0 0.0
    %3699 = vmatprep.subr.mxu0 0.0
    %3700 = vmatpush1.msra.mxu0 0.0
    %3701 = vmatprep.subr.mxu0 0.0
    %3702 = vmatpush1.msra.mxu0 0.0
    %3703 = vmatprep.subr.mxu0 0.0
    %3704 = vmatpush1.msra.mxu0 0.0
    %3705 = vmatprep.subr.mxu0 0.0
    %3706 = vmatpush1.msra.mxu0 0.0
    %3707 = vmatprep.subr.mxu0 0.0
    %3708 = vmatpush1.msra.mxu0 0.0
    %3709 = vmatprep.subr.mxu0 0.0
    %3710 = vmatpush1.msra.mxu0 0.0
    %3711 = vmatprep.subr.mxu0 0.0
    %3712 = vmatpush1.msra.mxu0 0.0
    %3713 = vmatprep.subr.mxu0 0.0
    %3714 = vmatpush1.msra.mxu0 0.0
    %3715 = vmatprep.subr.mxu0 0.0
    %3716 = vmatpush1.msra.mxu0 0.0
    %3717 = vmatprep.subr.mxu0 0.0
    %3718 = vmatpush1.msra.mxu0 0.0
    %3719 = vmatprep.subr.mxu0 0.0
    %3720 = vmatpush1.msra.mxu0 0.0
    %3721 = vmatprep.subr.mxu0 0.0
    %3722 = vmatpush1.msra.mxu0 0.0
    %3723 = vmatprep.subr.mxu0 0.0
    %3724 = vmatpush1.msra.mxu0 0.0
    %3725 = vmatprep.subr.mxu0 0.0
    %3726 = vmatpush1.msra.mxu0 0.0
    %3727 = vmatprep.subr.mxu0 0.0
    %3728 = vmatpush1.msra.mxu0 0.0
    %3729 = vmatprep.mubr.f32.mxu0 0.0
    %3730 = vmatmul.mubr.f32.gmra.mrb[0].mxu0 %v3663
    %v3731 = vpop.f32.mrb[0].mxu0
    %v3732 = vadd.f32 0.0, %v3731
    %v3733 = vpop.f32.mrb[0].mxu0
    %3734 = vdwg.mxu0
    %3735 = vmatprep.subr.mxu0 0.0
    %3736 = vmatpush1.msra.mxu0 %v366
    %3737 = vmatprep.subr.mxu0 0.0
    %3738 = vmatpush1.msra.mxu0 %v367
    %3739 = vmatprep.subr.mxu0 0.0
    %3740 = vmatpush1.msra.mxu0 0.0
    %3741 = vmatprep.subr.mxu0 0.0
    %3742 = vmatpush1.msra.mxu0 0.0
    %3743 = vmatprep.subr.mxu0 0.0
    %3744 = vmatpush1.msra.mxu0 0.0
    %3745 = vmatprep.subr.mxu0 0.0
    %3746 = vmatpush1.msra.mxu0 0.0
    %3747 = vmatprep.subr.mxu0 0.0
    %3748 = vmatpush1.msra.mxu0 0.0
    %3749 = vmatprep.subr.mxu0 0.0
    %3750 = vmatpush1.msra.mxu0 0.0
    %3751 = vmatprep.subr.mxu0 0.0
    %3752 = vmatpush1.msra.mxu0 0.0
    %3753 = vmatprep.subr.mxu0 0.0
    %3754 = vmatpush1.msra.mxu0 0.0
    %3755 = vmatprep.subr.mxu0 0.0
    %3756 = vmatpush1.msra.mxu0 0.0
    %3757 = vmatprep.subr.mxu0 0.0
    %3758 = vmatpush1.msra.mxu0 0.0
    %3759 = vmatprep.subr.mxu0 0.0
    %3760 = vmatpush1.msra.mxu0 0.0
    %3761 = vmatprep.subr.mxu0 0.0
    %3762 = vmatpush1.msra.mxu0 0.0
    %3763 = vmatprep.subr.mxu0 0.0
    %3764 = vmatpush1.msra.mxu0 0.0
    %3765 = vmatprep.subr.mxu0 0.0
    %3766 = vmatpush1.msra.mxu0 0.0
    %3767 = vmatprep.subr.mxu0 0.0
    %3768 = vmatpush1.msra.mxu0 0.0
    %3769 = vmatprep.subr.mxu0 0.0
    %3770 = vmatpush1.msra.mxu0 0.0
    %3771 = vmatprep.subr.mxu0 0.0
    %3772 = vmatpush1.msra.mxu0 0.0
    %3773 = vmatprep.subr.mxu0 0.0
    %3774 = vmatpush1.msra.mxu0 0.0
    %3775 = vmatprep.subr.mxu0 0.0
    %3776 = vmatpush1.msra.mxu0 0.0
    %3777 = vmatprep.subr.mxu0 0.0
    %3778 = vmatpush1.msra.mxu0 0.0
    %3779 = vmatprep.subr.mxu0 0.0
    %3780 = vmatpush1.msra.mxu0 0.0
    %3781 = vmatprep.subr.mxu0 0.0
    %3782 = vmatpush1.msra.mxu0 0.0
    %3783 = vmatprep.subr.mxu0 0.0
    %3784 = vmatpush1.msra.mxu0 0.0
    %3785 = vmatprep.subr.mxu0 0.0
    %3786 = vmatpush1.msra.mxu0 0.0
    %3787 = vmatprep.subr.mxu0 0.0
    %3788 = vmatpush1.msra.mxu0 0.0
    %3789 = vmatprep.subr.mxu0 0.0
    %3790 = vmatpush1.msra.mxu0 0.0
    %3791 = vmatprep.subr.mxu0 0.0
    %3792 = vmatpush1.msra.mxu0 0.0
    %3793 = vmatprep.subr.mxu0 0.0
    %3794 = vmatpush1.msra.mxu0 0.0
    %3795 = vmatprep.subr.mxu0 0.0
    %3796 = vmatpush1.msra.mxu0 0.0
    %3797 = vmatprep.subr.mxu0 0.0
    %3798 = vmatpush1.msra.mxu0 0.0
    %3799 = vmatprep.mubr.f32.mxu0 0.0
    %3800 = vmatmul.mubr.f32.gmra.mrb[0].mxu0 %v3563
    %v3801 = vpop.f32.mrb[0].mxu0
    %v3802 = vadd.f32 0.0, %v3801
    %v3803 = vpop.f32.mrb[0].mxu0
    %3804 = vdwg.mxu0
    %v3806 = vsel %vm453, %v3732, 0
    %3808 = vmatprep.subr.mxu0 0.0
    %3809 = vmatpush1.msra.mxu0 %v3806
    %3810 = vmatprep.subr.mxu0 0.0
    %3811 = vmatpush1.msra.mxu0 0.0
    %3812 = vmatprep.subr.mxu0 0.0
    %3813 = vmatpush1.msra.mxu0 0.0
    %3814 = vmatprep.subr.mxu0 0.0
    %3815 = vmatpush1.msra.mxu0 0.0
    %3816 = vmatprep.subr.mxu0 0.0
    %3817 = vmatpush1.msra.mxu0 0.0
    %3818 = vmatprep.subr.mxu0 0.0
    %3819 = vmatpush1.msra.mxu0 0.0
    %3820 = vmatprep.subr.mxu0 0.0
    %3821 = vmatpush1.msra.mxu0 0.0
    %3822 = vmatprep.subr.mxu0 0.0
    %3823 = vmatpush1.msra.mxu0 0.0
    %3824 = vmatprep.subr.mxu0 0.0
    %3825 = vmatpush1.msra.mxu0 0.0
    %3826 = vmatprep.subr.mxu0 0.0
    %3827 = vmatpush1.msra.mxu0 0.0
    %3828 = vmatprep.subr.mxu0 0.0
    %3829 = vmatpush1.msra.mxu0 0.0
    %3830 = vmatprep.subr.mxu0 0.0
    %3831 = vmatpush1.msra.mxu0 0.0
    %3832 = vmatprep.subr.mxu0 0.0
    %3833 = vmatpush1.msra.mxu0 0.0
    %3834 = vmatprep.subr.mxu0 0.0
    %3835 = vmatpush1.msra.mxu0 0.0
    %3836 = vmatprep.subr.mxu0 0.0
    %3837 = vmatpush1.msra.mxu0 0.0
    %3838 = vmatprep.subr.mxu0 0.0
    %3839 = vmatpush1.msra.mxu0 0.0
    %3840 = vmatprep.subr.mxu0 0.0
    %3841 = vmatpush1.msra.mxu0 0.0
    %3842 = vmatprep.subr.mxu0 0.0
    %3843 = vmatpush1.msra.mxu0 0.0
    %3844 = vmatprep.subr.mxu0 0.0
    %3845 = vmatpush1.msra.mxu0 0.0
    %3846 = vmatprep.subr.mxu0 0.0
    %3847 = vmatpush1.msra.mxu0 0.0
    %3848 = vmatprep.subr.mxu0 0.0
    %3849 = vmatpush1.msra.mxu0 0.0
    %3850 = vmatprep.subr.mxu0 0.0
    %3851 = vmatpush1.msra.mxu0 0.0
    %3852 = vmatprep.subr.mxu0 0.0
    %3853 = vmatpush1.msra.mxu0 0.0
    %3854 = vmatprep.subr.mxu0 0.0
    %3855 = vmatpush1.msra.mxu0 0.0
    %3856 = vmatprep.subr.mxu0 0.0
    %3857 = vmatpush1.msra.mxu0 0.0
    %3858 = vmatprep.subr.mxu0 0.0
    %3859 = vmatpush1.msra.mxu0 0.0
    %3860 = vmatprep.subr.mxu0 0.0
    %3861 = vmatpush1.msra.mxu0 0.0
    %3862 = vmatprep.subr.mxu0 0.0
    %3863 = vmatpush1.msra.mxu0 0.0
    %3864 = vmatprep.subr.mxu0 0.0
    %3865 = vmatpush1.msra.mxu0 0.0
    %3866 = vmatprep.subr.mxu0 0.0
    %3867 = vmatpush1.msra.mxu0 0.0
    %3868 = vmatprep.subr.mxu0 0.0
    %3869 = vmatpush1.msra.mxu0 0.0
    %3870 = vmatprep.subr.mxu0 0.0
    %3871 = vmatpush1.msra.mxu0 0.0
    %3872 = vmatprep.mubr.f32.mxu0 0.0
    %3873 = vmatmul.mubr.f32.gmra.mrb[0].mxu0 %v442
    %v3874 = vpop.f32.mrb[0].mxu0
    %v3875 = vadd.f32 %v152, %v3874
    %v3876 = vpop.f32.mrb[0].mxu0
    %3877 = vmatprep.mubr.f32.mxu0 0.0
    %3878 = vmatmul.mubr.f32.gmra.mrb[0].mxu0 %v445
    %v3879 = vpop.f32.mrb[0].mxu0
    %v3880 = vadd.f32 %v157, %v3879
    %v3881 = vpop.f32.mrb[0].mxu0
    %3882 = vmatprep.mubr.f32.mxu0 0.0
    %3883 = vmatmul.mubr.f32.gmra.mrb[0].mxu0 %v448
    %v3884 = vpop.f32.mrb[0].mxu0
    %v3885 = vadd.f32 %v162, %v3884
    %v3886 = vpop.f32.mrb[0].mxu0
    %3887 = vmatprep.mubr.f32.mxu0 0.0
    %3888 = vmatmul.mubr.f32.gmra.mrb[0].mxu0 %v451
    %v3889 = vpop.f32.mrb[0].mxu0
    %v3890 = vadd.f32 %v167, %v3889
    %v3891 = vpop.f32.mrb[0].mxu0
    %3892 = vdwg.mxu0
    %v3893 = vtanh.pop %v3875
    %v3894 = vtanh.pop %v3880
    %v3895 = vtanh.pop %v3885
    %v3896 = vtanh.pop %v3890
    %v3898 = vsel %vm293, %v3893, 0
    %v3901 = vsel %vm293, %v3894, 0
    %v3904 = vsel %vm293, %v3895, 0
    %v3907 = vsel %vm293, %v3896, 0
    %3909 = vmatprep.subr.mxu0 0.0
    %3910 = vmatpush1.msra.mxu0 %v175
    %3911 = vmatprep.subr.mxu0 0.0
    %3912 = vmatpush1.msra.mxu0 %v176
    %3913 = vmatprep.subr.mxu0 0.0
    %3914 = vmatpush1.msra.mxu0 0.0
    %3915 = vmatprep.subr.mxu0 0.0
    %3916 = vmatpush1.msra.mxu0 0.0
    %3917 = vmatprep.subr.mxu0 0.0
    %3918 = vmatpush1.msra.mxu0 0.0
    %3919 = vmatprep.subr.mxu0 0.0
    %3920 = vmatpush1.msra.mxu0 0.0
    %3921 = vmatprep.subr.mxu0 0.0
    %3922 = vmatpush1.msra.mxu0 0.0
    %3923 = vmatprep.subr.mxu0 0.0
    %3924 = vmatpush1.msra.mxu0 0.0
    %3925 = vmatprep.subr.mxu0 0.0
    %3926 = vmatpush1.msra.mxu0 0.0
    %3927 = vmatprep.subr.mxu0 0.0
    %3928 = vmatpush1.msra.mxu0 0.0
    %3929 = vmatprep.subr.mxu0 0.0
    %3930 = vmatpush1.msra.mxu0 0.0
    %3931 = vmatprep.subr.mxu0 0.0
    %3932 = vmatpush1.msra.mxu0 0.0
    %3933 = vmatprep.subr.mxu0 0.0
    %3934 = vmatpush1.msra.mxu0 0.0
    %3935 = vmatprep.subr.mxu0 0.0
    %3936 = vmatpush1.msra.mxu0 0.0
    %3937 = vmatprep.subr.mxu0 0.0
    %3938 = vmatpush1.msra.mxu0 0.0
    %3939 = vmatprep.subr.mxu0 0.0
    %3940 = vmatpush1.msra.mxu0 0.0
    %3941 = vmatprep.subr.mxu0 0.0
    %3942 = vmatpush1.msra.mxu0 0.0
    %3943 = vmatprep.subr.mxu0 0.0
    %3944 = vmatpush1.msra.mxu0 0.0
    %3945 = vmatprep.subr.mxu0 0.0
    %3946 = vmatpush1.msra.mxu0 0.0
    %3947 = vmatprep.subr.mxu0 0.0
    %3948 = vmatpush1.msra.mxu0 0.0
    %3949 = vmatprep.subr.mxu0 0.0
    %3950 = vmatpush1.msra.mxu0 0.0
    %3951 = vmatprep.subr.mxu0 0.0
    %3952 = vmatpush1.msra.mxu0 0.0
    %3953 = vmatprep.subr.mxu0 0.0
    %3954 = vmatpush1.msra.mxu0 0.0
    %3955 = vmatprep.subr.mxu0 0.0
    %3956 = vmatpush1.msra.mxu0 0.0
    %3957 = vmatprep.subr.mxu0 0.0
    %3958 = vmatpush1.msra.mxu0 0.0
    %3959 = vmatprep.subr.mxu0 0.0
    %3960 = vmatpush1.msra.mxu0 0.0
    %3961 = vmatprep.subr.mxu0 0.0
    %3962 = vmatpush1.msra.mxu0 0.0
    %3963 = vmatprep.subr.mxu0 0.0
    %3964 = vmatpush1.msra.mxu0 0.0
    %3965 = vmatprep.subr.mxu0 0.0
    %3966 = vmatpush1.msra.mxu0 0.0
    %3967 = vmatprep.subr.mxu0 0.0
    %3968 = vmatpush1.msra.mxu0 0.0
    %3969 = vmatprep.subr.mxu0 0.0
    %3970 = vmatpush1.msra.mxu0 0.0
    %3971 = vmatprep.subr.mxu0 0.0
    %3972 = vmatpush1.msra.mxu0 0.0
    %3973 = vmatprep.mubr.f32.mxu0 0.0
    %3974 = vmatmul.mubr.f32.gmra.mrb[0].mxu0 %v3898
    %v3975 = vpop.f32.mrb[0].mxu0
    %v3976 = vadd.f32 0.0, %v3975
    %v3977 = vpop.f32.mrb[0].mxu0
    %3978 = vmatprep.mubr.f32.mxu0 0.0
    %3979 = vmatmul.mubr.f32.gmra.mrb[0].mxu0 %v3901
    %v3980 = vpop.f32.mrb[0].mxu0
    %v3981 = vadd.f32 0.0, %v3980
    %v3982 = vpop.f32.mrb[0].mxu0
    %3983 = vmatprep.mubr.f32.mxu0 0.0
    %3984 = vmatmul.mubr.f32.gmra.mrb[0].mxu0 %v3904
    %v3985 = vpop.f32.mrb[0].mxu0
    %v3986 = vadd.f32 0.0, %v3985
    %v3987 = vpop.f32.mrb[0].mxu0
    %3988 = vmatprep.mubr.f32.mxu0 0.0
    %3989 = vmatmul.mubr.f32.gmra.mrb[0].mxu0 %v3907
    %v3990 = vpop.f32.mrb[0].mxu0
    %v3991 = vadd.f32 0.0, %v3990
    %v3992 = vpop.f32.mrb[0].mxu0
    %3993 = vdwg.mxu0
    %v3994 = vsel %vm643, %v3976, -inf
    %v3995 = vsel %vm643, %v3981, -inf
    %v3996 = vsel %vm643, %v3986, -inf
    %v3997 = vsel %vm647, %v3991, -inf
    %v3998 = vmax.f32 %v3994, %v3995
    %v3999 = vmax.f32 %v3996, %v3997
    %v4000 = vmax.f32 %v3998, %v3999
    %v4001 = vrot.slane %v4000, 4
    %v4002 = vmax.f32 %v4000, %v4001
    %v4003 = vrot.slane %v4002, 2
    %v4004 = vmax.f32 %v4002, %v4003
    %v4005 = vrot.slane %v4004, 1
    %v4006 = vmax.f32 %v4004, %v4005
    %v4007 = vsub.f32 %v3976, %v4006
    %v4008 = vsub.f32 %v3981, %v4006
    %v4009 = vsub.f32 %v3986, %v4006
    %v4010 = vsub.f32 %v3991, %v4006
    %v4011 = vmul.f32 %v4007, 1.442695
    %v4012 = vpow.pop %v4011
    %v4013 = vmul.f32 %v4008, 1.442695
    %v4014 = vpow.pop %v4013
    %v4015 = vmul.f32 %v4009, 1.442695
    %v4016 = vpow.pop %v4015
    %v4017 = vmul.f32 %v4010, 1.442695
    %v4018 = vpow.pop %v4017
    %4020 = vset.pattern.permute.xlu0 0
    %4021 = vperm.xlu0 %4020, %v4012
    %v4022 = vpop.permute.xlu0 %4021
    %4025 = vset.pattern.permute.xlu0 0
    %4026 = vperm.xlu0 %4025, %v4014
    %v4027 = vpop.permute.xlu0 %4026
    %4030 = vset.pattern.permute.xlu0 0
    %4031 = vperm.xlu0 %4030, %v4016
    %v4032 = vpop.permute.xlu0 %4031
    %4035 = vset.pattern.permute.xlu0 0
    %4036 = vperm.xlu0 %4035, %v4018
    %v4037 = vpop.permute.xlu0 %4036
    %v4039 = vmul.f32 %v4022, %v61
    %v4040 = vmul.f32 %v4027, %v62
    %v4041 = vmul.f32 %v4032, %v63
    %v4042 = vmul.f32 %v4037, %v64
    %v4044 = vsel %vm453, %v4042, 0
    %4046 = vmatprep.subr.mxu0 0.0
    %4047 = vmatpush1.msra.mxu0 %v4039
    %4048 = vmatprep.subr.mxu0 0.0
    %4049 = vmatpush1.msra.mxu0 %v4040
    %4050 = vmatprep.subr.mxu0 0.0
    %4051 = vmatpush1.msra.mxu0 %v4041
    %4052 = vmatprep.subr.mxu0 0.0
    %4053 = vmatpush1.msra.mxu0 %v4044
    %4054 = vmatprep.subr.mxu0 0.0
    %4055 = vmatpush1.msra.mxu0 0.0
    %4056 = vmatprep.subr.mxu0 0.0
    %4057 = vmatpush1.msra.mxu0 0.0
    %4058 = vmatprep.subr.mxu0 0.0
    %4059 = vmatpush1.msra.mxu0 0.0
    %4060 = vmatprep.subr.mxu0 0.0
    %4061 = vmatpush1.msra.mxu0 0.0
    %4062 = vmatprep.subr.mxu0 0.0
    %4063 = vmatpush1.msra.mxu0 0.0
    %4064 = vmatprep.subr.mxu0 0.0
    %4065 = vmatpush1.msra.mxu0 0.0
    %4066 = vmatprep.subr.mxu0 0.0
    %4067 = vmatpush1.msra.mxu0 0.0
    %4068 = vmatprep.subr.mxu0 0.0
    %4069 = vmatpush1.msra.mxu0 0.0
    %4070 = vmatprep.subr.mxu0 0.0
    %4071 = vmatpush1.msra.mxu0 0.0
    %4072 = vmatprep.subr.mxu0 0.0
    %4073 = vmatpush1.msra.mxu0 0.0
    %4074 = vmatprep.subr.mxu0 0.0
    %4075 = vmatpush1.msra.mxu0 0.0
    %4076 = vmatprep.subr.mxu0 0.0
    %4077 = vmatpush1.msra.mxu0 0.0
    %4078 = vmatprep.subr.mxu0 0.0
    %4079 = vmatpush1.msra.mxu0 0.0
    %4080 = vmatprep.subr.mxu0 0.0
    %4081 = vmatpush1.msra.mxu0 0.0
    %4082 = vmatprep.subr.mxu0 0.0
    %4083 = vmatpush1.msra.mxu0 0.0
    %4084 = vmatprep.subr.mxu0 0.0
    %4085 = vmatpush1.msra.mxu0 0.0
    %4086 = vmatprep.subr.mxu0 0.0
    %4087 = vmatpush1.msra.mxu0 0.0
    %4088 = vmatprep.subr.mxu0 0.0
    %4089 = vmatpush1.msra.mxu0 0.0
    %4090 = vmatprep.subr.mxu0 0.0
    %4091 = vmatpush1.msra.mxu0 0.0
    %4092 = vmatprep.subr.mxu0 0.0
    %4093 = vmatpush1.msra.mxu0 0.0
    %4094 = vmatprep.subr.mxu0 0.0
    %4095 = vmatpush1.msra.mxu0 0.0
    %4096 = vmatprep.subr.mxu0 0.0
    %4097 = vmatpush1.msra.mxu0 0.0
    %4098 = vmatprep.subr.mxu0 0.0
    %4099 = vmatpush1.msra.mxu0 0.0
    %4100 = vmatprep.subr.mxu0 0.0
    %4101 = vmatpush1.msra.mxu0 0.0
    %4102 = vmatprep.subr.mxu0 0.0
    %4103 = vmatpush1.msra.mxu0 0.0
    %4104 = vmatprep.subr.mxu0 0.0
    %4105 = vmatpush1.msra.mxu0 0.0
    %4106 = vmatprep.subr.mxu0 0.0
    %4107 = vmatpush1.msra.mxu0 0.0
    %4108 = vmatprep.subr.mxu0 0.0
    %4109 = vmatpush1.msra.mxu0 0.0
    %4110 = vmatprep.mubr.f32.mxu0 0.0
    %4111 = vmatmul.mubr.f32.gmra.mrb[0].mxu0 %v696
    %v4112 = vpop.f32.mrb[0].mxu0
    %v4113 = vadd.f32 0.0, %v4112
    %v4114 = vpop.f32.mrb[0].mxu0
    %4115 = vdwg.mxu0
    %v4116 = vrcp.pop %v4113
    %4118 = vset.pattern.permute.xlu0 16
    %4119 = vperm.xlu0 %4118, %v4116
    %v4120 = vpop.permute.xlu0 %4119
    %v4122 = vmul.f32 %v4113, %v4120
    %v4124 = vrot.slane %v279, 4
    %v4127 = vsel %vm293, %v4122, 0
    %4129 = vmatprep.subr.mxu0 0.0
    %4130 = vmatpush1.msra.mxu0 %v778
    %4131 = vmatprep.subr.mxu0 0.0
    %4132 = vmatpush1.msra.mxu0 %v779
    %4133 = vmatprep.subr.mxu0 0.0
    %4134 = vmatpush1.msra.mxu0 0.0
    %4135 = vmatprep.subr.mxu0 0.0
    %4136 = vmatpush1.msra.mxu0 0.0
    %4137 = vmatprep.subr.mxu0 0.0
    %4138 = vmatpush1.msra.mxu0 0.0
    %4139 = vmatprep.subr.mxu0 0.0
    %4140 = vmatpush1.msra.mxu0 0.0
    %4141 = vmatprep.subr.mxu0 0.0
    %4142 = vmatpush1.msra.mxu0 0.0
    %4143 = vmatprep.subr.mxu0 0.0
    %4144 = vmatpush1.msra.mxu0 0.0
    %4145 = vmatprep.subr.mxu0 0.0
    %4146 = vmatpush1.msra.mxu0 0.0
    %4147 = vmatprep.subr.mxu0 0.0
    %4148 = vmatpush1.msra.mxu0 0.0
    %4149 = vmatprep.subr.mxu0 0.0
    %4150 = vmatpush1.msra.mxu0 0.0
    %4151 = vmatprep.subr.mxu0 0.0
    %4152 = vmatpush1.msra.mxu0 0.0
    %4153 = vmatprep.subr.mxu0 0.0
    %4154 = vmatpush1.msra.mxu0 0.0
    %4155 = vmatprep.subr.mxu0 0.0
    %4156 = vmatpush1.msra.mxu0 0.0
    %4157 = vmatprep.subr.mxu0 0.0
    %4158 = vmatpush1.msra.mxu0 0.0
    %4159 = vmatprep.subr.mxu0 0.0
    %4160 = vmatpush1.msra.mxu0 0.0
    %4161 = vmatprep.subr.mxu0 0.0
    %4162 = vmatpush1.msra.mxu0 0.0
    %4163 = vmatprep.subr.mxu0 0.0
    %4164 = vmatpush1.msra.mxu0 0.0
    %4165 = vmatprep.subr.mxu0 0.0
    %4166 = vmatpush1.msra.mxu0 0.0
    %4167 = vmatprep.subr.mxu0 0.0
    %4168 = vmatpush1.msra.mxu0 0.0
    %4169 = vmatprep.subr.mxu0 0.0
    %4170 = vmatpush1.msra.mxu0 0.0
    %4171 = vmatprep.subr.mxu0 0.0
    %4172 = vmatpush1.msra.mxu0 0.0
    %4173 = vmatprep.subr.mxu0 0.0
    %4174 = vmatpush1.msra.mxu0 0.0
    %4175 = vmatprep.subr.mxu0 0.0
    %4176 = vmatpush1.msra.mxu0 0.0
    %4177 = vmatprep.subr.mxu0 0.0
    %4178 = vmatpush1.msra.mxu0 0.0
    %4179 = vmatprep.subr.mxu0 0.0
    %4180 = vmatpush1.msra.mxu0 0.0
    %4181 = vmatprep.subr.mxu0 0.0
    %4182 = vmatpush1.msra.mxu0 0.0
    %4183 = vmatprep.subr.mxu0 0.0
    %4184 = vmatpush1.msra.mxu0 0.0
    %4185 = vmatprep.subr.mxu0 0.0
    %4186 = vmatpush1.msra.mxu0 0.0
    %4187 = vmatprep.subr.mxu0 0.0
    %4188 = vmatpush1.msra.mxu0 0.0
    %4189 = vmatprep.subr.mxu0 0.0
    %4190 = vmatpush1.msra.mxu0 0.0
    %4191 = vmatprep.subr.mxu0 0.0
    %4192 = vmatpush1.msra.mxu0 0.0
    %4193 = vmatprep.mubr.f32.mxu0 0.0
    %4194 = vmatmul.mubr.f32.gmra.mrb[0].mxu0 %v4127
    %v4195 = vpop.f32.mrb[0].mxu0
    %v4196 = vadd.f32 %v4124, %v4195
    %v4197 = vpop.f32.mrb[0].mxu0
    %4198 = vdwg.mxu0
    %v4199 = vadd.f32 %v4196, %v3802
    %v4200 = vxor.u32 %v4199, 2147483648
    %v4201 = vmul.f32 %v4200, 1.442695
    %v4202 = vpow.pop %v4201
    %v4203 = vadd.f32 %v4202, 1.0
    %v4204 = vrcp.pop %v4203
    %v4205 = vmul.f32 1.0, %v4204
    %v4206 = vtanh.pop %v4199
    %v4207 = vmul.f32 %v4205, %v3550
    %4209 = vrot.lane.b32.xlu0 %v4206, 96
    %v4210 = vpop.permute.xlu0 %4209
    %v4212 = vmul.f32 %v4205, %v4210
    %4214 = vrot.lane.b32.xlu0 %v4212, 16
    %v4215 = vpop.permute.xlu0 %4214
    %v4217 = vadd.f32 %v4207, %v4215
    %v4218 = vtanh.pop %v4217
    %4220 = vrot.lane.b32.xlu0 %v4218, 32
    %v4221 = vpop.permute.xlu0 %4220
    %v4223 = vmul.f32 %v4205, %v4221
    %4225 = vrot.lane.b32.xlu0 %v4223, 80
    %v4226 = vpop.permute.xlu0 %4225
    %4227 = vrot.lane.b32.xlu0 %v3732, 112
    %v4228 = vpop.permute.xlu0 %4227
    %v4230 = vsel %vm293, %v4226, 0
    %4232 = vmatprep.subr.mxu0 0.0
    %4233 = vmatpush1.msra.mxu0 %v882
    %4234 = vmatprep.subr.mxu0 0.0
    %4235 = vmatpush1.msra.mxu0 %v883
    %4236 = vmatprep.subr.mxu0 0.0
    %4237 = vmatpush1.msra.mxu0 0.0
    %4238 = vmatprep.subr.mxu0 0.0
    %4239 = vmatpush1.msra.mxu0 0.0
    %4240 = vmatprep.subr.mxu0 0.0
    %4241 = vmatpush1.msra.mxu0 0.0
    %4242 = vmatprep.subr.mxu0 0.0
    %4243 = vmatpush1.msra.mxu0 0.0
    %4244 = vmatprep.subr.mxu0 0.0
    %4245 = vmatpush1.msra.mxu0 0.0
    %4246 = vmatprep.subr.mxu0 0.0
    %4247 = vmatpush1.msra.mxu0 0.0
    %4248 = vmatprep.subr.mxu0 0.0
    %4249 = vmatpush1.msra.mxu0 0.0
    %4250 = vmatprep.subr.mxu0 0.0
    %4251 = vmatpush1.msra.mxu0 0.0
    %4252 = vmatprep.subr.mxu0 0.0
    %4253 = vmatpush1.msra.mxu0 0.0
    %4254 = vmatprep.subr.mxu0 0.0
    %4255 = vmatpush1.msra.mxu0 0.0
    %4256 = vmatprep.subr.mxu0 0.0
    %4257 = vmatpush1.msra.mxu0 0.0
    %4258 = vmatprep.subr.mxu0 0.0
    %4259 = vmatpush1.msra.mxu0 0.0
    %4260 = vmatprep.subr.mxu0 0.0
    %4261 = vmatpush1.msra.mxu0 0.0
    %4262 = vmatprep.subr.mxu0 0.0
    %4263 = vmatpush1.msra.mxu0 0.0
    %4264 = vmatprep.subr.mxu0 0.0
    %4265 = vmatpush1.msra.mxu0 0.0
    %4266 = vmatprep.subr.mxu0 0.0
    %4267 = vmatpush1.msra.mxu0 0.0
    %4268 = vmatprep.subr.mxu0 0.0
    %4269 = vmatpush1.msra.mxu0 0.0
    %4270 = vmatprep.subr.mxu0 0.0
    %4271 = vmatpush1.msra.mxu0 0.0
    %4272 = vmatprep.subr.mxu0 0.0
    %4273 = vmatpush1.msra.mxu0 0.0
    %4274 = vmatprep.subr.mxu0 0.0
    %4275 = vmatpush1.msra.mxu0 0.0
    %4276 = vmatprep.subr.mxu0 0.0
    %4277 = vmatpush1.msra.mxu0 0.0
    %4278 = vmatprep.subr.mxu0 0.0
    %4279 = vmatpush1.msra.mxu0 0.0
    %4280 = vmatprep.subr.mxu0 0.0
    %4281 = vmatpush1.msra.mxu0 0.0
    %4282 = vmatprep.subr.mxu0 0.0
    %4283 = vmatpush1.msra.mxu0 0.0
    %4284 = vmatprep.subr.mxu0 0.0
    %4285 = vmatpush1.msra.mxu0 0.0
    %4286 = vmatprep.subr.mxu0 0.0
    %4287 = vmatpush1.msra.mxu0 0.0
    %4288 = vmatprep.subr.mxu0 0.0
    %4289 = vmatpush1.msra.mxu0 0.0
    %4290 = vmatprep.subr.mxu0 0.0
    %4291 = vmatpush1.msra.mxu0 0.0
    %4292 = vmatprep.subr.mxu0 0.0
    %4293 = vmatpush1.msra.mxu0 0.0
    %4294 = vmatprep.subr.mxu0 0.0
    %4295 = vmatpush1.msra.mxu0 0.0
    %4296 = vmatprep.mubr.f32.mxu0 0.0
    %4297 = vmatmul.mubr.f32.gmra.mrb[0].mxu0 %v4230
    %v4298 = vpop.f32.mrb[0].mxu0
    %v4299 = vadd.f32 %v4228, %v4298
    %v4300 = vpop.f32.mrb[0].mxu0
    %4301 = vdwg.mxu0
    %v4302 = vadd.f32 %v4299, %v967
    %v4303 = vxor.u32 %v4302, 2147483648
    %v4304 = vmul.f32 %v4303, 1.442695
    %v4305 = vpow.pop %v4304
    %v4306 = vadd.f32 %v4305, 1.0
    %v4307 = vrcp.pop %v4306
    %v4308 = vmul.f32 1.0, %v4307
    %v4309 = vtanh.pop %v4302
    %v4310 = vmul.f32 %v4308, %v3653
    %4312 = vrot.lane.b32.xlu0 %v4309, 96
    %v4313 = vpop.permute.xlu0 %4312
    %v4315 = vmul.f32 %v4308, %v4313
    %4317 = vrot.lane.b32.xlu0 %v4315, 16
    %v4318 = vpop.permute.xlu0 %4317
    %v4320 = vadd.f32 %v4310, %v4318
    %v4321 = vtanh.pop %v4320
    %4323 = vrot.lane.b32.xlu0 %v4321, 32
    %v4324 = vpop.permute.xlu0 %4323
    %v4326 = vmul.f32 %v4308, %v4324
    %4328 = vrot.lane.b32.xlu0 %v4326, 80
    %v4329 = vpop.permute.xlu0 %4328
    %v4330 = vsel %vm293, %v4329, 0
    %4332 = vmatprep.subr.mxu0 0.0
    %4333 = vmatpush1.msra.mxu0 %v289
    %4334 = vmatprep.subr.mxu0 0.0
    %4335 = vmatpush1.msra.mxu0 %v290
    %4336 = vmatprep.subr.mxu0 0.0
    %4337 = vmatpush1.msra.mxu0 0.0
    %4338 = vmatprep.subr.mxu0 0.0
    %4339 = vmatpush1.msra.mxu0 0.0
    %4340 = vmatprep.subr.mxu0 0.0
    %4341 = vmatpush1.msra.mxu0 0.0
    %4342 = vmatprep.subr.mxu0 0.0
    %4343 = vmatpush1.msra.mxu0 0.0
    %4344 = vmatprep.subr.mxu0 0.0
    %4345 = vmatpush1.msra.mxu0 0.0
    %4346 = vmatprep.subr.mxu0 0.0
    %4347 = vmatpush1.msra.mxu0 0.0
    %4348 = vmatprep.subr.mxu0 0.0
    %4349 = vmatpush1.msra.mxu0 0.0
    %4350 = vmatprep.subr.mxu0 0.0
    %4351 = vmatpush1.msra.mxu0 0.0
    %4352 = vmatprep.subr.mxu0 0.0
    %4353 = vmatpush1.msra.mxu0 0.0
    %4354 = vmatprep.subr.mxu0 0.0
    %4355 = vmatpush1.msra.mxu0 0.0
    %4356 = vmatprep.subr.mxu0 0.0
    %4357 = vmatpush1.msra.mxu0 0.0
    %4358 = vmatprep.subr.mxu0 0.0
    %4359 = vmatpush1.msra.mxu0 0.0
    %4360 = vmatprep.subr.mxu0 0.0
    %4361 = vmatpush1.msra.mxu0 0.0
    %4362 = vmatprep.subr.mxu0 0.0
    %4363 = vmatpush1.msra.mxu0 0.0
    %4364 = vmatprep.subr.mxu0 0.0
    %4365 = vmatpush1.msra.mxu0 0.0
    %4366 = vmatprep.subr.mxu0 0.0
    %4367 = vmatpush1.msra.mxu0 0.0
    %4368 = vmatprep.subr.mxu0 0.0
    %4369 = vmatpush1.msra.mxu0 0.0
    %4370 = vmatprep.subr.mxu0 0.0
    %4371 = vmatpush1.msra.mxu0 0.0
    %4372 = vmatprep.subr.mxu0 0.0
    %4373 = vmatpush1.msra.mxu0 0.0
    %4374 = vmatprep.subr.mxu0 0.0
    %4375 = vmatpush1.msra.mxu0 0.0
    %4376 = vmatprep.subr.mxu0 0.0
    %4377 = vmatpush1.msra.mxu0 0.0
    %4378 = vmatprep.subr.mxu0 0.0
    %4379 = vmatpush1.msra.mxu0 0.0
    %4380 = vmatprep.subr.mxu0 0.0
    %4381 = vmatpush1.msra.mxu0 0.0
    %4382 = vmatprep.subr.mxu0 0.0
    %4383 = vmatpush1.msra.mxu0 0.0
    %4384 = vmatprep.subr.mxu0 0.0
    %4385 = vmatpush1.msra.mxu0 0.0
    %4386 = vmatprep.subr.mxu0 0.0
    %4387 = vmatpush1.msra.mxu0 0.0
    %4388 = vmatprep.subr.mxu0 0.0
    %4389 = vmatpush1.msra.mxu0 0.0
    %4390 = vmatprep.subr.mxu0 0.0
    %4391 = vmatpush1.msra.mxu0 0.0
    %4392 = vmatprep.subr.mxu0 0.0
    %4393 = vmatpush1.msra.mxu0 0.0
    %4394 = vmatprep.subr.mxu0 0.0
    %4395 = vmatpush1.msra.mxu0 0.0
    %4396 = vmatprep.mubr.f32.mxu0 0.0
    %4397 = vmatmul.mubr.f32.gmra.mrb[0].mxu0 %v4330
    %v4398 = vpop.f32.mrb[0].mxu0
    %v4399 = vadd.f32 0.0, %v4398
    %v4400 = vpop.f32.mrb[0].mxu0
    %4401 = vdwg.mxu0
    %4402 = vmatprep.subr.mxu0 0.0
    %4403 = vmatpush1.msra.mxu0 %v366
    %4404 = vmatprep.subr.mxu0 0.0
    %4405 = vmatpush1.msra.mxu0 %v367
    %4406 = vmatprep.subr.mxu0 0.0
    %4407 = vmatpush1.msra.mxu0 0.0
    %4408 = vmatprep.subr.mxu0 0.0
    %4409 = vmatpush1.msra.mxu0 0.0
    %4410 = vmatprep.subr.mxu0 0.0
    %4411 = vmatpush1.msra.mxu0 0.0
    %4412 = vmatprep.subr.mxu0 0.0
    %4413 = vmatpush1.msra.mxu0 0.0
    %4414 = vmatprep.subr.mxu0 0.0
    %4415 = vmatpush1.msra.mxu0 0.0
    %4416 = vmatprep.subr.mxu0 0.0
    %4417 = vmatpush1.msra.mxu0 0.0
    %4418 = vmatprep.subr.mxu0 0.0
    %4419 = vmatpush1.msra.mxu0 0.0
    %4420 = vmatprep.subr.mxu0 0.0
    %4421 = vmatpush1.msra.mxu0 0.0
    %4422 = vmatprep.subr.mxu0 0.0
    %4423 = vmatpush1.msra.mxu0 0.0
    %4424 = vmatprep.subr.mxu0 0.0
    %4425 = vmatpush1.msra.mxu0 0.0
    %4426 = vmatprep.subr.mxu0 0.0
    %4427 = vmatpush1.msra.mxu0 0.0
    %4428 = vmatprep.subr.mxu0 0.0
    %4429 = vmatpush1.msra.mxu0 0.0
    %4430 = vmatprep.subr.mxu0 0.0
    %4431 = vmatpush1.msra.mxu0 0.0
    %4432 = vmatprep.subr.mxu0 0.0
    %4433 = vmatpush1.msra.mxu0 0.0
    %4434 = vmatprep.subr.mxu0 0.0
    %4435 = vmatpush1.msra.mxu0 0.0
    %4436 = vmatprep.subr.mxu0 0.0
    %4437 = vmatpush1.msra.mxu0 0.0
    %4438 = vmatprep.subr.mxu0 0.0
    %4439 = vmatpush1.msra.mxu0 0.0
    %4440 = vmatprep.subr.mxu0 0.0
    %4441 = vmatpush1.msra.mxu0 0.0
    %4442 = vmatprep.subr.mxu0 0.0
    %4443 = vmatpush1.msra.mxu0 0.0
    %4444 = vmatprep.subr.mxu0 0.0
    %4445 = vmatpush1.msra.mxu0 0.0
    %4446 = vmatprep.subr.mxu0 0.0
    %4447 = vmatpush1.msra.mxu0 0.0
    %4448 = vmatprep.subr.mxu0 0.0
    %4449 = vmatpush1.msra.mxu0 0.0
    %4450 = vmatprep.subr.mxu0 0.0
    %4451 = vmatpush1.msra.mxu0 0.0
    %4452 = vmatprep.subr.mxu0 0.0
    %4453 = vmatpush1.msra.mxu0 0.0
    %4454 = vmatprep.subr.mxu0 0.0
    %4455 = vmatpush1.msra.mxu0 0.0
    %4456 = vmatprep.subr.mxu0 0.0
    %4457 = vmatpush1.msra.mxu0 0.0
    %4458 = vmatprep.subr.mxu0 0.0
    %4459 = vmatpush1.msra.mxu0 0.0
    %4460 = vmatprep.subr.mxu0 0.0
    %4461 = vmatpush1.msra.mxu0 0.0
    %4462 = vmatprep.subr.mxu0 0.0
    %4463 = vmatpush1.msra.mxu0 0.0
    %4464 = vmatprep.subr.mxu0 0.0
    %4465 = vmatpush1.msra.mxu0 0.0
    %4466 = vmatprep.mubr.f32.mxu0 0.0
    %4467 = vmatmul.mubr.f32.gmra.mrb[0].mxu0 %v4230
    %v4468 = vpop.f32.mrb[0].mxu0
    %v4469 = vadd.f32 0.0, %v4468
    %v4470 = vpop.f32.mrb[0].mxu0
    %4471 = vdwg.mxu0
    %v4473 = vsel %vm453, %v4399, 0
    %4475 = vmatprep.subr.mxu0 0.0
    %4476 = vmatpush1.msra.mxu0 %v4473
    %4477 = vmatprep.subr.mxu0 0.0
    %4478 = vmatpush1.msra.mxu0 0.0
    %4479 = vmatprep.subr.mxu0 0.0
    %4480 = vmatpush1.msra.mxu0 0.0
    %4481 = vmatprep.subr.mxu0 0.0
    %4482 = vmatpush1.msra.mxu0 0.0
    %4483 = vmatprep.subr.mxu0 0.0
    %4484 = vmatpush1.msra.mxu0 0.0
    %4485 = vmatprep.subr.mxu0 0.0
    %4486 = vmatpush1.msra.mxu0 0.0
    %4487 = vmatprep.subr.mxu0 0.0
    %4488 = vmatpush1.msra.mxu0 0.0
    %4489 = vmatprep.subr.mxu0 0.0
    %4490 = vmatpush1.msra.mxu0 0.0
    %4491 = vmatprep.subr.mxu0 0.0
    %4492 = vmatpush1.msra.mxu0 0.0
    %4493 = vmatprep.subr.mxu0 0.0
    %4494 = vmatpush1.msra.mxu0 0.0
    %4495 = vmatprep.subr.mxu0 0.0
    %4496 = vmatpush1.msra.mxu0 0.0
    %4497 = vmatprep.subr.mxu0 0.0
    %4498 = vmatpush1.msra.mxu0 0.0
    %4499 = vmatprep.subr.mxu0 0.0
    %4500 = vmatpush1.msra.mxu0 0.0
    %4501 = vmatprep.subr.mxu0 0.0
    %4502 = vmatpush1.msra.mxu0 0.0
    %4503 = vmatprep.subr.mxu0 0.0
    %4504 = vmatpush1.msra.mxu0 0.0
    %4505 = vmatprep.subr.mxu0 0.0
    %4506 = vmatpush1.msra.mxu0 0.0
    %4507 = vmatprep.subr.mxu0 0.0
    %4508 = vmatpush1.msra.mxu0 0.0
    %4509 = vmatprep.subr.mxu0 0.0
    %4510 = vmatpush1.msra.mxu0 0.0
    %4511 = vmatprep.subr.mxu0 0.0
    %4512 = vmatpush1.msra.mxu0 0.0
    %4513 = vmatprep.subr.mxu0 0.0
    %4514 = vmatpush1.msra.mxu0 0.0
    %4515 = vmatprep.subr.mxu0 0.0
    %4516 = vmatpush1.msra.mxu0 0.0
    %4517 = vmatprep.subr.mxu0 0.0
    %4518 = vmatpush1.msra.mxu0 0.0
    %4519 = vmatprep.subr.mxu0 0.0
    %4520 = vmatpush1.msra.mxu0 0.0
    %4521 = vmatprep.subr.mxu0 0.0
    %4522 = vmatpush1.msra.mxu0 0.0
    %4523 = vmatprep.subr.mxu0 0.0
    %4524 = vmatpush1.msra.mxu0 0.0
    %4525 = vmatprep.subr.mxu0 0.0
    %4526 = vmatpush1.msra.mxu0 0.0
    %4527 = vmatprep.subr.mxu0 0.0
    %4528 = vmatpush1.msra.mxu0 0.0
    %4529 = vmatprep.subr.mxu0 0.0
    %4530 = vmatpush1.msra.mxu0 0.0
    %4531 = vmatprep.subr.mxu0 0.0
    %4532 = vmatpush1.msra.mxu0 0.0
    %4533 = vmatprep.subr.mxu0 0.0
    %4534 = vmatpush1.msra.mxu0 0.0
    %4535 = vmatprep.subr.mxu0 0.0
    %4536 = vmatpush1.msra.mxu0 0.0
    %4537 = vmatprep.subr.mxu0 0.0
    %4538 = vmatpush1.msra.mxu0 0.0
    %4539 = vmatprep.mubr.f32.mxu0 0.0
    %4540 = vmatmul.mubr.f32.gmra.mrb[0].mxu0 %v442
    %v4541 = vpop.f32.mrb[0].mxu0
    %v4542 = vadd.f32 %v152, %v4541
    %v4543 = vpop.f32.mrb[0].mxu0
    %4544 = vmatprep.mubr.f32.mxu0 0.0
    %4545 = vmatmul.mubr.f32.gmra.mrb[0].mxu0 %v445
    %v4546 = vpop.f32.mrb[0].mxu0
    %v4547 = vadd.f32 %v157, %v4546
    %v4548 = vpop.f32.mrb[0].mxu0
    %4549 = vmatprep.mubr.f32.mxu0 0.0
    %4550 = vmatmul.mubr.f32.gmra.mrb[0].mxu0 %v448
    %v4551 = vpop.f32.mrb[0].mxu0
    %v4552 = vadd.f32 %v162, %v4551
    %v4553 = vpop.f32.mrb[0].mxu0
    %4554 = vmatprep.mubr.f32.mxu0 0.0
    %4555 = vmatmul.mubr.f32.gmra.mrb[0].mxu0 %v451
    %v4556 = vpop.f32.mrb[0].mxu0
    %v4557 = vadd.f32 %v167, %v4556
    %v4558 = vpop.f32.mrb[0].mxu0
    %4559 = vdwg.mxu0
    %v4560 = vtanh.pop %v4542
    %v4561 = vtanh.pop %v4547
    %v4562 = vtanh.pop %v4552
    %v4563 = vtanh.pop %v4557
    %v4565 = vsel %vm293, %v4560, 0
    %v4568 = vsel %vm293, %v4561, 0
    %v4571 = vsel %vm293, %v4562, 0
    %v4574 = vsel %vm293, %v4563, 0
    %4576 = vmatprep.subr.mxu0 0.0
    %4577 = vmatpush1.msra.mxu0 %v175
    %4578 = vmatprep.subr.mxu0 0.0
    %4579 = vmatpush1.msra.mxu0 %v176
    %4580 = vmatprep.subr.mxu0 0.0
    %4581 = vmatpush1.msra.mxu0 0.0
    %4582 = vmatprep.subr.mxu0 0.0
    %4583 = vmatpush1.msra.mxu0 0.0
    %4584 = vmatprep.subr.mxu0 0.0
    %4585 = vmatpush1.msra.mxu0 0.0
    %4586 = vmatprep.subr.mxu0 0.0
    %4587 = vmatpush1.msra.mxu0 0.0
    %4588 = vmatprep.subr.mxu0 0.0
    %4589 = vmatpush1.msra.mxu0 0.0
    %4590 = vmatprep.subr.mxu0 0.0
    %4591 = vmatpush1.msra.mxu0 0.0
    %4592 = vmatprep.subr.mxu0 0.0
    %4593 = vmatpush1.msra.mxu0 0.0
    %4594 = vmatprep.subr.mxu0 0.0
    %4595 = vmatpush1.msra.mxu0 0.0
    %4596 = vmatprep.subr.mxu0 0.0
    %4597 = vmatpush1.msra.mxu0 0.0
    %4598 = vmatprep.subr.mxu0 0.0
    %4599 = vmatpush1.msra.mxu0 0.0
    %4600 = vmatprep.subr.mxu0 0.0
    %4601 = vmatpush1.msra.mxu0 0.0
    %4602 = vmatprep.subr.mxu0 0.0
    %4603 = vmatpush1.msra.mxu0 0.0
    %4604 = vmatprep.subr.mxu0 0.0
    %4605 = vmatpush1.msra.mxu0 0.0
    %4606 = vmatprep.subr.mxu0 0.0
    %4607 = vmatpush1.msra.mxu0 0.0
    %4608 = vmatprep.subr.mxu0 0.0
    %4609 = vmatpush1.msra.mxu0 0.0
    %4610 = vmatprep.subr.mxu0 0.0
    %4611 = vmatpush1.msra.mxu0 0.0
    %4612 = vmatprep.subr.mxu0 0.0
    %4613 = vmatpush1.msra.mxu0 0.0
    %4614 = vmatprep.subr.mxu0 0.0
    %4615 = vmatpush1.msra.mxu0 0.0
    %4616 = vmatprep.subr.mxu0 0.0
    %4617 = vmatpush1.msra.mxu0 0.0
    %4618 = vmatprep.subr.mxu0 0.0
    %4619 = vmatpush1.msra.mxu0 0.0
    %4620 = vmatprep.subr.mxu0 0.0
    %4621 = vmatpush1.msra.mxu0 0.0
    %4622 = vmatprep.subr.mxu0 0.0
    %4623 = vmatpush1.msra.mxu0 0.0
    %4624 = vmatprep.subr.mxu0 0.0
    %4625 = vmatpush1.msra.mxu0 0.0
    %4626 = vmatprep.subr.mxu0 0.0
    %4627 = vmatpush1.msra.mxu0 0.0
    %4628 = vmatprep.subr.mxu0 0.0
    %4629 = vmatpush1.msra.mxu0 0.0
    %4630 = vmatprep.subr.mxu0 0.0
    %4631 = vmatpush1.msra.mxu0 0.0
    %4632 = vmatprep.subr.mxu0 0.0
    %4633 = vmatpush1.msra.mxu0 0.0
    %4634 = vmatprep.subr.mxu0 0.0
    %4635 = vmatpush1.msra.mxu0 0.0
    %4636 = vmatprep.subr.mxu0 0.0
    %4637 = vmatpush1.msra.mxu0 0.0
    %4638 = vmatprep.subr.mxu0 0.0
    %4639 = vmatpush1.msra.mxu0 0.0
    %4640 = vmatprep.mubr.f32.mxu0 0.0
    %4641 = vmatmul.mubr.f32.gmra.mrb[0].mxu0 %v4565
    %v4642 = vpop.f32.mrb[0].mxu0
    %v4643 = vadd.f32 0.0, %v4642
    %v4644 = vpop.f32.mrb[0].mxu0
    %4645 = vmatprep.mubr.f32.mxu0 0.0
    %4646 = vmatmul.mubr.f32.gmra.mrb[0].mxu0 %v4568
    %v4647 = vpop.f32.mrb[0].mxu0
    %v4648 = vadd.f32 0.0, %v4647
    %v4649 = vpop.f32.mrb[0].mxu0
    %4650 = vmatprep.mubr.f32.mxu0 0.0
    %4651 = vmatmul.mubr.f32.gmra.mrb[0].mxu0 %v4571
    %v4652 = vpop.f32.mrb[0].mxu0
    %v4653 = vadd.f32 0.0, %v4652
    %v4654 = vpop.f32.mrb[0].mxu0
    %4655 = vmatprep.mubr.f32.mxu0 0.0
    %4656 = vmatmul.mubr.f32.gmra.mrb[0].mxu0 %v4574
    %v4657 = vpop.f32.mrb[0].mxu0
    %v4658 = vadd.f32 0.0, %v4657
    %v4659 = vpop.f32.mrb[0].mxu0
    %4660 = vdwg.mxu0
    %v4661 = vsel %vm643, %v4643, -inf
    %v4662 = vsel %vm643, %v4648, -inf
    %v4663 = vsel %vm643, %v4653, -inf
    %v4664 = vsel %vm647, %v4658, -inf
    %v4665 = vmax.f32 %v4661, %v4662
    %v4666 = vmax.f32 %v4663, %v4664
    %v4667 = vmax.f32 %v4665, %v4666
    %v4668 = vrot.slane %v4667, 4
    %v4669 = vmax.f32 %v4667, %v4668
    %v4670 = vrot.slane %v4669, 2
    %v4671 = vmax.f32 %v4669, %v4670
    %v4672 = vrot.slane %v4671, 1
    %v4673 = vmax.f32 %v4671, %v4672
    %v4674 = vsub.f32 %v4643, %v4673
    %v4675 = vsub.f32 %v4648, %v4673
    %v4676 = vsub.f32 %v4653, %v4673
    %v4677 = vsub.f32 %v4658, %v4673
    %v4678 = vmul.f32 %v4674, 1.442695
    %v4679 = vpow.pop %v4678
    %v4680 = vmul.f32 %v4675, 1.442695
    %v4681 = vpow.pop %v4680
    %v4682 = vmul.f32 %v4676, 1.442695
    %v4683 = vpow.pop %v4682
    %v4684 = vmul.f32 %v4677, 1.442695
    %v4685 = vpow.pop %v4684
    %4687 = vset.pattern.permute.xlu0 0
    %4688 = vperm.xlu0 %4687, %v4679
    %v4689 = vpop.permute.xlu0 %4688
    %4692 = vset.pattern.permute.xlu0 0
    %4693 = vperm.xlu0 %4692, %v4681
    %v4694 = vpop.permute.xlu0 %4693
    %4697 = vset.pattern.permute.xlu0 0
    %4698 = vperm.xlu0 %4697, %v4683
    %v4699 = vpop.permute.xlu0 %4698
    %4702 = vset.pattern.permute.xlu0 0
    %4703 = vperm.xlu0 %4702, %v4685
    %v4704 = vpop.permute.xlu0 %4703
    %v4706 = vmul.f32 %v4689, %v61
    %v4707 = vmul.f32 %v4694, %v62
    %v4708 = vmul.f32 %v4699, %v63
    %v4709 = vmul.f32 %v4704, %v64
    %v4711 = vsel %vm453, %v4709, 0
    %4713 = vmatprep.subr.mxu0 0.0
    %4714 = vmatpush1.msra.mxu0 %v4706
    %4715 = vmatprep.subr.mxu0 0.0
    %4716 = vmatpush1.msra.mxu0 %v4707
    %4717 = vmatprep.subr.mxu0 0.0
    %4718 = vmatpush1.msra.mxu0 %v4708
    %4719 = vmatprep.subr.mxu0 0.0
    %4720 = vmatpush1.msra.mxu0 %v4711
    %4721 = vmatprep.subr.mxu0 0.0
    %4722 = vmatpush1.msra.mxu0 0.0
    %4723 = vmatprep.subr.mxu0 0.0
    %4724 = vmatpush1.msra.mxu0 0.0
    %4725 = vmatprep.subr.mxu0 0.0
    %4726 = vmatpush1.msra.mxu0 0.0
    %4727 = vmatprep.subr.mxu0 0.0
    %4728 = vmatpush1.msra.mxu0 0.0
    %4729 = vmatprep.subr.mxu0 0.0
    %4730 = vmatpush1.msra.mxu0 0.0
    %4731 = vmatprep.subr.mxu0 0.0
    %4732 = vmatpush1.msra.mxu0 0.0
    %4733 = vmatprep.subr.mxu0 0.0
    %4734 = vmatpush1.msra.mxu0 0.0
    %4735 = vmatprep.subr.mxu0 0.0
    %4736 = vmatpush1.msra.mxu0 0.0
    %4737 = vmatprep.subr.mxu0 0.0
    %4738 = vmatpush1.msra.mxu0 0.0
    %4739 = vmatprep.subr.mxu0 0.0
    %4740 = vmatpush1.msra.mxu0 0.0
    %4741 = vmatprep.subr.mxu0 0.0
    %4742 = vmatpush1.msra.mxu0 0.0
    %4743 = vmatprep.subr.mxu0 0.0
    %4744 = vmatpush1.msra.mxu0 0.0
    %4745 = vmatprep.subr.mxu0 0.0
    %4746 = vmatpush1.msra.mxu0 0.0
    %4747 = vmatprep.subr.mxu0 0.0
    %4748 = vmatpush1.msra.mxu0 0.0
    %4749 = vmatprep.subr.mxu0 0.0
    %4750 = vmatpush1.msra.mxu0 0.0
    %4751 = vmatprep.subr.mxu0 0.0
    %4752 = vmatpush1.msra.mxu0 0.0
    %4753 = vmatprep.subr.mxu0 0.0
    %4754 = vmatpush1.msra.mxu0 0.0
    %4755 = vmatprep.subr.mxu0 0.0
    %4756 = vmatpush1.msra.mxu0 0.0
    %4757 = vmatprep.subr.mxu0 0.0
    %4758 = vmatpush1.msra.mxu0 0.0
    %4759 = vmatprep.subr.mxu0 0.0
    %4760 = vmatpush1.msra.mxu0 0.0
    %4761 = vmatprep.subr.mxu0 0.0
    %4762 = vmatpush1.msra.mxu0 0.0
    %4763 = vmatprep.subr.mxu0 0.0
    %4764 = vmatpush1.msra.mxu0 0.0
    %4765 = vmatprep.subr.mxu0 0.0
    %4766 = vmatpush1.msra.mxu0 0.0
    %4767 = vmatprep.subr.mxu0 0.0
    %4768 = vmatpush1.msra.mxu0 0.0
    %4769 = vmatprep.subr.mxu0 0.0
    %4770 = vmatpush1.msra.mxu0 0.0
    %4771 = vmatprep.subr.mxu0 0.0
    %4772 = vmatpush1.msra.mxu0 0.0
    %4773 = vmatprep.subr.mxu0 0.0
    %4774 = vmatpush1.msra.mxu0 0.0
    %4775 = vmatprep.subr.mxu0 0.0
    %4776 = vmatpush1.msra.mxu0 0.0
    %4777 = vmatprep.mubr.f32.mxu0 0.0
    %4778 = vmatmul.mubr.f32.gmra.mrb[0].mxu0 %v696
    %v4779 = vpop.f32.mrb[0].mxu0
    %v4780 = vadd.f32 0.0, %v4779
    %v4781 = vpop.f32.mrb[0].mxu0
    %4782 = vdwg.mxu0
    %v4783 = vrcp.pop %v4780
    %4785 = vset.pattern.permute.xlu0 16
    %4786 = vperm.xlu0 %4785, %v4783
    %v4787 = vpop.permute.xlu0 %4786
    %v4789 = vmul.f32 %v4780, %v4787
    %v4791 = vsel %vm293, %v4789, 0
    %4793 = vmatprep.subr.mxu0 0.0
    %4794 = vmatpush1.msra.mxu0 %v778
    %4795 = vmatprep.subr.mxu0 0.0
    %4796 = vmatpush1.msra.mxu0 %v779
    %4797 = vmatprep.subr.mxu0 0.0
    %4798 = vmatpush1.msra.mxu0 0.0
    %4799 = vmatprep.subr.mxu0 0.0
    %4800 = vmatpush1.msra.mxu0 0.0
    %4801 = vmatprep.subr.mxu0 0.0
    %4802 = vmatpush1.msra.mxu0 0.0
    %4803 = vmatprep.subr.mxu0 0.0
    %4804 = vmatpush1.msra.mxu0 0.0
    %4805 = vmatprep.subr.mxu0 0.0
    %4806 = vmatpush1.msra.mxu0 0.0
    %4807 = vmatprep.subr.mxu0 0.0
    %4808 = vmatpush1.msra.mxu0 0.0
    %4809 = vmatprep.subr.mxu0 0.0
    %4810 = vmatpush1.msra.mxu0 0.0
    %4811 = vmatprep.subr.mxu0 0.0
    %4812 = vmatpush1.msra.mxu0 0.0
    %4813 = vmatprep.subr.mxu0 0.0
    %4814 = vmatpush1.msra.mxu0 0.0
    %4815 = vmatprep.subr.mxu0 0.0
    %4816 = vmatpush1.msra.mxu0 0.0
    %4817 = vmatprep.subr.mxu0 0.0
    %4818 = vmatpush1.msra.mxu0 0.0
    %4819 = vmatprep.subr.mxu0 0.0
    %4820 = vmatpush1.msra.mxu0 0.0
    %4821 = vmatprep.subr.mxu0 0.0
    %4822 = vmatpush1.msra.mxu0 0.0
    %4823 = vmatprep.subr.mxu0 0.0
    %4824 = vmatpush1.msra.mxu0 0.0
    %4825 = vmatprep.subr.mxu0 0.0
    %4826 = vmatpush1.msra.mxu0 0.0
    %4827 = vmatprep.subr.mxu0 0.0
    %4828 = vmatpush1.msra.mxu0 0.0
    %4829 = vmatprep.subr.mxu0 0.0
    %4830 = vmatpush1.msra.mxu0 0.0
    %4831 = vmatprep.subr.mxu0 0.0
    %4832 = vmatpush1.msra.mxu0 0.0
    %4833 = vmatprep.subr.mxu0 0.0
    %4834 = vmatpush1.msra.mxu0 0.0
    %4835 = vmatprep.subr.mxu0 0.0
    %4836 = vmatpush1.msra.mxu0 0.0
    %4837 = vmatprep.subr.mxu0 0.0
    %4838 = vmatpush1.msra.mxu0 0.0
    %4839 = vmatprep.subr.mxu0 0.0
    %4840 = vmatpush1.msra.mxu0 0.0
    %4841 = vmatprep.subr.mxu0 0.0
    %4842 = vmatpush1.msra.mxu0 0.0
    %4843 = vmatprep.subr.mxu0 0.0
    %4844 = vmatpush1.msra.mxu0 0.0
    %4845 = vmatprep.subr.mxu0 0.0
    %4846 = vmatpush1.msra.mxu0 0.0
    %4847 = vmatprep.subr.mxu0 0.0
    %4848 = vmatpush1.msra.mxu0 0.0
    %4849 = vmatprep.subr.mxu0 0.0
    %4850 = vmatpush1.msra.mxu0 0.0
    %4851 = vmatprep.subr.mxu0 0.0
    %4852 = vmatpush1.msra.mxu0 0.0
    %4853 = vmatprep.subr.mxu0 0.0
    %4854 = vmatpush1.msra.mxu0 0.0
    %4855 = vmatprep.subr.mxu0 0.0
    %4856 = vmatpush1.msra.mxu0 0.0
    %4857 = vmatprep.mubr.f32.mxu0 0.0
    %4858 = vmatmul.mubr.f32.gmra.mrb[0].mxu0 %v4791
    %v4859 = vpop.f32.mrb[0].mxu0
    %v4860 = vadd.f32 %v284, %v4859
    %v4861 = vpop.f32.mrb[0].mxu0
    %4862 = vdwg.mxu0
    %v4863 = vadd.f32 %v4860, %v4469
    %v4864 = vxor.u32 %v4863, 2147483648
    %v4865 = vmul.f32 %v4864, 1.442695
    %v4866 = vpow.pop %v4865
    %v4867 = vadd.f32 %v4866, 1.0
    %v4868 = vrcp.pop %v4867
    %v4869 = vmul.f32 1.0, %v4868
    %v4870 = vtanh.pop %v4863
    %v4871 = vmul.f32 %v4869, %v4217
    %4873 = vrot.lane.b32.xlu0 %v4870, 96
    %v4874 = vpop.permute.xlu0 %4873
    %v4876 = vmul.f32 %v4869, %v4874
    %4878 = vrot.lane.b32.xlu0 %v4876, 16
    %v4879 = vpop.permute.xlu0 %4878
    %v4881 = vadd.f32 %v4871, %v4879
    %v4882 = vtanh.pop %v4881
    %4884 = vrot.lane.b32.xlu0 %v4882, 32
    %v4885 = vpop.permute.xlu0 %4884
    %v4887 = vmul.f32 %v4869, %v4885
    %4889 = vrot.lane.b32.xlu0 %v4887, 80
    %v4890 = vpop.permute.xlu0 %4889
    %4891 = vrot.lane.b32.xlu0 %v4399, 112
    %v4892 = vpop.permute.xlu0 %4891
    %v4894 = vsel %vm293, %v4890, 0
    %4896 = vmatprep.subr.mxu0 0.0
    %4897 = vmatpush1.msra.mxu0 %v882
    %4898 = vmatprep.subr.mxu0 0.0
    %4899 = vmatpush1.msra.mxu0 %v883
    %4900 = vmatprep.subr.mxu0 0.0
    %4901 = vmatpush1.msra.mxu0 0.0
    %4902 = vmatprep.subr.mxu0 0.0
    %4903 = vmatpush1.msra.mxu0 0.0
    %4904 = vmatprep.subr.mxu0 0.0
    %4905 = vmatpush1.msra.mxu0 0.0
    %4906 = vmatprep.subr.mxu0 0.0
    %4907 = vmatpush1.msra.mxu0 0.0
    %4908 = vmatprep.subr.mxu0 0.0
    %4909 = vmatpush1.msra.mxu0 0.0
    %4910 = vmatprep.subr.mxu0 0.0
    %4911 = vmatpush1.msra.mxu0 0.0
    %4912 = vmatprep.subr.mxu0 0.0
    %4913 = vmatpush1.msra.mxu0 0.0
    %4914 = vmatprep.subr.mxu0 0.0
    %4915 = vmatpush1.msra.mxu0 0.0
    %4916 = vmatprep.subr.mxu0 0.0
    %4917 = vmatpush1.msra.mxu0 0.0
    %4918 = vmatprep.subr.mxu0 0.0
    %4919 = vmatpush1.msra.mxu0 0.0
    %4920 = vmatprep.subr.mxu0 0.0
    %4921 = vmatpush1.msra.mxu0 0.0
    %4922 = vmatprep.subr.mxu0 0.0
    %4923 = vmatpush1.msra.mxu0 0.0
    %4924 = vmatprep.subr.mxu0 0.0
    %4925 = vmatpush1.msra.mxu0 0.0
    %4926 = vmatprep.subr.mxu0 0.0
    %4927 = vmatpush1.msra.mxu0 0.0
    %4928 = vmatprep.subr.mxu0 0.0
    %4929 = vmatpush1.msra.mxu0 0.0
    %4930 = vmatprep.subr.mxu0 0.0
    %4931 = vmatpush1.msra.mxu0 0.0
    %4932 = vmatprep.subr.mxu0 0.0
    %4933 = vmatpush1.msra.mxu0 0.0
    %4934 = vmatprep.subr.mxu0 0.0
    %4935 = vmatpush1.msra.mxu0 0.0
    %4936 = vmatprep.subr.mxu0 0.0
    %4937 = vmatpush1.msra.mxu0 0.0
    %4938 = vmatprep.subr.mxu0 0.0
    %4939 = vmatpush1.msra.mxu0 0.0
    %4940 = vmatprep.subr.mxu0 0.0
    %4941 = vmatpush1.msra.mxu0 0.0
    %4942 = vmatprep.subr.mxu0 0.0
    %4943 = vmatpush1.msra.mxu0 0.0
    %4944 = vmatprep.subr.mxu0 0.0
    %4945 = vmatpush1.msra.mxu0 0.0
    %4946 = vmatprep.subr.mxu0 0.0
    %4947 = vmatpush1.msra.mxu0 0.0
    %4948 = vmatprep.subr.mxu0 0.0
    %4949 = vmatpush1.msra.mxu0 0.0
    %4950 = vmatprep.subr.mxu0 0.0
    %4951 = vmatpush1.msra.mxu0 0.0
    %4952 = vmatprep.subr.mxu0 0.0
    %4953 = vmatpush1.msra.mxu0 0.0
    %4954 = vmatprep.subr.mxu0 0.0
    %4955 = vmatpush1.msra.mxu0 0.0
    %4956 = vmatprep.subr.mxu0 0.0
    %4957 = vmatpush1.msra.mxu0 0.0
    %4958 = vmatprep.subr.mxu0 0.0
    %4959 = vmatpush1.msra.mxu0 0.0
    %4960 = vmatprep.mubr.f32.mxu0 0.0
    %4961 = vmatmul.mubr.f32.gmra.mrb[0].mxu0 %v4894
    %v4962 = vpop.f32.mrb[0].mxu0
    %v4963 = vadd.f32 %v4892, %v4962
    %v4964 = vpop.f32.mrb[0].mxu0
    %4965 = vdwg.mxu0
    %v4966 = vadd.f32 %v4963, %v967
    %v4967 = vxor.u32 %v4966, 2147483648
    %v4968 = vmul.f32 %v4967, 1.442695
    %v4969 = vpow.pop %v4968
    %v4970 = vadd.f32 %v4969, 1.0
    %v4971 = vrcp.pop %v4970
    %v4972 = vmul.f32 1.0, %v4971
    %v4973 = vtanh.pop %v4966
    %v4974 = vmul.f32 %v4972, %v4320
    %4976 = vrot.lane.b32.xlu0 %v4973, 96
    %v4977 = vpop.permute.xlu0 %4976
    %v4979 = vmul.f32 %v4972, %v4977
    %4981 = vrot.lane.b32.xlu0 %v4979, 16
    %v4982 = vpop.permute.xlu0 %4981
    %v4984 = vadd.f32 %v4974, %v4982
    %v4985 = vtanh.pop %v4984
    %4987 = vrot.lane.b32.xlu0 %v4985, 32
    %v4988 = vpop.permute.xlu0 %4987
    %v4990 = vmul.f32 %v4972, %v4988
    %v4991 = vrot.slane %v1664, 4
    %v4993 = vrot.slane %v2995, 4
    %v4995 = vrot.slane %v4326, 4
    %v4997 = vsel %vm453, %v997, %v4991
    %v4998 = vsel %vm453, %v2328, %v4993
    %v4999 = vsel %vm453, %v3659, %v4995
    %v5000 = vld [vmem:[%s15] sm:$0xff]
    %v5001 = vld [vmem:[%s15 + $0x8] sm:$0xff]
    %v5002 = vld [vmem:[%s16] sm:$0x1]
    %v5004 = vlaneseq
    %v5005 = vshrl.u32 %v5004, 7
    %v5006 = vsub.s32 0, %v5005
    %v5007 = vrot.slane %v5002, %v5006
    %5013 = vrot.lane.b32.xlu0 %v4997, 80
    %v5014 = vpop.permute.xlu0 %5013
    %5015 = vrot.lane.b32.xlu0 %v4998, 80
    %v5016 = vpop.permute.xlu0 %5015
    %5017 = vrot.lane.b32.xlu0 %v4999, 80
    %v5018 = vpop.permute.xlu0 %5017
    %5019 = vrot.lane.b32.xlu0 %v4990, 80
    %v5020 = vpop.permute.xlu0 %5019
    %v5021 = vsel %vm293, %v5014, 0
    %v5023 = vsel %vm293, %v5016, 0
    %v5025 = vsel %vm293, %v5018, 0
    %v5027 = vsel %vm293, %v5020, 0
    %5029 = vmatprep.subr.mxu0 0.0
    %5030 = vmatpush1.msra.mxu0 %v5000
    %5031 = vmatprep.subr.mxu0 0.0
    %5032 = vmatpush1.msra.mxu0 %v5001
    %5033 = vmatprep.subr.mxu0 0.0
    %5034 = vmatpush1.msra.mxu0 0.0
    %5035 = vmatprep.subr.mxu0 0.0
    %5036 = vmatpush1.msra.mxu0 0.0
    %5037 = vmatprep.subr.mxu0 0.0
    %5038 = vmatpush1.msra.mxu0 0.0
    %5039 = vmatprep.subr.mxu0 0.0
    %5040 = vmatpush1.msra.mxu0 0.0
    %5041 = vmatprep.subr.mxu0 0.0
    %5042 = vmatpush1.msra.mxu0 0.0
    %5043 = vmatprep.subr.mxu0 0.0
    %5044 = vmatpush1.msra.mxu0 0.0
    %5045 = vmatprep.subr.mxu0 0.0
    %5046 = vmatpush1.msra.mxu0 0.0
    %5047 = vmatprep.subr.mxu0 0.0
    %5048 = vmatpush1.msra.mxu0 0.0
    %5049 = vmatprep.subr.mxu0 0.0
    %5050 = vmatpush1.msra.mxu0 0.0
    %5051 = vmatprep.subr.mxu0 0.0
    %5052 = vmatpush1.msra.mxu0 0.0
    %5053 = vmatprep.subr.mxu0 0.0
    %5054 = vmatpush1.msra.mxu0 0.0
    %5055 = vmatprep.subr.mxu0 0.0
    %5056 = vmatpush1.msra.mxu0 0.0
    %5057 = vmatprep.subr.mxu0 0.0
    %5058 = vmatpush1.msra.mxu0 0.0
    %5059 = vmatprep.subr.mxu0 0.0
    %5060 = vmatpush1.msra.mxu0 0.0
    %5061 = vmatprep.subr.mxu0 0.0
    %5062 = vmatpush1.msra.mxu0 0.0
    %5063 = vmatprep.subr.mxu0 0.0
    %5064 = vmatpush1.msra.mxu0 0.0
    %5065 = vmatprep.subr.mxu0 0.0
    %5066 = vmatpush1.msra.mxu0 0.0
    %5067 = vmatprep.subr.mxu0 0.0
    %5068 = vmatpush1.msra.mxu0 0.0
    %5069 = vmatprep.subr.mxu0 0.0
    %5070 = vmatpush1.msra.mxu0 0.0
    %5071 = vmatprep.subr.mxu0 0.0
    %5072 = vmatpush1.msra.mxu0 0.0
    %5073 = vmatprep.subr.mxu0 0.0
    %5074 = vmatpush1.msra.mxu0 0.0
    %5075 = vmatprep.subr.mxu0 0.0
    %5076 = vmatpush1.msra.mxu0 0.0
    %5077 = vmatprep.subr.mxu0 0.0
    %5078 = vmatpush1.msra.mxu0 0.0
    %5079 = vmatprep.subr.mxu0 0.0
    %5080 = vmatpush1.msra.mxu0 0.0
    %5081 = vmatprep.subr.mxu0 0.0
    %5082 = vmatpush1.msra.mxu0 0.0
    %5083 = vmatprep.subr.mxu0 0.0
    %5084 = vmatpush1.msra.mxu0 0.0
    %5085 = vmatprep.subr.mxu0 0.0
    %5086 = vmatpush1.msra.mxu0 0.0
    %5087 = vmatprep.subr.mxu0 0.0
    %5088 = vmatpush1.msra.mxu0 0.0
    %5089 = vmatprep.subr.mxu0 0.0
    %5090 = vmatpush1.msra.mxu0 0.0
    %5091 = vmatprep.subr.mxu0 0.0
    %5092 = vmatpush1.msra.mxu0 0.0
    %5093 = vmatprep.mubr.f32.mxu0 0.0
    %5094 = vmatmul.mubr.f32.gmra.mrb[0].mxu0 %v5021
    %v5095 = vpop.f32.mrb[0].mxu0
    %v5096 = vadd.f32 %v5007, %v5095
    %v5097 = vpop.f32.mrb[0].mxu0
    %5098 = vmatprep.mubr.f32.mxu0 0.0
    %5099 = vmatmul.mubr.f32.gmra.mrb[0].mxu0 %v5023
    %v5100 = vpop.f32.mrb[0].mxu0
    %v5101 = vadd.f32 %v5007, %v5100
    %v5102 = vpop.f32.mrb[0].mxu0
    %5103 = vmatprep.mubr.f32.mxu0 0.0
    %5104 = vmatmul.mubr.f32.gmra.mrb[0].mxu0 %v5025
    %v5105 = vpop.f32.mrb[0].mxu0
    %v5106 = vadd.f32 %v5007, %v5105
    %v5107 = vpop.f32.mrb[0].mxu0
    %5108 = vmatprep.mubr.f32.mxu0 0.0
    %5109 = vmatmul.mubr.f32.gmra.mrb[0].mxu0 %v5027
    %v5110 = vpop.f32.mrb[0].mxu0
    %v5111 = vadd.f32 %v5007, %v5110
    %v5112 = vpop.f32.mrb[0].mxu0
    %5113 = vdwg.mxu0
    %5114 = vst [vmem:[#allocation2] sm:$0xff] %v5096
    %5115 = vst [vmem:[#allocation2 + $0x8] sm:$0xff] %v5101
    %5116 = vst [vmem:[#allocation2 + $0x10] sm:$0xff] %v5106
    %5117 = vst [vmem:[#allocation2 + $0x18] sm:$0xf] %v5111
    %v5118 = vrot.slane %v4990, 4
    %v5120 = vsel %vm453, %v4887, %v5118
    %5122 = vrot.lane.b32.xlu0 %v5120, 80
    %v5123 = vpop.permute.xlu0 %5122
    %5125 = vst.msk [vmem:[#allocation4] sm:$0xff] %vm293, %v5123
    %v5127 = vrot.slane %v4984, 4
    %v5129 = vsel %vm453, %v4881, %v5127
    %5131 = vrot.lane.b32.xlu0 %v5129, 112
    %v5132 = vpop.permute.xlu0 %5131
    %5134 = vst.msk [vmem:[#allocation6] sm:$0xff] %vm293, %v5132
    // Predicated region
    $region70: #{tpu_custom_call.1} parent=1 // pred_check
      _
    $region71: #{tpu_custom_call.1} parent=1 // pred_check_branch
      %5136 = sbr.rel (0) target = $region73
    $region72: #{tpu_custom_call.1} parent=1 // pred_region
      %s5138 = ssub.s32 512, 512
      %5139 = vsyncadd [#allocation3], %s5138
      %s5140 = sshll.u32 [#allocation2], 4
      %s5141 = int_to_ptr.vmem [resolvable:$true] %s5140
      %5146 = dma.vmem_to_hbm [thread:$0]  %s5141, 512, %s17, [#allocation3], 128, 128, 8
    $region73: #{tpu_custom_call.1} parent=1 // pred_fallthru
      _
    // Predicated region
    $region74: #{tpu_custom_call.1} parent=1 // pred_check
      _
    $region75: #{tpu_custom_call.1} parent=1 // pred_check_branch
      %5148 = sbr.rel (0) target = $region77
    $region76: #{tpu_custom_call.1} parent=1 // pred_region
      %s5150 = ssub.s32 128, 128
      %5151 = vsyncadd [#allocation5], %s5150
      %s5153 = sshll.u32 [#allocation4], 4
      %s5154 = int_to_ptr.vmem [resolvable:$true] %s5153
      %5156 = dma.vmem_to_hbm [thread:$0]  %s5154, 128, %s18, [#allocation5]
    $region77: #{tpu_custom_call.1} parent=1 // pred_fallthru
      _
    // Predicated region
    $region78: #{tpu_custom_call.1} parent=1 // pred_check
      _
    $region79: #{tpu_custom_call.1} parent=1 // pred_check_branch
      %5158 = sbr.rel (0) target = $region81
    $region80: #{tpu_custom_call.1} parent=1 // pred_region
      %s5160 = ssub.s32 128, 128
      %5161 = vsyncadd [#allocation5], %s5160
      %s5163 = sshll.u32 [#allocation6], 4
      %s5164 = int_to_ptr.vmem [resolvable:$true] %s5163
      %5166 = dma.vmem_to_hbm [thread:$0]  %s5164, 128, %s19, [#allocation5]
    $region81: #{tpu_custom_call.1} parent=1 // pred_fallthru
      _
    // Predicated region
    $region82: #{tpu_custom_call.1} parent=1 // pred_check
      _
    $region83: #{tpu_custom_call.1} parent=1 // pred_check_branch
      %5168 = sbr.rel (0) target = $region85
    $region84: #{tpu_custom_call.1} parent=1 // pred_region
      %5169 = dma.done [#allocation3], 512
    $region85: #{tpu_custom_call.1} parent=1 // pred_fallthru
      _
    // Predicated region
    $region86: #{tpu_custom_call.1} parent=1 // pred_check
      _
    $region87: #{tpu_custom_call.1} parent=1 // pred_check_branch
      %5171 = sbr.rel (0) target = $region89
    $region88: #{tpu_custom_call.1} parent=1 // pred_region
      %5172 = dma.done [#allocation5], 128
    $region89: #{tpu_custom_call.1} parent=1 // pred_fallthru
      _
    // Predicated region
    $region90: #{tpu_custom_call.1} parent=1 // pred_check
      _
    $region91: #{tpu_custom_call.1} parent=1 // pred_check_branch
      %5174 = sbr.rel (0) target = $region93
    $region92: #{tpu_custom_call.1} parent=1 // pred_region
      %5175 = dma.done [#allocation5], 128
    $region93: #{tpu_custom_call.1} parent=1 // pred_fallthru
      _
    %5176 = vsyncpa [#allocation3], 1
    %5177 = vsyncpa [#allocation5], 1

</llo_original>
